<compile_context>
chip_gen: v7x
topology: tpu7x:2x2x1
jax: 0.10.0
libtpu: 0.0.40
codegen_flags: <defaults>
</compile_context>

<pallas_src>
import numpy as np

import jax
import jax.numpy as jnp
from jax import lax
from jax.experimental import pallas as pl
from jax.experimental.pallas import tpu as pltpu

LMD1 = 0.25
LMD2 = 0.1
NEG_FILL = -1e30  # fill for non-negative anchors so they sort last in top_k


def _smooth_l1(d):
    ad = jnp.abs(d)
    return jnp.where(ad < 1.0, 0.5 * d * d, ad - 0.5)


def _make_kernel(M):
    """Kernel factory; M (padded annotation count) is closed over statically."""

    def kernel(ann_ref, anchor_ref, pred_ref, negce_ref, stats_ref):
        # ann_ref : SMEM (B*M*14,)  flattened annotations (scalar prefetch)
        # anchor  : VMEM (4, 8, TL) rows [x1, y1, x2, y2]
        # pred    : VMEM (1, 16, 8, TL) rows [cls0, cls1, box(4), ldm(10)]
        # negce   : VMEM (1, 8, TL)  per-anchor negative CE (NEG_FILL elsewhere)
        # stats   : VMEM (1, 1, 8, 1) per-tile statistics
        j = pl.program_id(0)
        base = j * (M * 14)
        S, TL = anchor_ref.shape[1], anchor_ref.shape[2]

        ax1 = anchor_ref[0]
        ay1 = anchor_ref[1]
        ax2 = anchor_ref[2]
        ay2 = anchor_ref[3]
        aw = ax2 - ax1
        ah = ay2 - ay1
        acx = ax1 + 0.5 * aw
        acy = ay1 + 0.5 * ah
        inv_aw = 1.0 / (aw + 1e-14)
        inv_ah = 1.0 / (ah + 1e-14)
        area_a = aw * ah

        best_iou = jnp.full((S, TL), -2.0, dtype=jnp.float32)
        assigned = [jnp.zeros((S, TL), dtype=jnp.float32) for _ in range(14)]

        # Online max / first-argmax / assigned-annotation gather over the M
        # annotations.  Invalid annotations (x1 <= 0) get IoU forced to -1 so
        # they never win, reproducing the dynamic-shape filter with static
        # shapes (matches the reference argmax-first-occurrence semantics via
        # the strict ">" comparison).
        # TODO(synk): switch this static Python loop to lax.fori_loop for very
        #             large M to bound trace size.
        for m in range(M):
            av = [ann_ref[base + m * 14 + c] for c in range(14)]
            bx1, by1, bx2, by2 = av[0], av[1], av[2], av[3]
            validf = (bx1 > 0.0).astype(jnp.float32)        # scalar 0/1
            area_b = (bx2 - bx1) * (by2 - by1)               # scalar

            iw = jnp.maximum(jnp.minimum(ax2, bx2) - jnp.maximum(ax1, bx1), 0.0)
            ih = jnp.maximum(jnp.minimum(ay2, by2) - jnp.maximum(ay1, by1), 0.0)
            inter = iw * ih
            iou_m = inter / (area_a + area_b - inter)        # exact divide (thresholded)
            iou_m = iou_m * validf + (validf - 1.0)          # invalid -> -1

            better = iou_m > best_iou
            best_iou = jnp.where(better, iou_m, best_iou)
            for c in range(14):
                assigned[c] = jnp.where(better, av[c], assigned[c])

        pos = best_iou >= 0.5                                # (8, TL)
        neg = best_iou < 0.3

        # ---- 2-class cross entropy per anchor (softplus form) ----
        cls0 = pred_ref[0, 0]
        cls1 = pred_ref[0, 1]
        d = cls1 - cls0
        ce_cls0 = jnp.maximum(d, 0.0) + jnp.log(1.0 + jnp.exp(-jnp.abs(d)))  # target 0
        ce_cls1 = ce_cls0 - d                                                # target 1
        negce_ref[0] = jnp.where(neg, ce_cls1, NEG_FILL)

        # ---- bbox regression targets + smooth-L1 (sum over 4 components) ----
        gw = assigned[2] - assigned[0]
        gh = assigned[3] - assigned[1]
        gcx = assigned[0] + 0.5 * gw
        gcy = assigned[1] + 0.5 * gh
        tdx = (gcx - acx) * inv_aw * 10.0
        tdy = (gcy - acy) * inv_ah * 10.0
        tdw = jnp.log(jnp.where(pos, gw * inv_aw, 1.0)) * 5.0
        tdh = jnp.log(jnp.where(pos, gh * inv_ah, 1.0)) * 5.0
        bbox_l = (_smooth_l1(tdx - pred_ref[0, 2]) + _smooth_l1(tdy - pred_ref[0, 3])
                  + _smooth_l1(tdw - pred_ref[0, 4]) + _smooth_l1(tdh - pred_ref[0, 5]))

        # ---- landmark regression targets + smooth-L1 (sum over 10 comps) ----
        ldm_sum_assigned = assigned[4]
        for c in range(5, 14):
            ldm_sum_assigned = ldm_sum_assigned + assigned[c]
        ldm_pos = jnp.logical_and(ldm_sum_assigned > 0.0, pos)

        ldm_l = jnp.zeros((S, TL), dtype=jnp.float32)
        for i in range(5):
            tx = (assigned[4 + 2 * i] - acx) * inv_aw * 10.0
            ty = (assigned[5 + 2 * i] - acy) * inv_ah * 10.0
            ldm_l = ldm_l + _smooth_l1(tx - pred_ref[0, 6 + 2 * i])
            ldm_l = ldm_l + _smooth_l1(ty - pred_ref[0, 7 + 2 * i])

        # ---- per-tile statistics: (8, 1) block, reduced further in glue ----
        def subl_sum(x):
            return jnp.sum(x, axis=0, keepdims=True)          # (1, TL)

        zero = jnp.zeros((1, TL), dtype=jnp.float32)
        stacked = jnp.concatenate(
            [subl_sum(pos.astype(jnp.float32)),                # 0: num_pos
             subl_sum(neg.astype(jnp.float32)),                # 1: num_neg
             subl_sum(jnp.where(pos, ce_cls0, 0.0)),           # 2: positive CE sum
             subl_sum(jnp.where(pos, bbox_l, 0.0)),            # 3: bbox smooth-L1 sum
             subl_sum(ldm_pos.astype(jnp.float32)),            # 4: num_ldm_pos
             subl_sum(jnp.where(ldm_pos, ldm_l, 0.0)),         # 5: landmark smooth-L1 sum
             zero, zero], axis=0)                              # (8, TL)
        stats_ref[0, 0] = jnp.sum(stacked, axis=1, keepdims=True)   # (8, 1)

    return kernel


def _lane_tile(L, max_tile=1024):
    """Largest multiple of 128 dividing L and <= max_tile (else full L)."""
    if L % 128 != 0:
        return L
    tl = min(L, max_tile)
    tl -= tl % 128
    while L % tl != 0:
        tl -= 128
    return tl


def detection_losses_pallas(classifications, bbox_regressions, ldm_regressions,
                            anchors, annotations, lmd1=LMD1, lmd2=LMD2,
                            max_lane_tile=1024, max_keep_negatives=2048):
    classifications = classifications.astype(jnp.float32)
    bbox_regressions = bbox_regressions.astype(jnp.float32)
    ldm_regressions = ldm_regressions.astype(jnp.float32)
    anchors = anchors.astype(jnp.float32)
    annotations = annotations.astype(jnp.float32)

    B, A, C = classifications.shape
    assert C == 2, "kernel assumes 2 classification classes"
    assert A % 8 == 0, "anchor count must be a multiple of 8"
    M = annotations.shape[1]
    L = A // 8                          # lanes per sublane row
    TL = _lane_tile(L, max_lane_tile)   # up to 8*TL = 8192 anchors per tile
    nA = L // TL

    # anchors: (1, A, 4) -> (4, 8, L).  Tiny one-time transpose.
    anchor_t = jnp.transpose(anchors[0], (1, 0)).reshape(4, 8, L)

    # Predictions fused into one channel-major slab (B, 16, 8, L):
    # rows 0-1 cls logits, 2-5 bbox regression, 6-15 landmark regression.
    # NOTE(perf): this transpose is one extra HBM pass over the activations; if
    # the detection head can emit channel-major (B, 16, A) directly, remove it.
    pred = jnp.concatenate([classifications, bbox_regressions, ldm_regressions],
                           axis=-1)                           # (B, A, 16)
    pred = jnp.transpose(pred, (0, 2, 1)).reshape(B, 16, 8, L)

    ann_flat = annotations.reshape(-1)                        # (B*M*14,) -> SMEM

    grid_spec = pltpu.PrefetchScalarGridSpec(
        num_scalar_prefetch=1,
        grid=(B, nA),
        in_specs=[
            pl.BlockSpec((4, 8, TL), lambda j, a, ann: (0, 0, a)),
            pl.BlockSpec((1, 16, 8, TL), lambda j, a, ann: (j, 0, 0, a)),
        ],
        out_specs=[
            pl.BlockSpec((1, 8, TL), lambda j, a, ann: (j, 0, a)),
            pl.BlockSpec((1, 1, 8, 1), lambda j, a, ann: (j, a, 0, 0)),
        ],
    )

    neg_ce, stats = pl.pallas_call(
        _make_kernel(M),
        grid_spec=grid_spec,
        out_shape=(
            jax.ShapeDtypeStruct((B, 8, L), jnp.float32),
            jax.ShapeDtypeStruct((B, nA, 8, 1), jnp.float32),
        ),
        compiler_params=pltpu.CompilerParams(
            dimension_semantics=("parallel", "parallel")),
    )(ann_flat, anchor_t, pred)

    stats = jnp.sum(stats[:, :, :, 0], axis=1)       # (B, 8): sum over anchor tiles
    num_pos = stats[:, 0]
    num_neg = stats[:, 1]
    pos_ce_sum = stats[:, 2]
    bbox_sum = stats[:, 3]
    num_ldm = stats[:, 4]
    ldm_sum = stats[:, 5]

    # Hard-negative mining: mean of the top min(num_neg, 3 * num_pos) negative
    # CE losses.  lax.top_k with a static cap replaces the previous full sort;
    # the cap only matters when 3 * num_pos exceeds max_keep_negatives.
    neg_ce = neg_ce.reshape(B, A)
    K = min(A, int(max_keep_negatives))
    top_vals, _ = lax.top_k(neg_ce, K)               # (B, K), descending
    keep = jnp.minimum(jnp.minimum(num_neg, 3.0 * num_pos), float(K))
    ranks = jnp.arange(K, dtype=jnp.float32)[None, :]
    kept = jnp.where(ranks < keep[:, None], top_vals, 0.0)
    neg_mean = jnp.sum(kept, axis=1) / jnp.maximum(keep, 1.0)
    pos_mean = pos_ce_sum / jnp.maximum(num_pos, 1.0)

    has_pos = num_pos > 0.0
    cls_loss = jnp.where(has_pos, pos_mean + neg_mean, 0.0)
    box_loss = jnp.where(has_pos, bbox_sum / jnp.maximum(num_pos * 4.0, 1.0), 0.0)
    ldm_loss = jnp.where(num_ldm > 0.0,
                         ldm_sum / jnp.maximum(num_ldm * 10.0, 1.0), 0.0)

    return (jnp.mean(cls_loss)
            + lmd1 * jnp.mean(box_loss)
            + lmd2 * jnp.mean(ldm_loss))


# ---------------------------------------------------------------------------
# Pure NumPy reference mirroring the PyTorch module (for correctness check).
# ---------------------------------------------------------------------------
def _smooth_l1_mean_np(x, y):
    d = x - y
    ad = np.abs(d)
    return np.where(ad < 1.0, 0.5 * d * d, ad - 0.5).mean()


def _cross_entropy_np(logits, target):
    mx = logits.max(axis=1, keepdims=True)
    lse = mx[:, 0] + np.log(np.exp(logits - mx).sum(axis=1))
    return lse - logits[np.arange(logits.shape[0]), target]


def detection_losses_ref(classifications, bbox_regressions, ldm_regressions,
                         anchors, annotations, lmd1=LMD1, lmd2=LMD2):
    classifications = np.asarray(classifications, np.float32)
    bbox_regressions = np.asarray(bbox_regressions, np.float32)
    ldm_regressions = np.asarray(ldm_regressions, np.float32)
    anchors = np.asarray(anchors, np.float32)
    annotations = np.asarray(annotations, np.float32)

    anchor = anchors[0]
    aw = anchor[:, 2] - anchor[:, 0]
    ah = anchor[:, 3] - anchor[:, 1]
    acx = anchor[:, 0] + 0.5 * aw
    acy = anchor[:, 1] + 0.5 * ah

    B = classifications.shape[0]
    cls_l, box_l, ldm_l = [], [], []
    for j in range(B):
        classification = classifications[j]
        bbox_regression = bbox_regressions[j]
        ldm_regression = ldm_regressions[j]
        ann = annotations[j]
        ann = ann[ann[:, 0] > 0]
        bbox_ann = ann[:, :4]
        ldm_ann = ann[:, 4:]
        if bbox_ann.shape[0] == 0:
            cls_l.append(0.0); box_l.append(0.0); ldm_l.append(0.0)
            continue
        iw = np.maximum(np.minimum(anchor[:, 2:3], bbox_ann[None, :, 2])
                        - np.maximum(anchor[:, 0:1], bbox_ann[None, :, 0]), 0.0)
        ih = np.maximum(np.minimum(anchor[:, 3:4], bbox_ann[None, :, 3])
                        - np.maximum(anchor[:, 1:2], bbox_ann[None, :, 1]), 0.0)
        inter = iw * ih
        area_b = (bbox_ann[:, 2] - bbox_ann[:, 0]) * (bbox_ann[:, 3] - bbox_ann[:, 1])
        iou = inter / ((aw * ah)[:, None] + area_b[None, :] - inter)
        iou_max = iou.max(axis=1)
        iou_arg = iou.argmax(axis=1)
        neg = iou_max < 0.3
        pos = iou_max >= 0.5
        num_pos = int(pos.sum())
        keep = num_pos * 3
        assigned_bbox = bbox_ann[iou_arg]
        assigned_ldm = ldm_ann[iou_arg]
        ldm_pos = (assigned_ldm.sum(axis=1) > 0) & pos

        neg_losses = _cross_entropy_np(classification[neg],
                                       np.ones(int(neg.sum()), dtype=np.int64))
        sorted_losses = np.sort(neg_losses)[::-1]
        if sorted_losses.size > keep:
            sorted_losses = sorted_losses[:keep]
        pos_losses = _cross_entropy_np(classification[pos],
                                       np.zeros(num_pos, dtype=np.int64))
        if num_pos > 0:
            cls_l.append(float(pos_losses.mean() + sorted_losses.mean()))
        else:
            cls_l.append(0.0)

        if num_pos > 0:
            aw_p, ah_p = aw[pos], ah[pos]
            acx_p, acy_p = acx[pos], acy[pos]
            ab = assigned_bbox[pos]
            gw = ab[:, 2] - ab[:, 0]
            gh = ab[:, 3] - ab[:, 1]
            gcx = ab[:, 0] + 0.5 * gw
            gcy = ab[:, 1] + 0.5 * gh
            tdx = (gcx - acx_p) / (aw_p + 1e-14)
            tdy = (gcy - acy_p) / (ah_p + 1e-14)
            tdw = np.log(gw / aw_p)
            tdh = np.log(gh / ah_p)
            t = np.stack([tdx, tdy, tdw, tdh], axis=1) / np.array(
                [[0.1, 0.1, 0.2, 0.2]], np.float32)
            box_l.append(float(_smooth_l1_mean_np(t, bbox_regression[pos])))
        else:
            box_l.append(0.0)

        if int(ldm_pos.sum()) > 0:
            al = assigned_ldm[ldm_pos]
            aw_l, ah_l = aw[ldm_pos], ah[ldm_pos]
            acx_l, acy_l = acx[ldm_pos], acy[ldm_pos]
            cols_t = []
            for i in range(5):
                cols_t.append((al[:, 2 * i] - acx_l) / (aw_l + 1e-14))
                cols_t.append((al[:, 2 * i + 1] - acy_l) / (ah_l + 1e-14))
            t = np.stack(cols_t, axis=1) / 0.1
            ldm_l.append(float(_smooth_l1_mean_np(t, ldm_regression[ldm_pos])))
        else:
            ldm_l.append(0.0)

    return float(np.mean(cls_l) + lmd1 * np.mean(box_l) + lmd2 * np.mean(ldm_l))


if __name__ == "__main__":
    key = jax.random.PRNGKey(0)
    B, A, M, C = 2, 256, 8, 2

    # 16x16 grid of 16x16 anchors, stride 8.
    xs = jnp.arange(16, dtype=jnp.float32) * 8.0
    gx, gy = jnp.meshgrid(xs, xs, indexing="ij")
    x1 = gx.reshape(-1)
    y1 = gy.reshape(-1)
    anchor = jnp.stack([x1, y1, x1 + 16.0, y1 + 16.0], axis=1)   # (A, 4)
    anchors = anchor[None]                                       # (1, A, 4)

    k1, k2, k3, k4, k5 = jax.random.split(key, 5)
    sel = jnp.array([[17, 50, 100, 200, 230],
                     [33, 66, 120, 180, 250]])
    ann_box = anchor[sel] + jax.random.uniform(k1, (B, 5, 4),
                                               minval=-2.0, maxval=2.0)
    boxes = jnp.zeros((B, M, 4), jnp.float32)
    boxes = boxes.at[:, :5, :].set(ann_box)
    boxes = boxes.at[:, 5:7, :].set(jnp.array([-5.0, 10.0, 20.0, 30.0]))  # invalid (x1 <= 0)
    boxes = boxes.at[:, 7, :].set(jnp.array([40.0, 40.0, 80.0, 80.0]))
    lmk = jax.random.uniform(k2, (B, M, 10), minval=1.0, maxval=120.0)
    lmk = lmk.at[:, 1, :].set(-1.0)   # annotation 1: landmarks missing (sum <= 0)
    annotations = jnp.concatenate([boxes, lmk], axis=-1)          # (B, M, 14)

    classifications = jax.random.normal(k3, (B, A, C), jnp.float32)
    bbox_regressions = jax.random.normal(k4, (B, A, 4), jnp.float32)
    ldm_regressions = jax.random.normal(k5, (B, A, 10), jnp.float32)

    out = detection_losses_pallas(classifications, bbox_regressions,
                                  ldm_regressions, anchors, annotations)
    out = jax.block_until_ready(out)

    ref = detection_losses_ref(classifications, bbox_regressions,
                               ldm_regressions, anchors, annotations)
    np.testing.assert_allclose(float(out), ref, rtol=2e-3, atol=2e-3)
    print("KERNEL_OK")
</pallas_src>

<mosaic_0001>
module attributes {stable_mosaic.version = 11 : i64} {
  func.func @kernel(%arg0: i32, %arg1: i32, %arg2: memref<224xf32, #tpu.memory_space<smem>>, %arg3: memref<4x8x32xf32, #tpu.memory_space<vmem>>, %arg4: memref<1x16x8x32xf32, #tpu.memory_space<vmem>>, %arg5: memref<1x8x32xf32, #tpu.memory_space<vmem>>, %arg6: memref<1x1x8x1xf32, #tpu.memory_space<vmem>>) attributes {dimension_semantics = [#tpu.dimension_semantics<parallel>, #tpu.dimension_semantics<parallel>], iteration_bounds = array<i64: 2, 1>, scalar_prefetch = 1 : i64, scratch_operands = 0 : i64, tpu.core_type = #tpu.core_type<tc>, window_params = [{transform_indices = @transform_0, window_bounds = array<i64: 4, 8, 32>}, {transform_indices = @transform_1, window_bounds = array<i64: 1, 16, 8, 32>}, {transform_indices = @transform_2, window_bounds = array<i64: 1, 8, 32>}, {transform_indices = @transform_3, window_bounds = array<i64: 1, 1, 8, 1>}]} {
    %c112_i32 = arith.constant 112 : i32
    %0 = arith.muli %arg0, %c112_i32 : i32
    %c0 = arith.constant 0 : index
    %c0_0 = arith.constant 0 : index
    %c0_1 = arith.constant 0 : index
    %1 = vector.load %arg3[%c0, %c0_0, %c0_1] : memref<4x8x32xf32, #tpu.memory_space<vmem>>, vector<1x8x32xf32>
    %2 = vector.shape_cast %1 : vector<1x8x32xf32> to vector<8x32xf32>
    %c1 = arith.constant 1 : index
    %c0_2 = arith.constant 0 : index
    %c0_3 = arith.constant 0 : index
    %3 = vector.load %arg3[%c1, %c0_2, %c0_3] : memref<4x8x32xf32, #tpu.memory_space<vmem>>, vector<1x8x32xf32>
    %4 = vector.shape_cast %3 : vector<1x8x32xf32> to vector<8x32xf32>
    %c2 = arith.constant 2 : index
    %c0_4 = arith.constant 0 : index
    %c0_5 = arith.constant 0 : index
    %5 = vector.load %arg3[%c2, %c0_4, %c0_5] : memref<4x8x32xf32, #tpu.memory_space<vmem>>, vector<1x8x32xf32>
    %6 = vector.shape_cast %5 : vector<1x8x32xf32> to vector<8x32xf32>
    %c3 = arith.constant 3 : index
    %c0_6 = arith.constant 0 : index
    %c0_7 = arith.constant 0 : index
    %7 = vector.load %arg3[%c3, %c0_6, %c0_7] : memref<4x8x32xf32, #tpu.memory_space<vmem>>, vector<1x8x32xf32>
    %8 = vector.shape_cast %7 : vector<1x8x32xf32> to vector<8x32xf32>
    %9 = arith.subf %6, %2 : vector<8x32xf32>
    %10 = arith.subf %8, %4 : vector<8x32xf32>
    %cst = arith.constant 5.000000e-01 : f32
    %11 = vector.broadcast %cst : f32 to vector<8x32xf32>
    %12 = arith.mulf %11, %9 : vector<8x32xf32>
    %13 = arith.addf %2, %12 : vector<8x32xf32>
    %cst_8 = arith.constant 5.000000e-01 : f32
    %14 = vector.broadcast %cst_8 : f32 to vector<8x32xf32>
    %15 = arith.mulf %14, %10 : vector<8x32xf32>
    %16 = arith.addf %4, %15 : vector<8x32xf32>
    %cst_9 = arith.constant 9.99999982E-15 : f32
    %17 = vector.broadcast %cst_9 : f32 to vector<8x32xf32>
    %18 = arith.addf %9, %17 : vector<8x32xf32>
    %cst_10 = arith.constant 1.000000e+00 : f32
    %19 = vector.broadcast %cst_10 : f32 to vector<8x32xf32>
    %20 = arith.divf %19, %18 : vector<8x32xf32>
    %cst_11 = arith.constant 9.99999982E-15 : f32
    %21 = vector.broadcast %cst_11 : f32 to vector<8x32xf32>
    %22 = arith.addf %10, %21 : vector<8x32xf32>
    %cst_12 = arith.constant 1.000000e+00 : f32
    %23 = vector.broadcast %cst_12 : f32 to vector<8x32xf32>
    %24 = arith.divf %23, %22 : vector<8x32xf32>
    %25 = arith.mulf %9, %10 : vector<8x32xf32>
    %cst_13 = arith.constant -2.000000e+00 : f32
    %26 = vector.broadcast %cst_13 : f32 to vector<8x32xf32>
    %cst_14 = arith.constant 0.000000e+00 : f32
    %27 = vector.broadcast %cst_14 : f32 to vector<8x32xf32>
    %cst_15 = arith.constant 0.000000e+00 : f32
    %28 = vector.broadcast %cst_15 : f32 to vector<8x32xf32>
    %cst_16 = arith.constant 0.000000e+00 : f32
    %29 = vector.broadcast %cst_16 : f32 to vector<8x32xf32>
    %cst_17 = arith.constant 0.000000e+00 : f32
    %30 = vector.broadcast %cst_17 : f32 to vector<8x32xf32>
    %cst_18 = arith.constant 0.000000e+00 : f32
    %31 = vector.broadcast %cst_18 : f32 to vector<8x32xf32>
    %cst_19 = arith.constant 0.000000e+00 : f32
    %32 = vector.broadcast %cst_19 : f32 to vector<8x32xf32>
    %cst_20 = arith.constant 0.000000e+00 : f32
    %33 = vector.broadcast %cst_20 : f32 to vector<8x32xf32>
    %cst_21 = arith.constant 0.000000e+00 : f32
    %34 = vector.broadcast %cst_21 : f32 to vector<8x32xf32>
    %cst_22 = arith.constant 0.000000e+00 : f32
    %35 = vector.broadcast %cst_22 : f32 to vector<8x32xf32>
    %cst_23 = arith.constant 0.000000e+00 : f32
    %36 = vector.broadcast %cst_23 : f32 to vector<8x32xf32>
    %cst_24 = arith.constant 0.000000e+00 : f32
    %37 = vector.broadcast %cst_24 : f32 to vector<8x32xf32>
    %cst_25 = arith.constant 0.000000e+00 : f32
    %38 = vector.broadcast %cst_25 : f32 to vector<8x32xf32>
    %cst_26 = arith.constant 0.000000e+00 : f32
    %39 = vector.broadcast %cst_26 : f32 to vector<8x32xf32>
    %cst_27 = arith.constant 0.000000e+00 : f32
    %40 = vector.broadcast %cst_27 : f32 to vector<8x32xf32>
    %c0_i32 = arith.constant 0 : i32
    %41 = arith.addi %0, %c0_i32 : i32
    %c0_i32_28 = arith.constant 0 : i32
    %42 = arith.addi %41, %c0_i32_28 : i32
    %43 = arith.index_cast %42 : i32 to index
    %44 = memref.load %arg2[%43] : memref<224xf32, #tpu.memory_space<smem>>
    %c0_i32_29 = arith.constant 0 : i32
    %45 = arith.addi %0, %c0_i32_29 : i32
    %c1_i32 = arith.constant 1 : i32
    %46 = arith.addi %45, %c1_i32 : i32
    %47 = arith.index_cast %46 : i32 to index
    %48 = memref.load %arg2[%47] : memref<224xf32, #tpu.memory_space<smem>>
    %c0_i32_30 = arith.constant 0 : i32
    %49 = arith.addi %0, %c0_i32_30 : i32
    %c2_i32 = arith.constant 2 : i32
    %50 = arith.addi %49, %c2_i32 : i32
    %51 = arith.index_cast %50 : i32 to index
    %52 = memref.load %arg2[%51] : memref<224xf32, #tpu.memory_space<smem>>
    %c0_i32_31 = arith.constant 0 : i32
    %53 = arith.addi %0, %c0_i32_31 : i32
    %c3_i32 = arith.constant 3 : i32
    %54 = arith.addi %53, %c3_i32 : i32
    %55 = arith.index_cast %54 : i32 to index
    %56 = memref.load %arg2[%55] : memref<224xf32, #tpu.memory_space<smem>>
    %c0_i32_32 = arith.constant 0 : i32
    %57 = arith.addi %0, %c0_i32_32 : i32
    %c4_i32 = arith.constant 4 : i32
    %58 = arith.addi %57, %c4_i32 : i32
    %59 = arith.index_cast %58 : i32 to index
    %60 = memref.load %arg2[%59] : memref<224xf32, #tpu.memory_space<smem>>
    %c0_i32_33 = arith.constant 0 : i32
    %61 = arith.addi %0, %c0_i32_33 : i32
    %c5_i32 = arith.constant 5 : i32
    %62 = arith.addi %61, %c5_i32 : i32
    %63 = arith.index_cast %62 : i32 to index
    %64 = memref.load %arg2[%63] : memref<224xf32, #tpu.memory_space<smem>>
    %c0_i32_34 = arith.constant 0 : i32
    %65 = arith.addi %0, %c0_i32_34 : i32
    %c6_i32 = arith.constant 6 : i32
    %66 = arith.addi %65, %c6_i32 : i32
    %67 = arith.index_cast %66 : i32 to index
    %68 = memref.load %arg2[%67] : memref<224xf32, #tpu.memory_space<smem>>
    %c0_i32_35 = arith.constant 0 : i32
    %69 = arith.addi %0, %c0_i32_35 : i32
    %c7_i32 = arith.constant 7 : i32
    %70 = arith.addi %69, %c7_i32 : i32
    %71 = arith.index_cast %70 : i32 to index
    %72 = memref.load %arg2[%71] : memref<224xf32, #tpu.memory_space<smem>>
    %c0_i32_36 = arith.constant 0 : i32
    %73 = arith.addi %0, %c0_i32_36 : i32
    %c8_i32 = arith.constant 8 : i32
    %74 = arith.addi %73, %c8_i32 : i32
    %75 = arith.index_cast %74 : i32 to index
    %76 = memref.load %arg2[%75] : memref<224xf32, #tpu.memory_space<smem>>
    %c0_i32_37 = arith.constant 0 : i32
    %77 = arith.addi %0, %c0_i32_37 : i32
    %c9_i32 = arith.constant 9 : i32
    %78 = arith.addi %77, %c9_i32 : i32
    %79 = arith.index_cast %78 : i32 to index
    %80 = memref.load %arg2[%79] : memref<224xf32, #tpu.memory_space<smem>>
    %c0_i32_38 = arith.constant 0 : i32
    %81 = arith.addi %0, %c0_i32_38 : i32
    %c10_i32 = arith.constant 10 : i32
    %82 = arith.addi %81, %c10_i32 : i32
    %83 = arith.index_cast %82 : i32 to index
    %84 = memref.load %arg2[%83] : memref<224xf32, #tpu.memory_space<smem>>
    %c0_i32_39 = arith.constant 0 : i32
    %85 = arith.addi %0, %c0_i32_39 : i32
    %c11_i32 = arith.constant 11 : i32
    %86 = arith.addi %85, %c11_i32 : i32
    %87 = arith.index_cast %86 : i32 to index
    %88 = memref.load %arg2[%87] : memref<224xf32, #tpu.memory_space<smem>>
    %c0_i32_40 = arith.constant 0 : i32
    %89 = arith.addi %0, %c0_i32_40 : i32
    %c12_i32 = arith.constant 12 : i32
    %90 = arith.addi %89, %c12_i32 : i32
    %91 = arith.index_cast %90 : i32 to index
    %92 = memref.load %arg2[%91] : memref<224xf32, #tpu.memory_space<smem>>
    %c0_i32_41 = arith.constant 0 : i32
    %93 = arith.addi %0, %c0_i32_41 : i32
    %c13_i32 = arith.constant 13 : i32
    %94 = arith.addi %93, %c13_i32 : i32
    %95 = arith.index_cast %94 : i32 to index
    %96 = memref.load %arg2[%95] : memref<224xf32, #tpu.memory_space<smem>>
    %cst_42 = arith.constant 0.000000e+00 : f32
    %97 = arith.cmpf ogt, %44, %cst_42 : f32
    %98 = arith.extui %97 : i1 to i32
    %99 = arith.sitofp %98 : i32 to f32
    %100 = arith.subf %52, %44 : f32
    %101 = arith.subf %56, %48 : f32
    %102 = arith.mulf %100, %101 : f32
    %103 = vector.broadcast %52 : f32 to vector<8x32xf32>
    %104 = arith.minimumf %6, %103 : vector<8x32xf32>
    %105 = vector.broadcast %44 : f32 to vector<8x32xf32>
    %106 = arith.maximumf %2, %105 : vector<8x32xf32>
    %107 = arith.subf %104, %106 : vector<8x32xf32>
    %cst_43 = arith.constant 0.000000e+00 : f32
    %108 = vector.broadcast %cst_43 : f32 to vector<8x32xf32>
    %109 = arith.maximumf %107, %108 : vector<8x32xf32>
    %110 = vector.broadcast %56 : f32 to vector<8x32xf32>
    %111 = arith.minimumf %8, %110 : vector<8x32xf32>
    %112 = vector.broadcast %48 : f32 to vector<8x32xf32>
    %113 = arith.maximumf %4, %112 : vector<8x32xf32>
    %114 = arith.subf %111, %113 : vector<8x32xf32>
    %cst_44 = arith.constant 0.000000e+00 : f32
    %115 = vector.broadcast %cst_44 : f32 to vector<8x32xf32>
    %116 = arith.maximumf %114, %115 : vector<8x32xf32>
    %117 = arith.mulf %109, %116 : vector<8x32xf32>
    %118 = vector.broadcast %102 : f32 to vector<8x32xf32>
    %119 = arith.addf %25, %118 : vector<8x32xf32>
    %120 = arith.subf %119, %117 : vector<8x32xf32>
    %121 = arith.divf %117, %120 : vector<8x32xf32>
    %122 = vector.broadcast %99 : f32 to vector<8x32xf32>
    %123 = arith.mulf %121, %122 : vector<8x32xf32>
    %cst_45 = arith.constant 1.000000e+00 : f32
    %124 = arith.subf %99, %cst_45 : f32
    %125 = vector.broadcast %124 : f32 to vector<8x32xf32>
    %126 = arith.addf %123, %125 : vector<8x32xf32>
    %127 = arith.cmpf ogt, %126, %26 : vector<8x32xf32>
    %128 = arith.select %127, %126, %26 : vector<8x32xi1>, vector<8x32xf32>
    %129 = vector.broadcast %44 : f32 to vector<8x32xf32>
    %130 = arith.select %127, %129, %27 : vector<8x32xi1>, vector<8x32xf32>
    %131 = vector.broadcast %48 : f32 to vector<8x32xf32>
    %132 = arith.select %127, %131, %28 : vector<8x32xi1>, vector<8x32xf32>
    %133 = vector.broadcast %52 : f32 to vector<8x32xf32>
    %134 = arith.select %127, %133, %29 : vector<8x32xi1>, vector<8x32xf32>
    %135 = vector.broadcast %56 : f32 to vector<8x32xf32>
    %136 = arith.select %127, %135, %30 : vector<8x32xi1>, vector<8x32xf32>
    %137 = vector.broadcast %60 : f32 to vector<8x32xf32>
    %138 = arith.select %127, %137, %31 : vector<8x32xi1>, vector<8x32xf32>
    %139 = vector.broadcast %64 : f32 to vector<8x32xf32>
    %140 = arith.select %127, %139, %32 : vector<8x32xi1>, vector<8x32xf32>
    %141 = vector.broadcast %68 : f32 to vector<8x32xf32>
    %142 = arith.select %127, %141, %33 : vector<8x32xi1>, vector<8x32xf32>
    %143 = vector.broadcast %72 : f32 to vector<8x32xf32>
    %144 = arith.select %127, %143, %34 : vector<8x32xi1>, vector<8x32xf32>
    %145 = vector.broadcast %76 : f32 to vector<8x32xf32>
    %146 = arith.select %127, %145, %35 : vector<8x32xi1>, vector<8x32xf32>
    %147 = vector.broadcast %80 : f32 to vector<8x32xf32>
    %148 = arith.select %127, %147, %36 : vector<8x32xi1>, vector<8x32xf32>
    %149 = vector.broadcast %84 : f32 to vector<8x32xf32>
    %150 = arith.select %127, %149, %37 : vector<8x32xi1>, vector<8x32xf32>
    %151 = vector.broadcast %88 : f32 to vector<8x32xf32>
    %152 = arith.select %127, %151, %38 : vector<8x32xi1>, vector<8x32xf32>
    %153 = vector.broadcast %92 : f32 to vector<8x32xf32>
    %154 = arith.select %127, %153, %39 : vector<8x32xi1>, vector<8x32xf32>
    %155 = vector.broadcast %96 : f32 to vector<8x32xf32>
    %156 = arith.select %127, %155, %40 : vector<8x32xi1>, vector<8x32xf32>
    %c14_i32 = arith.constant 14 : i32
    %157 = arith.addi %0, %c14_i32 : i32
    %c0_i32_46 = arith.constant 0 : i32
    %158 = arith.addi %157, %c0_i32_46 : i32
    %159 = arith.index_cast %158 : i32 to index
    %160 = memref.load %arg2[%159] : memref<224xf32, #tpu.memory_space<smem>>
    %c14_i32_47 = arith.constant 14 : i32
    %161 = arith.addi %0, %c14_i32_47 : i32
    %c1_i32_48 = arith.constant 1 : i32
    %162 = arith.addi %161, %c1_i32_48 : i32
    %163 = arith.index_cast %162 : i32 to index
    %164 = memref.load %arg2[%163] : memref<224xf32, #tpu.memory_space<smem>>
    %c14_i32_49 = arith.constant 14 : i32
    %165 = arith.addi %0, %c14_i32_49 : i32
    %c2_i32_50 = arith.constant 2 : i32
    %166 = arith.addi %165, %c2_i32_50 : i32
    %167 = arith.index_cast %166 : i32 to index
    %168 = memref.load %arg2[%167] : memref<224xf32, #tpu.memory_space<smem>>
    %c14_i32_51 = arith.constant 14 : i32
    %169 = arith.addi %0, %c14_i32_51 : i32
    %c3_i32_52 = arith.constant 3 : i32
    %170 = arith.addi %169, %c3_i32_52 : i32
    %171 = arith.index_cast %170 : i32 to index
    %172 = memref.load %arg2[%171] : memref<224xf32, #tpu.memory_space<smem>>
    %c14_i32_53 = arith.constant 14 : i32
    %173 = arith.addi %0, %c14_i32_53 : i32
    %c4_i32_54 = arith.constant 4 : i32
    %174 = arith.addi %173, %c4_i32_54 : i32
    %175 = arith.index_cast %174 : i32 to index
    %176 = memref.load %arg2[%175] : memref<224xf32, #tpu.memory_space<smem>>
    %c14_i32_55 = arith.constant 14 : i32
    %177 = arith.addi %0, %c14_i32_55 : i32
    %c5_i32_56 = arith.constant 5 : i32
    %178 = arith.addi %177, %c5_i32_56 : i32
    %179 = arith.index_cast %178 : i32 to index
    %180 = memref.load %arg2[%179] : memref<224xf32, #tpu.memory_space<smem>>
    %c14_i32_57 = arith.constant 14 : i32
    %181 = arith.addi %0, %c14_i32_57 : i32
    %c6_i32_58 = arith.constant 6 : i32
    %182 = arith.addi %181, %c6_i32_58 : i32
    %183 = arith.index_cast %182 : i32 to index
    %184 = memref.load %arg2[%183] : memref<224xf32, #tpu.memory_space<smem>>
    %c14_i32_59 = arith.constant 14 : i32
    %185 = arith.addi %0, %c14_i32_59 : i32
    %c7_i32_60 = arith.constant 7 : i32
    %186 = arith.addi %185, %c7_i32_60 : i32
    %187 = arith.index_cast %186 : i32 to index
    %188 = memref.load %arg2[%187] : memref<224xf32, #tpu.memory_space<smem>>
    %c14_i32_61 = arith.constant 14 : i32
    %189 = arith.addi %0, %c14_i32_61 : i32
    %c8_i32_62 = arith.constant 8 : i32
    %190 = arith.addi %189, %c8_i32_62 : i32
    %191 = arith.index_cast %190 : i32 to index
    %192 = memref.load %arg2[%191] : memref<224xf32, #tpu.memory_space<smem>>
    %c14_i32_63 = arith.constant 14 : i32
    %193 = arith.addi %0, %c14_i32_63 : i32
    %c9_i32_64 = arith.constant 9 : i32
    %194 = arith.addi %193, %c9_i32_64 : i32
    %195 = arith.index_cast %194 : i32 to index
    %196 = memref.load %arg2[%195] : memref<224xf32, #tpu.memory_space<smem>>
    %c14_i32_65 = arith.constant 14 : i32
    %197 = arith.addi %0, %c14_i32_65 : i32
    %c10_i32_66 = arith.constant 10 : i32
    %198 = arith.addi %197, %c10_i32_66 : i32
    %199 = arith.index_cast %198 : i32 to index
    %200 = memref.load %arg2[%199] : memref<224xf32, #tpu.memory_space<smem>>
    %c14_i32_67 = arith.constant 14 : i32
    %201 = arith.addi %0, %c14_i32_67 : i32
    %c11_i32_68 = arith.constant 11 : i32
    %202 = arith.addi %201, %c11_i32_68 : i32
    %203 = arith.index_cast %202 : i32 to index
    %204 = memref.load %arg2[%203] : memref<224xf32, #tpu.memory_space<smem>>
    %c14_i32_69 = arith.constant 14 : i32
    %205 = arith.addi %0, %c14_i32_69 : i32
    %c12_i32_70 = arith.constant 12 : i32
    %206 = arith.addi %205, %c12_i32_70 : i32
    %207 = arith.index_cast %206 : i32 to index
    %208 = memref.load %arg2[%207] : memref<224xf32, #tpu.memory_space<smem>>
    %c14_i32_71 = arith.constant 14 : i32
    %209 = arith.addi %0, %c14_i32_71 : i32
    %c13_i32_72 = arith.constant 13 : i32
    %210 = arith.addi %209, %c13_i32_72 : i32
    %211 = arith.index_cast %210 : i32 to index
    %212 = memref.load %arg2[%211] : memref<224xf32, #tpu.memory_space<smem>>
    %cst_73 = arith.constant 0.000000e+00 : f32
    %213 = arith.cmpf ogt, %160, %cst_73 : f32
    %214 = arith.extui %213 : i1 to i32
    %215 = arith.sitofp %214 : i32 to f32
    %216 = arith.subf %168, %160 : f32
    %217 = arith.subf %172, %164 : f32
    %218 = arith.mulf %216, %217 : f32
    %219 = vector.broadcast %168 : f32 to vector<8x32xf32>
    %220 = arith.minimumf %6, %219 : vector<8x32xf32>
    %221 = vector.broadcast %160 : f32 to vector<8x32xf32>
    %222 = arith.maximumf %2, %221 : vector<8x32xf32>
    %223 = arith.subf %220, %222 : vector<8x32xf32>
    %cst_74 = arith.constant 0.000000e+00 : f32
    %224 = vector.broadcast %cst_74 : f32 to vector<8x32xf32>
    %225 = arith.maximumf %223, %224 : vector<8x32xf32>
    %226 = vector.broadcast %172 : f32 to vector<8x32xf32>
    %227 = arith.minimumf %8, %226 : vector<8x32xf32>
    %228 = vector.broadcast %164 : f32 to vector<8x32xf32>
    %229 = arith.maximumf %4, %228 : vector<8x32xf32>
    %230 = arith.subf %227, %229 : vector<8x32xf32>
    %cst_75 = arith.constant 0.000000e+00 : f32
    %231 = vector.broadcast %cst_75 : f32 to vector<8x32xf32>
    %232 = arith.maximumf %230, %231 : vector<8x32xf32>
    %233 = arith.mulf %225, %232 : vector<8x32xf32>
    %234 = vector.broadcast %218 : f32 to vector<8x32xf32>
    %235 = arith.addf %25, %234 : vector<8x32xf32>
    %236 = arith.subf %235, %233 : vector<8x32xf32>
    %237 = arith.divf %233, %236 : vector<8x32xf32>
    %238 = vector.broadcast %215 : f32 to vector<8x32xf32>
    %239 = arith.mulf %237, %238 : vector<8x32xf32>
    %cst_76 = arith.constant 1.000000e+00 : f32
    %240 = arith.subf %215, %cst_76 : f32
    %241 = vector.broadcast %240 : f32 to vector<8x32xf32>
    %242 = arith.addf %239, %241 : vector<8x32xf32>
    %243 = arith.cmpf ogt, %242, %128 : vector<8x32xf32>
    %244 = arith.select %243, %242, %128 : vector<8x32xi1>, vector<8x32xf32>
    %245 = vector.broadcast %160 : f32 to vector<8x32xf32>
    %246 = arith.select %243, %245, %130 : vector<8x32xi1>, vector<8x32xf32>
    %247 = vector.broadcast %164 : f32 to vector<8x32xf32>
    %248 = arith.select %243, %247, %132 : vector<8x32xi1>, vector<8x32xf32>
    %249 = vector.broadcast %168 : f32 to vector<8x32xf32>
    %250 = arith.select %243, %249, %134 : vector<8x32xi1>, vector<8x32xf32>
    %251 = vector.broadcast %172 : f32 to vector<8x32xf32>
    %252 = arith.select %243, %251, %136 : vector<8x32xi1>, vector<8x32xf32>
    %253 = vector.broadcast %176 : f32 to vector<8x32xf32>
    %254 = arith.select %243, %253, %138 : vector<8x32xi1>, vector<8x32xf32>
    %255 = vector.broadcast %180 : f32 to vector<8x32xf32>
    %256 = arith.select %243, %255, %140 : vector<8x32xi1>, vector<8x32xf32>
    %257 = vector.broadcast %184 : f32 to vector<8x32xf32>
    %258 = arith.select %243, %257, %142 : vector<8x32xi1>, vector<8x32xf32>
    %259 = vector.broadcast %188 : f32 to vector<8x32xf32>
    %260 = arith.select %243, %259, %144 : vector<8x32xi1>, vector<8x32xf32>
    %261 = vector.broadcast %192 : f32 to vector<8x32xf32>
    %262 = arith.select %243, %261, %146 : vector<8x32xi1>, vector<8x32xf32>
    %263 = vector.broadcast %196 : f32 to vector<8x32xf32>
    %264 = arith.select %243, %263, %148 : vector<8x32xi1>, vector<8x32xf32>
    %265 = vector.broadcast %200 : f32 to vector<8x32xf32>
    %266 = arith.select %243, %265, %150 : vector<8x32xi1>, vector<8x32xf32>
    %267 = vector.broadcast %204 : f32 to vector<8x32xf32>
    %268 = arith.select %243, %267, %152 : vector<8x32xi1>, vector<8x32xf32>
    %269 = vector.broadcast %208 : f32 to vector<8x32xf32>
    %270 = arith.select %243, %269, %154 : vector<8x32xi1>, vector<8x32xf32>
    %271 = vector.broadcast %212 : f32 to vector<8x32xf32>
    %272 = arith.select %243, %271, %156 : vector<8x32xi1>, vector<8x32xf32>
    %c28_i32 = arith.constant 28 : i32
    %273 = arith.addi %0, %c28_i32 : i32
    %c0_i32_77 = arith.constant 0 : i32
    %274 = arith.addi %273, %c0_i32_77 : i32
    %275 = arith.index_cast %274 : i32 to index
    %276 = memref.load %arg2[%275] : memref<224xf32, #tpu.memory_space<smem>>
    %c28_i32_78 = arith.constant 28 : i32
    %277 = arith.addi %0, %c28_i32_78 : i32
    %c1_i32_79 = arith.constant 1 : i32
    %278 = arith.addi %277, %c1_i32_79 : i32
    %279 = arith.index_cast %278 : i32 to index
    %280 = memref.load %arg2[%279] : memref<224xf32, #tpu.memory_space<smem>>
    %c28_i32_80 = arith.constant 28 : i32
    %281 = arith.addi %0, %c28_i32_80 : i32
    %c2_i32_81 = arith.constant 2 : i32
    %282 = arith.addi %281, %c2_i32_81 : i32
    %283 = arith.index_cast %282 : i32 to index
    %284 = memref.load %arg2[%283] : memref<224xf32, #tpu.memory_space<smem>>
    %c28_i32_82 = arith.constant 28 : i32
    %285 = arith.addi %0, %c28_i32_82 : i32
    %c3_i32_83 = arith.constant 3 : i32
    %286 = arith.addi %285, %c3_i32_83 : i32
    %287 = arith.index_cast %286 : i32 to index
    %288 = memref.load %arg2[%287] : memref<224xf32, #tpu.memory_space<smem>>
    %c28_i32_84 = arith.constant 28 : i32
    %289 = arith.addi %0, %c28_i32_84 : i32
    %c4_i32_85 = arith.constant 4 : i32
    %290 = arith.addi %289, %c4_i32_85 : i32
    %291 = arith.index_cast %290 : i32 to index
    %292 = memref.load %arg2[%291] : memref<224xf32, #tpu.memory_space<smem>>
    %c28_i32_86 = arith.constant 28 : i32
    %293 = arith.addi %0, %c28_i32_86 : i32
    %c5_i32_87 = arith.constant 5 : i32
    %294 = arith.addi %293, %c5_i32_87 : i32
    %295 = arith.index_cast %294 : i32 to index
    %296 = memref.load %arg2[%295] : memref<224xf32, #tpu.memory_space<smem>>
    %c28_i32_88 = arith.constant 28 : i32
    %297 = arith.addi %0, %c28_i32_88 : i32
    %c6_i32_89 = arith.constant 6 : i32
    %298 = arith.addi %297, %c6_i32_89 : i32
    %299 = arith.index_cast %298 : i32 to index
    %300 = memref.load %arg2[%299] : memref<224xf32, #tpu.memory_space<smem>>
    %c28_i32_90 = arith.constant 28 : i32
    %301 = arith.addi %0, %c28_i32_90 : i32
    %c7_i32_91 = arith.constant 7 : i32
    %302 = arith.addi %301, %c7_i32_91 : i32
    %303 = arith.index_cast %302 : i32 to index
    %304 = memref.load %arg2[%303] : memref<224xf32, #tpu.memory_space<smem>>
    %c28_i32_92 = arith.constant 28 : i32
    %305 = arith.addi %0, %c28_i32_92 : i32
    %c8_i32_93 = arith.constant 8 : i32
    %306 = arith.addi %305, %c8_i32_93 : i32
    %307 = arith.index_cast %306 : i32 to index
    %308 = memref.load %arg2[%307] : memref<224xf32, #tpu.memory_space<smem>>
    %c28_i32_94 = arith.constant 28 : i32
    %309 = arith.addi %0, %c28_i32_94 : i32
    %c9_i32_95 = arith.constant 9 : i32
    %310 = arith.addi %309, %c9_i32_95 : i32
    %311 = arith.index_cast %310 : i32 to index
    %312 = memref.load %arg2[%311] : memref<224xf32, #tpu.memory_space<smem>>
    %c28_i32_96 = arith.constant 28 : i32
    %313 = arith.addi %0, %c28_i32_96 : i32
    %c10_i32_97 = arith.constant 10 : i32
    %314 = arith.addi %313, %c10_i32_97 : i32
    %315 = arith.index_cast %314 : i32 to index
    %316 = memref.load %arg2[%315] : memref<224xf32, #tpu.memory_space<smem>>
    %c28_i32_98 = arith.constant 28 : i32
    %317 = arith.addi %0, %c28_i32_98 : i32
    %c11_i32_99 = arith.constant 11 : i32
    %318 = arith.addi %317, %c11_i32_99 : i32
    %319 = arith.index_cast %318 : i32 to index
    %320 = memref.load %arg2[%319] : memref<224xf32, #tpu.memory_space<smem>>
    %c28_i32_100 = arith.constant 28 : i32
    %321 = arith.addi %0, %c28_i32_100 : i32
    %c12_i32_101 = arith.constant 12 : i32
    %322 = arith.addi %321, %c12_i32_101 : i32
    %323 = arith.index_cast %322 : i32 to index
    %324 = memref.load %arg2[%323] : memref<224xf32, #tpu.memory_space<smem>>
    %c28_i32_102 = arith.constant 28 : i32
    %325 = arith.addi %0, %c28_i32_102 : i32
    %c13_i32_103 = arith.constant 13 : i32
    %326 = arith.addi %325, %c13_i32_103 : i32
    %327 = arith.index_cast %326 : i32 to index
    %328 = memref.load %arg2[%327] : memref<224xf32, #tpu.memory_space<smem>>
    %cst_104 = arith.constant 0.000000e+00 : f32
    %329 = arith.cmpf ogt, %276, %cst_104 : f32
    %330 = arith.extui %329 : i1 to i32
    %331 = arith.sitofp %330 : i32 to f32
    %332 = arith.subf %284, %276 : f32
    %333 = arith.subf %288, %280 : f32
    %334 = arith.mulf %332, %333 : f32
    %335 = vector.broadcast %284 : f32 to vector<8x32xf32>
    %336 = arith.minimumf %6, %335 : vector<8x32xf32>
    %337 = vector.broadcast %276 : f32 to vector<8x32xf32>
    %338 = arith.maximumf %2, %337 : vector<8x32xf32>
    %339 = arith.subf %336, %338 : vector<8x32xf32>
    %cst_105 = arith.constant 0.000000e+00 : f32
    %340 = vector.broadcast %cst_105 : f32 to vector<8x32xf32>
    %341 = arith.maximumf %339, %340 : vector<8x32xf32>
    %342 = vector.broadcast %288 : f32 to vector<8x32xf32>
    %343 = arith.minimumf %8, %342 : vector<8x32xf32>
    %344 = vector.broadcast %280 : f32 to vector<8x32xf32>
    %345 = arith.maximumf %4, %344 : vector<8x32xf32>
    %346 = arith.subf %343, %345 : vector<8x32xf32>
    %cst_106 = arith.constant 0.000000e+00 : f32
    %347 = vector.broadcast %cst_106 : f32 to vector<8x32xf32>
    %348 = arith.maximumf %346, %347 : vector<8x32xf32>
    %349 = arith.mulf %341, %348 : vector<8x32xf32>
    %350 = vector.broadcast %334 : f32 to vector<8x32xf32>
    %351 = arith.addf %25, %350 : vector<8x32xf32>
    %352 = arith.subf %351, %349 : vector<8x32xf32>
    %353 = arith.divf %349, %352 : vector<8x32xf32>
    %354 = vector.broadcast %331 : f32 to vector<8x32xf32>
    %355 = arith.mulf %353, %354 : vector<8x32xf32>
    %cst_107 = arith.constant 1.000000e+00 : f32
    %356 = arith.subf %331, %cst_107 : f32
    %357 = vector.broadcast %356 : f32 to vector<8x32xf32>
    %358 = arith.addf %355, %357 : vector<8x32xf32>
    %359 = arith.cmpf ogt, %358, %244 : vector<8x32xf32>
    %360 = arith.select %359, %358, %244 : vector<8x32xi1>, vector<8x32xf32>
    %361 = vector.broadcast %276 : f32 to vector<8x32xf32>
    %362 = arith.select %359, %361, %246 : vector<8x32xi1>, vector<8x32xf32>
    %363 = vector.broadcast %280 : f32 to vector<8x32xf32>
    %364 = arith.select %359, %363, %248 : vector<8x32xi1>, vector<8x32xf32>
    %365 = vector.broadcast %284 : f32 to vector<8x32xf32>
    %366 = arith.select %359, %365, %250 : vector<8x32xi1>, vector<8x32xf32>
    %367 = vector.broadcast %288 : f32 to vector<8x32xf32>
    %368 = arith.select %359, %367, %252 : vector<8x32xi1>, vector<8x32xf32>
    %369 = vector.broadcast %292 : f32 to vector<8x32xf32>
    %370 = arith.select %359, %369, %254 : vector<8x32xi1>, vector<8x32xf32>
    %371 = vector.broadcast %296 : f32 to vector<8x32xf32>
    %372 = arith.select %359, %371, %256 : vector<8x32xi1>, vector<8x32xf32>
    %373 = vector.broadcast %300 : f32 to vector<8x32xf32>
    %374 = arith.select %359, %373, %258 : vector<8x32xi1>, vector<8x32xf32>
    %375 = vector.broadcast %304 : f32 to vector<8x32xf32>
    %376 = arith.select %359, %375, %260 : vector<8x32xi1>, vector<8x32xf32>
    %377 = vector.broadcast %308 : f32 to vector<8x32xf32>
    %378 = arith.select %359, %377, %262 : vector<8x32xi1>, vector<8x32xf32>
    %379 = vector.broadcast %312 : f32 to vector<8x32xf32>
    %380 = arith.select %359, %379, %264 : vector<8x32xi1>, vector<8x32xf32>
    %381 = vector.broadcast %316 : f32 to vector<8x32xf32>
    %382 = arith.select %359, %381, %266 : vector<8x32xi1>, vector<8x32xf32>
    %383 = vector.broadcast %320 : f32 to vector<8x32xf32>
    %384 = arith.select %359, %383, %268 : vector<8x32xi1>, vector<8x32xf32>
    %385 = vector.broadcast %324 : f32 to vector<8x32xf32>
    %386 = arith.select %359, %385, %270 : vector<8x32xi1>, vector<8x32xf32>
    %387 = vector.broadcast %328 : f32 to vector<8x32xf32>
    %388 = arith.select %359, %387, %272 : vector<8x32xi1>, vector<8x32xf32>
    %c42_i32 = arith.constant 42 : i32
    %389 = arith.addi %0, %c42_i32 : i32
    %c0_i32_108 = arith.constant 0 : i32
    %390 = arith.addi %389, %c0_i32_108 : i32
    %391 = arith.index_cast %390 : i32 to index
    %392 = memref.load %arg2[%391] : memref<224xf32, #tpu.memory_space<smem>>
    %c42_i32_109 = arith.constant 42 : i32
    %393 = arith.addi %0, %c42_i32_109 : i32
    %c1_i32_110 = arith.constant 1 : i32
    %394 = arith.addi %393, %c1_i32_110 : i32
    %395 = arith.index_cast %394 : i32 to index
    %396 = memref.load %arg2[%395] : memref<224xf32, #tpu.memory_space<smem>>
    %c42_i32_111 = arith.constant 42 : i32
    %397 = arith.addi %0, %c42_i32_111 : i32
    %c2_i32_112 = arith.constant 2 : i32
    %398 = arith.addi %397, %c2_i32_112 : i32
    %399 = arith.index_cast %398 : i32 to index
    %400 = memref.load %arg2[%399] : memref<224xf32, #tpu.memory_space<smem>>
    %c42_i32_113 = arith.constant 42 : i32
    %401 = arith.addi %0, %c42_i32_113 : i32
    %c3_i32_114 = arith.constant 3 : i32
    %402 = arith.addi %401, %c3_i32_114 : i32
    %403 = arith.index_cast %402 : i32 to index
    %404 = memref.load %arg2[%403] : memref<224xf32, #tpu.memory_space<smem>>
    %c42_i32_115 = arith.constant 42 : i32
    %405 = arith.addi %0, %c42_i32_115 : i32
    %c4_i32_116 = arith.constant 4 : i32
    %406 = arith.addi %405, %c4_i32_116 : i32
    %407 = arith.index_cast %406 : i32 to index
    %408 = memref.load %arg2[%407] : memref<224xf32, #tpu.memory_space<smem>>
    %c42_i32_117 = arith.constant 42 : i32
    %409 = arith.addi %0, %c42_i32_117 : i32
    %c5_i32_118 = arith.constant 5 : i32
    %410 = arith.addi %409, %c5_i32_118 : i32
    %411 = arith.index_cast %410 : i32 to index
    %412 = memref.load %arg2[%411] : memref<224xf32, #tpu.memory_space<smem>>
    %c42_i32_119 = arith.constant 42 : i32
    %413 = arith.addi %0, %c42_i32_119 : i32
    %c6_i32_120 = arith.constant 6 : i32
    %414 = arith.addi %413, %c6_i32_120 : i32
    %415 = arith.index_cast %414 : i32 to index
    %416 = memref.load %arg2[%415] : memref<224xf32, #tpu.memory_space<smem>>
    %c42_i32_121 = arith.constant 42 : i32
    %417 = arith.addi %0, %c42_i32_121 : i32
    %c7_i32_122 = arith.constant 7 : i32
    %418 = arith.addi %417, %c7_i32_122 : i32
    %419 = arith.index_cast %418 : i32 to index
    %420 = memref.load %arg2[%419] : memref<224xf32, #tpu.memory_space<smem>>
    %c42_i32_123 = arith.constant 42 : i32
    %421 = arith.addi %0, %c42_i32_123 : i32
    %c8_i32_124 = arith.constant 8 : i32
    %422 = arith.addi %421, %c8_i32_124 : i32
    %423 = arith.index_cast %422 : i32 to index
    %424 = memref.load %arg2[%423] : memref<224xf32, #tpu.memory_space<smem>>
    %c42_i32_125 = arith.constant 42 : i32
    %425 = arith.addi %0, %c42_i32_125 : i32
    %c9_i32_126 = arith.constant 9 : i32
    %426 = arith.addi %425, %c9_i32_126 : i32
    %427 = arith.index_cast %426 : i32 to index
    %428 = memref.load %arg2[%427] : memref<224xf32, #tpu.memory_space<smem>>
    %c42_i32_127 = arith.constant 42 : i32
    %429 = arith.addi %0, %c42_i32_127 : i32
    %c10_i32_128 = arith.constant 10 : i32
    %430 = arith.addi %429, %c10_i32_128 : i32
    %431 = arith.index_cast %430 : i32 to index
    %432 = memref.load %arg2[%431] : memref<224xf32, #tpu.memory_space<smem>>
    %c42_i32_129 = arith.constant 42 : i32
    %433 = arith.addi %0, %c42_i32_129 : i32
    %c11_i32_130 = arith.constant 11 : i32
    %434 = arith.addi %433, %c11_i32_130 : i32
    %435 = arith.index_cast %434 : i32 to index
    %436 = memref.load %arg2[%435] : memref<224xf32, #tpu.memory_space<smem>>
    %c42_i32_131 = arith.constant 42 : i32
    %437 = arith.addi %0, %c42_i32_131 : i32
    %c12_i32_132 = arith.constant 12 : i32
    %438 = arith.addi %437, %c12_i32_132 : i32
    %439 = arith.index_cast %438 : i32 to index
    %440 = memref.load %arg2[%439] : memref<224xf32, #tpu.memory_space<smem>>
    %c42_i32_133 = arith.constant 42 : i32
    %441 = arith.addi %0, %c42_i32_133 : i32
    %c13_i32_134 = arith.constant 13 : i32
    %442 = arith.addi %441, %c13_i32_134 : i32
    %443 = arith.index_cast %442 : i32 to index
    %444 = memref.load %arg2[%443] : memref<224xf32, #tpu.memory_space<smem>>
    %cst_135 = arith.constant 0.000000e+00 : f32
    %445 = arith.cmpf ogt, %392, %cst_135 : f32
    %446 = arith.extui %445 : i1 to i32
    %447 = arith.sitofp %446 : i32 to f32
    %448 = arith.subf %400, %392 : f32
    %449 = arith.subf %404, %396 : f32
    %450 = arith.mulf %448, %449 : f32
    %451 = vector.broadcast %400 : f32 to vector<8x32xf32>
    %452 = arith.minimumf %6, %451 : vector<8x32xf32>
    %453 = vector.broadcast %392 : f32 to vector<8x32xf32>
    %454 = arith.maximumf %2, %453 : vector<8x32xf32>
    %455 = arith.subf %452, %454 : vector<8x32xf32>
    %cst_136 = arith.constant 0.000000e+00 : f32
    %456 = vector.broadcast %cst_136 : f32 to vector<8x32xf32>
    %457 = arith.maximumf %455, %456 : vector<8x32xf32>
    %458 = vector.broadcast %404 : f32 to vector<8x32xf32>
    %459 = arith.minimumf %8, %458 : vector<8x32xf32>
    %460 = vector.broadcast %396 : f32 to vector<8x32xf32>
    %461 = arith.maximumf %4, %460 : vector<8x32xf32>
    %462 = arith.subf %459, %461 : vector<8x32xf32>
    %cst_137 = arith.constant 0.000000e+00 : f32
    %463 = vector.broadcast %cst_137 : f32 to vector<8x32xf32>
    %464 = arith.maximumf %462, %463 : vector<8x32xf32>
    %465 = arith.mulf %457, %464 : vector<8x32xf32>
    %466 = vector.broadcast %450 : f32 to vector<8x32xf32>
    %467 = arith.addf %25, %466 : vector<8x32xf32>
    %468 = arith.subf %467, %465 : vector<8x32xf32>
    %469 = arith.divf %465, %468 : vector<8x32xf32>
    %470 = vector.broadcast %447 : f32 to vector<8x32xf32>
    %471 = arith.mulf %469, %470 : vector<8x32xf32>
    %cst_138 = arith.constant 1.000000e+00 : f32
    %472 = arith.subf %447, %cst_138 : f32
    %473 = vector.broadcast %472 : f32 to vector<8x32xf32>
    %474 = arith.addf %471, %473 : vector<8x32xf32>
    %475 = arith.cmpf ogt, %474, %360 : vector<8x32xf32>
    %476 = arith.select %475, %474, %360 : vector<8x32xi1>, vector<8x32xf32>
    %477 = vector.broadcast %392 : f32 to vector<8x32xf32>
    %478 = arith.select %475, %477, %362 : vector<8x32xi1>, vector<8x32xf32>
    %479 = vector.broadcast %396 : f32 to vector<8x32xf32>
    %480 = arith.select %475, %479, %364 : vector<8x32xi1>, vector<8x32xf32>
    %481 = vector.broadcast %400 : f32 to vector<8x32xf32>
    %482 = arith.select %475, %481, %366 : vector<8x32xi1>, vector<8x32xf32>
    %483 = vector.broadcast %404 : f32 to vector<8x32xf32>
    %484 = arith.select %475, %483, %368 : vector<8x32xi1>, vector<8x32xf32>
    %485 = vector.broadcast %408 : f32 to vector<8x32xf32>
    %486 = arith.select %475, %485, %370 : vector<8x32xi1>, vector<8x32xf32>
    %487 = vector.broadcast %412 : f32 to vector<8x32xf32>
    %488 = arith.select %475, %487, %372 : vector<8x32xi1>, vector<8x32xf32>
    %489 = vector.broadcast %416 : f32 to vector<8x32xf32>
    %490 = arith.select %475, %489, %374 : vector<8x32xi1>, vector<8x32xf32>
    %491 = vector.broadcast %420 : f32 to vector<8x32xf32>
    %492 = arith.select %475, %491, %376 : vector<8x32xi1>, vector<8x32xf32>
    %493 = vector.broadcast %424 : f32 to vector<8x32xf32>
    %494 = arith.select %475, %493, %378 : vector<8x32xi1>, vector<8x32xf32>
    %495 = vector.broadcast %428 : f32 to vector<8x32xf32>
    %496 = arith.select %475, %495, %380 : vector<8x32xi1>, vector<8x32xf32>
    %497 = vector.broadcast %432 : f32 to vector<8x32xf32>
    %498 = arith.select %475, %497, %382 : vector<8x32xi1>, vector<8x32xf32>
    %499 = vector.broadcast %436 : f32 to vector<8x32xf32>
    %500 = arith.select %475, %499, %384 : vector<8x32xi1>, vector<8x32xf32>
    %501 = vector.broadcast %440 : f32 to vector<8x32xf32>
    %502 = arith.select %475, %501, %386 : vector<8x32xi1>, vector<8x32xf32>
    %503 = vector.broadcast %444 : f32 to vector<8x32xf32>
    %504 = arith.select %475, %503, %388 : vector<8x32xi1>, vector<8x32xf32>
    %c56_i32 = arith.constant 56 : i32
    %505 = arith.addi %0, %c56_i32 : i32
    %c0_i32_139 = arith.constant 0 : i32
    %506 = arith.addi %505, %c0_i32_139 : i32
    %507 = arith.index_cast %506 : i32 to index
    %508 = memref.load %arg2[%507] : memref<224xf32, #tpu.memory_space<smem>>
    %c56_i32_140 = arith.constant 56 : i32
    %509 = arith.addi %0, %c56_i32_140 : i32
    %c1_i32_141 = arith.constant 1 : i32
    %510 = arith.addi %509, %c1_i32_141 : i32
    %511 = arith.index_cast %510 : i32 to index
    %512 = memref.load %arg2[%511] : memref<224xf32, #tpu.memory_space<smem>>
    %c56_i32_142 = arith.constant 56 : i32
    %513 = arith.addi %0, %c56_i32_142 : i32
    %c2_i32_143 = arith.constant 2 : i32
    %514 = arith.addi %513, %c2_i32_143 : i32
    %515 = arith.index_cast %514 : i32 to index
    %516 = memref.load %arg2[%515] : memref<224xf32, #tpu.memory_space<smem>>
    %c56_i32_144 = arith.constant 56 : i32
    %517 = arith.addi %0, %c56_i32_144 : i32
    %c3_i32_145 = arith.constant 3 : i32
    %518 = arith.addi %517, %c3_i32_145 : i32
    %519 = arith.index_cast %518 : i32 to index
    %520 = memref.load %arg2[%519] : memref<224xf32, #tpu.memory_space<smem>>
    %c56_i32_146 = arith.constant 56 : i32
    %521 = arith.addi %0, %c56_i32_146 : i32
    %c4_i32_147 = arith.constant 4 : i32
    %522 = arith.addi %521, %c4_i32_147 : i32
    %523 = arith.index_cast %522 : i32 to index
    %524 = memref.load %arg2[%523] : memref<224xf32, #tpu.memory_space<smem>>
    %c56_i32_148 = arith.constant 56 : i32
    %525 = arith.addi %0, %c56_i32_148 : i32
    %c5_i32_149 = arith.constant 5 : i32
    %526 = arith.addi %525, %c5_i32_149 : i32
    %527 = arith.index_cast %526 : i32 to index
    %528 = memref.load %arg2[%527] : memref<224xf32, #tpu.memory_space<smem>>
    %c56_i32_150 = arith.constant 56 : i32
    %529 = arith.addi %0, %c56_i32_150 : i32
    %c6_i32_151 = arith.constant 6 : i32
    %530 = arith.addi %529, %c6_i32_151 : i32
    %531 = arith.index_cast %530 : i32 to index
    %532 = memref.load %arg2[%531] : memref<224xf32, #tpu.memory_space<smem>>
    %c56_i32_152 = arith.constant 56 : i32
    %533 = arith.addi %0, %c56_i32_152 : i32
    %c7_i32_153 = arith.constant 7 : i32
    %534 = arith.addi %533, %c7_i32_153 : i32
    %535 = arith.index_cast %534 : i32 to index
    %536 = memref.load %arg2[%535] : memref<224xf32, #tpu.memory_space<smem>>
    %c56_i32_154 = arith.constant 56 : i32
    %537 = arith.addi %0, %c56_i32_154 : i32
    %c8_i32_155 = arith.constant 8 : i32
    %538 = arith.addi %537, %c8_i32_155 : i32
    %539 = arith.index_cast %538 : i32 to index
    %540 = memref.load %arg2[%539] : memref<224xf32, #tpu.memory_space<smem>>
    %c56_i32_156 = arith.constant 56 : i32
    %541 = arith.addi %0, %c56_i32_156 : i32
    %c9_i32_157 = arith.constant 9 : i32
    %542 = arith.addi %541, %c9_i32_157 : i32
    %543 = arith.index_cast %542 : i32 to index
    %544 = memref.load %arg2[%543] : memref<224xf32, #tpu.memory_space<smem>>
    %c56_i32_158 = arith.constant 56 : i32
    %545 = arith.addi %0, %c56_i32_158 : i32
    %c10_i32_159 = arith.constant 10 : i32
    %546 = arith.addi %545, %c10_i32_159 : i32
    %547 = arith.index_cast %546 : i32 to index
    %548 = memref.load %arg2[%547] : memref<224xf32, #tpu.memory_space<smem>>
    %c56_i32_160 = arith.constant 56 : i32
    %549 = arith.addi %0, %c56_i32_160 : i32
    %c11_i32_161 = arith.constant 11 : i32
    %550 = arith.addi %549, %c11_i32_161 : i32
    %551 = arith.index_cast %550 : i32 to index
    %552 = memref.load %arg2[%551] : memref<224xf32, #tpu.memory_space<smem>>
    %c56_i32_162 = arith.constant 56 : i32
    %553 = arith.addi %0, %c56_i32_162 : i32
    %c12_i32_163 = arith.constant 12 : i32
    %554 = arith.addi %553, %c12_i32_163 : i32
    %555 = arith.index_cast %554 : i32 to index
    %556 = memref.load %arg2[%555] : memref<224xf32, #tpu.memory_space<smem>>
    %c56_i32_164 = arith.constant 56 : i32
    %557 = arith.addi %0, %c56_i32_164 : i32
    %c13_i32_165 = arith.constant 13 : i32
    %558 = arith.addi %557, %c13_i32_165 : i32
    %559 = arith.index_cast %558 : i32 to index
    %560 = memref.load %arg2[%559] : memref<224xf32, #tpu.memory_space<smem>>
    %cst_166 = arith.constant 0.000000e+00 : f32
    %561 = arith.cmpf ogt, %508, %cst_166 : f32
    %562 = arith.extui %561 : i1 to i32
    %563 = arith.sitofp %562 : i32 to f32
    %564 = arith.subf %516, %508 : f32
    %565 = arith.subf %520, %512 : f32
    %566 = arith.mulf %564, %565 : f32
    %567 = vector.broadcast %516 : f32 to vector<8x32xf32>
    %568 = arith.minimumf %6, %567 : vector<8x32xf32>
    %569 = vector.broadcast %508 : f32 to vector<8x32xf32>
    %570 = arith.maximumf %2, %569 : vector<8x32xf32>
    %571 = arith.subf %568, %570 : vector<8x32xf32>
    %cst_167 = arith.constant 0.000000e+00 : f32
    %572 = vector.broadcast %cst_167 : f32 to vector<8x32xf32>
    %573 = arith.maximumf %571, %572 : vector<8x32xf32>
    %574 = vector.broadcast %520 : f32 to vector<8x32xf32>
    %575 = arith.minimumf %8, %574 : vector<8x32xf32>
    %576 = vector.broadcast %512 : f32 to vector<8x32xf32>
    %577 = arith.maximumf %4, %576 : vector<8x32xf32>
    %578 = arith.subf %575, %577 : vector<8x32xf32>
    %cst_168 = arith.constant 0.000000e+00 : f32
    %579 = vector.broadcast %cst_168 : f32 to vector<8x32xf32>
    %580 = arith.maximumf %578, %579 : vector<8x32xf32>
    %581 = arith.mulf %573, %580 : vector<8x32xf32>
    %582 = vector.broadcast %566 : f32 to vector<8x32xf32>
    %583 = arith.addf %25, %582 : vector<8x32xf32>
    %584 = arith.subf %583, %581 : vector<8x32xf32>
    %585 = arith.divf %581, %584 : vector<8x32xf32>
    %586 = vector.broadcast %563 : f32 to vector<8x32xf32>
    %587 = arith.mulf %585, %586 : vector<8x32xf32>
    %cst_169 = arith.constant 1.000000e+00 : f32
    %588 = arith.subf %563, %cst_169 : f32
    %589 = vector.broadcast %588 : f32 to vector<8x32xf32>
    %590 = arith.addf %587, %589 : vector<8x32xf32>
    %591 = arith.cmpf ogt, %590, %476 : vector<8x32xf32>
    %592 = arith.select %591, %590, %476 : vector<8x32xi1>, vector<8x32xf32>
    %593 = vector.broadcast %508 : f32 to vector<8x32xf32>
    %594 = arith.select %591, %593, %478 : vector<8x32xi1>, vector<8x32xf32>
    %595 = vector.broadcast %512 : f32 to vector<8x32xf32>
    %596 = arith.select %591, %595, %480 : vector<8x32xi1>, vector<8x32xf32>
    %597 = vector.broadcast %516 : f32 to vector<8x32xf32>
    %598 = arith.select %591, %597, %482 : vector<8x32xi1>, vector<8x32xf32>
    %599 = vector.broadcast %520 : f32 to vector<8x32xf32>
    %600 = arith.select %591, %599, %484 : vector<8x32xi1>, vector<8x32xf32>
    %601 = vector.broadcast %524 : f32 to vector<8x32xf32>
    %602 = arith.select %591, %601, %486 : vector<8x32xi1>, vector<8x32xf32>
    %603 = vector.broadcast %528 : f32 to vector<8x32xf32>
    %604 = arith.select %591, %603, %488 : vector<8x32xi1>, vector<8x32xf32>
    %605 = vector.broadcast %532 : f32 to vector<8x32xf32>
    %606 = arith.select %591, %605, %490 : vector<8x32xi1>, vector<8x32xf32>
    %607 = vector.broadcast %536 : f32 to vector<8x32xf32>
    %608 = arith.select %591, %607, %492 : vector<8x32xi1>, vector<8x32xf32>
    %609 = vector.broadcast %540 : f32 to vector<8x32xf32>
    %610 = arith.select %591, %609, %494 : vector<8x32xi1>, vector<8x32xf32>
    %611 = vector.broadcast %544 : f32 to vector<8x32xf32>
    %612 = arith.select %591, %611, %496 : vector<8x32xi1>, vector<8x32xf32>
    %613 = vector.broadcast %548 : f32 to vector<8x32xf32>
    %614 = arith.select %591, %613, %498 : vector<8x32xi1>, vector<8x32xf32>
    %615 = vector.broadcast %552 : f32 to vector<8x32xf32>
    %616 = arith.select %591, %615, %500 : vector<8x32xi1>, vector<8x32xf32>
    %617 = vector.broadcast %556 : f32 to vector<8x32xf32>
    %618 = arith.select %591, %617, %502 : vector<8x32xi1>, vector<8x32xf32>
    %619 = vector.broadcast %560 : f32 to vector<8x32xf32>
    %620 = arith.select %591, %619, %504 : vector<8x32xi1>, vector<8x32xf32>
    %c70_i32 = arith.constant 70 : i32
    %621 = arith.addi %0, %c70_i32 : i32
    %c0_i32_170 = arith.constant 0 : i32
    %622 = arith.addi %621, %c0_i32_170 : i32
    %623 = arith.index_cast %622 : i32 to index
    %624 = memref.load %arg2[%623] : memref<224xf32, #tpu.memory_space<smem>>
    %c70_i32_171 = arith.constant 70 : i32
    %625 = arith.addi %0, %c70_i32_171 : i32
    %c1_i32_172 = arith.constant 1 : i32
    %626 = arith.addi %625, %c1_i32_172 : i32
    %627 = arith.index_cast %626 : i32 to index
    %628 = memref.load %arg2[%627] : memref<224xf32, #tpu.memory_space<smem>>
    %c70_i32_173 = arith.constant 70 : i32
    %629 = arith.addi %0, %c70_i32_173 : i32
    %c2_i32_174 = arith.constant 2 : i32
    %630 = arith.addi %629, %c2_i32_174 : i32
    %631 = arith.index_cast %630 : i32 to index
    %632 = memref.load %arg2[%631] : memref<224xf32, #tpu.memory_space<smem>>
    %c70_i32_175 = arith.constant 70 : i32
    %633 = arith.addi %0, %c70_i32_175 : i32
    %c3_i32_176 = arith.constant 3 : i32
    %634 = arith.addi %633, %c3_i32_176 : i32
    %635 = arith.index_cast %634 : i32 to index
    %636 = memref.load %arg2[%635] : memref<224xf32, #tpu.memory_space<smem>>
    %c70_i32_177 = arith.constant 70 : i32
    %637 = arith.addi %0, %c70_i32_177 : i32
    %c4_i32_178 = arith.constant 4 : i32
    %638 = arith.addi %637, %c4_i32_178 : i32
    %639 = arith.index_cast %638 : i32 to index
    %640 = memref.load %arg2[%639] : memref<224xf32, #tpu.memory_space<smem>>
    %c70_i32_179 = arith.constant 70 : i32
    %641 = arith.addi %0, %c70_i32_179 : i32
    %c5_i32_180 = arith.constant 5 : i32
    %642 = arith.addi %641, %c5_i32_180 : i32
    %643 = arith.index_cast %642 : i32 to index
    %644 = memref.load %arg2[%643] : memref<224xf32, #tpu.memory_space<smem>>
    %c70_i32_181 = arith.constant 70 : i32
    %645 = arith.addi %0, %c70_i32_181 : i32
    %c6_i32_182 = arith.constant 6 : i32
    %646 = arith.addi %645, %c6_i32_182 : i32
    %647 = arith.index_cast %646 : i32 to index
    %648 = memref.load %arg2[%647] : memref<224xf32, #tpu.memory_space<smem>>
    %c70_i32_183 = arith.constant 70 : i32
    %649 = arith.addi %0, %c70_i32_183 : i32
    %c7_i32_184 = arith.constant 7 : i32
    %650 = arith.addi %649, %c7_i32_184 : i32
    %651 = arith.index_cast %650 : i32 to index
    %652 = memref.load %arg2[%651] : memref<224xf32, #tpu.memory_space<smem>>
    %c70_i32_185 = arith.constant 70 : i32
    %653 = arith.addi %0, %c70_i32_185 : i32
    %c8_i32_186 = arith.constant 8 : i32
    %654 = arith.addi %653, %c8_i32_186 : i32
    %655 = arith.index_cast %654 : i32 to index
    %656 = memref.load %arg2[%655] : memref<224xf32, #tpu.memory_space<smem>>
    %c70_i32_187 = arith.constant 70 : i32
    %657 = arith.addi %0, %c70_i32_187 : i32
    %c9_i32_188 = arith.constant 9 : i32
    %658 = arith.addi %657, %c9_i32_188 : i32
    %659 = arith.index_cast %658 : i32 to index
    %660 = memref.load %arg2[%659] : memref<224xf32, #tpu.memory_space<smem>>
    %c70_i32_189 = arith.constant 70 : i32
    %661 = arith.addi %0, %c70_i32_189 : i32
    %c10_i32_190 = arith.constant 10 : i32
    %662 = arith.addi %661, %c10_i32_190 : i32
    %663 = arith.index_cast %662 : i32 to index
    %664 = memref.load %arg2[%663] : memref<224xf32, #tpu.memory_space<smem>>
    %c70_i32_191 = arith.constant 70 : i32
    %665 = arith.addi %0, %c70_i32_191 : i32
    %c11_i32_192 = arith.constant 11 : i32
    %666 = arith.addi %665, %c11_i32_192 : i32
    %667 = arith.index_cast %666 : i32 to index
    %668 = memref.load %arg2[%667] : memref<224xf32, #tpu.memory_space<smem>>
    %c70_i32_193 = arith.constant 70 : i32
    %669 = arith.addi %0, %c70_i32_193 : i32
    %c12_i32_194 = arith.constant 12 : i32
    %670 = arith.addi %669, %c12_i32_194 : i32
    %671 = arith.index_cast %670 : i32 to index
    %672 = memref.load %arg2[%671] : memref<224xf32, #tpu.memory_space<smem>>
    %c70_i32_195 = arith.constant 70 : i32
    %673 = arith.addi %0, %c70_i32_195 : i32
    %c13_i32_196 = arith.constant 13 : i32
    %674 = arith.addi %673, %c13_i32_196 : i32
    %675 = arith.index_cast %674 : i32 to index
    %676 = memref.load %arg2[%675] : memref<224xf32, #tpu.memory_space<smem>>
    %cst_197 = arith.constant 0.000000e+00 : f32
    %677 = arith.cmpf ogt, %624, %cst_197 : f32
    %678 = arith.extui %677 : i1 to i32
    %679 = arith.sitofp %678 : i32 to f32
    %680 = arith.subf %632, %624 : f32
    %681 = arith.subf %636, %628 : f32
    %682 = arith.mulf %680, %681 : f32
    %683 = vector.broadcast %632 : f32 to vector<8x32xf32>
    %684 = arith.minimumf %6, %683 : vector<8x32xf32>
    %685 = vector.broadcast %624 : f32 to vector<8x32xf32>
    %686 = arith.maximumf %2, %685 : vector<8x32xf32>
    %687 = arith.subf %684, %686 : vector<8x32xf32>
    %cst_198 = arith.constant 0.000000e+00 : f32
    %688 = vector.broadcast %cst_198 : f32 to vector<8x32xf32>
    %689 = arith.maximumf %687, %688 : vector<8x32xf32>
    %690 = vector.broadcast %636 : f32 to vector<8x32xf32>
    %691 = arith.minimumf %8, %690 : vector<8x32xf32>
    %692 = vector.broadcast %628 : f32 to vector<8x32xf32>
    %693 = arith.maximumf %4, %692 : vector<8x32xf32>
    %694 = arith.subf %691, %693 : vector<8x32xf32>
    %cst_199 = arith.constant 0.000000e+00 : f32
    %695 = vector.broadcast %cst_199 : f32 to vector<8x32xf32>
    %696 = arith.maximumf %694, %695 : vector<8x32xf32>
    %697 = arith.mulf %689, %696 : vector<8x32xf32>
    %698 = vector.broadcast %682 : f32 to vector<8x32xf32>
    %699 = arith.addf %25, %698 : vector<8x32xf32>
    %700 = arith.subf %699, %697 : vector<8x32xf32>
    %701 = arith.divf %697, %700 : vector<8x32xf32>
    %702 = vector.broadcast %679 : f32 to vector<8x32xf32>
    %703 = arith.mulf %701, %702 : vector<8x32xf32>
    %cst_200 = arith.constant 1.000000e+00 : f32
    %704 = arith.subf %679, %cst_200 : f32
    %705 = vector.broadcast %704 : f32 to vector<8x32xf32>
    %706 = arith.addf %703, %705 : vector<8x32xf32>
    %707 = arith.cmpf ogt, %706, %592 : vector<8x32xf32>
    %708 = arith.select %707, %706, %592 : vector<8x32xi1>, vector<8x32xf32>
    %709 = vector.broadcast %624 : f32 to vector<8x32xf32>
    %710 = arith.select %707, %709, %594 : vector<8x32xi1>, vector<8x32xf32>
    %711 = vector.broadcast %628 : f32 to vector<8x32xf32>
    %712 = arith.select %707, %711, %596 : vector<8x32xi1>, vector<8x32xf32>
    %713 = vector.broadcast %632 : f32 to vector<8x32xf32>
    %714 = arith.select %707, %713, %598 : vector<8x32xi1>, vector<8x32xf32>
    %715 = vector.broadcast %636 : f32 to vector<8x32xf32>
    %716 = arith.select %707, %715, %600 : vector<8x32xi1>, vector<8x32xf32>
    %717 = vector.broadcast %640 : f32 to vector<8x32xf32>
    %718 = arith.select %707, %717, %602 : vector<8x32xi1>, vector<8x32xf32>
    %719 = vector.broadcast %644 : f32 to vector<8x32xf32>
    %720 = arith.select %707, %719, %604 : vector<8x32xi1>, vector<8x32xf32>
    %721 = vector.broadcast %648 : f32 to vector<8x32xf32>
    %722 = arith.select %707, %721, %606 : vector<8x32xi1>, vector<8x32xf32>
    %723 = vector.broadcast %652 : f32 to vector<8x32xf32>
    %724 = arith.select %707, %723, %608 : vector<8x32xi1>, vector<8x32xf32>
    %725 = vector.broadcast %656 : f32 to vector<8x32xf32>
    %726 = arith.select %707, %725, %610 : vector<8x32xi1>, vector<8x32xf32>
    %727 = vector.broadcast %660 : f32 to vector<8x32xf32>
    %728 = arith.select %707, %727, %612 : vector<8x32xi1>, vector<8x32xf32>
    %729 = vector.broadcast %664 : f32 to vector<8x32xf32>
    %730 = arith.select %707, %729, %614 : vector<8x32xi1>, vector<8x32xf32>
    %731 = vector.broadcast %668 : f32 to vector<8x32xf32>
    %732 = arith.select %707, %731, %616 : vector<8x32xi1>, vector<8x32xf32>
    %733 = vector.broadcast %672 : f32 to vector<8x32xf32>
    %734 = arith.select %707, %733, %618 : vector<8x32xi1>, vector<8x32xf32>
    %735 = vector.broadcast %676 : f32 to vector<8x32xf32>
    %736 = arith.select %707, %735, %620 : vector<8x32xi1>, vector<8x32xf32>
    %c84_i32 = arith.constant 84 : i32
    %737 = arith.addi %0, %c84_i32 : i32
    %c0_i32_201 = arith.constant 0 : i32
    %738 = arith.addi %737, %c0_i32_201 : i32
    %739 = arith.index_cast %738 : i32 to index
    %740 = memref.load %arg2[%739] : memref<224xf32, #tpu.memory_space<smem>>
    %c84_i32_202 = arith.constant 84 : i32
    %741 = arith.addi %0, %c84_i32_202 : i32
    %c1_i32_203 = arith.constant 1 : i32
    %742 = arith.addi %741, %c1_i32_203 : i32
    %743 = arith.index_cast %742 : i32 to index
    %744 = memref.load %arg2[%743] : memref<224xf32, #tpu.memory_space<smem>>
    %c84_i32_204 = arith.constant 84 : i32
    %745 = arith.addi %0, %c84_i32_204 : i32
    %c2_i32_205 = arith.constant 2 : i32
    %746 = arith.addi %745, %c2_i32_205 : i32
    %747 = arith.index_cast %746 : i32 to index
    %748 = memref.load %arg2[%747] : memref<224xf32, #tpu.memory_space<smem>>
    %c84_i32_206 = arith.constant 84 : i32
    %749 = arith.addi %0, %c84_i32_206 : i32
    %c3_i32_207 = arith.constant 3 : i32
    %750 = arith.addi %749, %c3_i32_207 : i32
    %751 = arith.index_cast %750 : i32 to index
    %752 = memref.load %arg2[%751] : memref<224xf32, #tpu.memory_space<smem>>
    %c84_i32_208 = arith.constant 84 : i32
    %753 = arith.addi %0, %c84_i32_208 : i32
    %c4_i32_209 = arith.constant 4 : i32
    %754 = arith.addi %753, %c4_i32_209 : i32
    %755 = arith.index_cast %754 : i32 to index
    %756 = memref.load %arg2[%755] : memref<224xf32, #tpu.memory_space<smem>>
    %c84_i32_210 = arith.constant 84 : i32
    %757 = arith.addi %0, %c84_i32_210 : i32
    %c5_i32_211 = arith.constant 5 : i32
    %758 = arith.addi %757, %c5_i32_211 : i32
    %759 = arith.index_cast %758 : i32 to index
    %760 = memref.load %arg2[%759] : memref<224xf32, #tpu.memory_space<smem>>
    %c84_i32_212 = arith.constant 84 : i32
    %761 = arith.addi %0, %c84_i32_212 : i32
    %c6_i32_213 = arith.constant 6 : i32
    %762 = arith.addi %761, %c6_i32_213 : i32
    %763 = arith.index_cast %762 : i32 to index
    %764 = memref.load %arg2[%763] : memref<224xf32, #tpu.memory_space<smem>>
    %c84_i32_214 = arith.constant 84 : i32
    %765 = arith.addi %0, %c84_i32_214 : i32
    %c7_i32_215 = arith.constant 7 : i32
    %766 = arith.addi %765, %c7_i32_215 : i32
    %767 = arith.index_cast %766 : i32 to index
    %768 = memref.load %arg2[%767] : memref<224xf32, #tpu.memory_space<smem>>
    %c84_i32_216 = arith.constant 84 : i32
    %769 = arith.addi %0, %c84_i32_216 : i32
    %c8_i32_217 = arith.constant 8 : i32
    %770 = arith.addi %769, %c8_i32_217 : i32
    %771 = arith.index_cast %770 : i32 to index
    %772 = memref.load %arg2[%771] : memref<224xf32, #tpu.memory_space<smem>>
    %c84_i32_218 = arith.constant 84 : i32
    %773 = arith.addi %0, %c84_i32_218 : i32
    %c9_i32_219 = arith.constant 9 : i32
    %774 = arith.addi %773, %c9_i32_219 : i32
    %775 = arith.index_cast %774 : i32 to index
    %776 = memref.load %arg2[%775] : memref<224xf32, #tpu.memory_space<smem>>
    %c84_i32_220 = arith.constant 84 : i32
    %777 = arith.addi %0, %c84_i32_220 : i32
    %c10_i32_221 = arith.constant 10 : i32
    %778 = arith.addi %777, %c10_i32_221 : i32
    %779 = arith.index_cast %778 : i32 to index
    %780 = memref.load %arg2[%779] : memref<224xf32, #tpu.memory_space<smem>>
    %c84_i32_222 = arith.constant 84 : i32
    %781 = arith.addi %0, %c84_i32_222 : i32
    %c11_i32_223 = arith.constant 11 : i32
    %782 = arith.addi %781, %c11_i32_223 : i32
    %783 = arith.index_cast %782 : i32 to index
    %784 = memref.load %arg2[%783] : memref<224xf32, #tpu.memory_space<smem>>
    %c84_i32_224 = arith.constant 84 : i32
    %785 = arith.addi %0, %c84_i32_224 : i32
    %c12_i32_225 = arith.constant 12 : i32
    %786 = arith.addi %785, %c12_i32_225 : i32
    %787 = arith.index_cast %786 : i32 to index
    %788 = memref.load %arg2[%787] : memref<224xf32, #tpu.memory_space<smem>>
    %c84_i32_226 = arith.constant 84 : i32
    %789 = arith.addi %0, %c84_i32_226 : i32
    %c13_i32_227 = arith.constant 13 : i32
    %790 = arith.addi %789, %c13_i32_227 : i32
    %791 = arith.index_cast %790 : i32 to index
    %792 = memref.load %arg2[%791] : memref<224xf32, #tpu.memory_space<smem>>
    %cst_228 = arith.constant 0.000000e+00 : f32
    %793 = arith.cmpf ogt, %740, %cst_228 : f32
    %794 = arith.extui %793 : i1 to i32
    %795 = arith.sitofp %794 : i32 to f32
    %796 = arith.subf %748, %740 : f32
    %797 = arith.subf %752, %744 : f32
    %798 = arith.mulf %796, %797 : f32
    %799 = vector.broadcast %748 : f32 to vector<8x32xf32>
    %800 = arith.minimumf %6, %799 : vector<8x32xf32>
    %801 = vector.broadcast %740 : f32 to vector<8x32xf32>
    %802 = arith.maximumf %2, %801 : vector<8x32xf32>
    %803 = arith.subf %800, %802 : vector<8x32xf32>
    %cst_229 = arith.constant 0.000000e+00 : f32
    %804 = vector.broadcast %cst_229 : f32 to vector<8x32xf32>
    %805 = arith.maximumf %803, %804 : vector<8x32xf32>
    %806 = vector.broadcast %752 : f32 to vector<8x32xf32>
    %807 = arith.minimumf %8, %806 : vector<8x32xf32>
    %808 = vector.broadcast %744 : f32 to vector<8x32xf32>
    %809 = arith.maximumf %4, %808 : vector<8x32xf32>
    %810 = arith.subf %807, %809 : vector<8x32xf32>
    %cst_230 = arith.constant 0.000000e+00 : f32
    %811 = vector.broadcast %cst_230 : f32 to vector<8x32xf32>
    %812 = arith.maximumf %810, %811 : vector<8x32xf32>
    %813 = arith.mulf %805, %812 : vector<8x32xf32>
    %814 = vector.broadcast %798 : f32 to vector<8x32xf32>
    %815 = arith.addf %25, %814 : vector<8x32xf32>
    %816 = arith.subf %815, %813 : vector<8x32xf32>
    %817 = arith.divf %813, %816 : vector<8x32xf32>
    %818 = vector.broadcast %795 : f32 to vector<8x32xf32>
    %819 = arith.mulf %817, %818 : vector<8x32xf32>
    %cst_231 = arith.constant 1.000000e+00 : f32
    %820 = arith.subf %795, %cst_231 : f32
    %821 = vector.broadcast %820 : f32 to vector<8x32xf32>
    %822 = arith.addf %819, %821 : vector<8x32xf32>
    %823 = arith.cmpf ogt, %822, %708 : vector<8x32xf32>
    %824 = arith.select %823, %822, %708 : vector<8x32xi1>, vector<8x32xf32>
    %825 = vector.broadcast %740 : f32 to vector<8x32xf32>
    %826 = arith.select %823, %825, %710 : vector<8x32xi1>, vector<8x32xf32>
    %827 = vector.broadcast %744 : f32 to vector<8x32xf32>
    %828 = arith.select %823, %827, %712 : vector<8x32xi1>, vector<8x32xf32>
    %829 = vector.broadcast %748 : f32 to vector<8x32xf32>
    %830 = arith.select %823, %829, %714 : vector<8x32xi1>, vector<8x32xf32>
    %831 = vector.broadcast %752 : f32 to vector<8x32xf32>
    %832 = arith.select %823, %831, %716 : vector<8x32xi1>, vector<8x32xf32>
    %833 = vector.broadcast %756 : f32 to vector<8x32xf32>
    %834 = arith.select %823, %833, %718 : vector<8x32xi1>, vector<8x32xf32>
    %835 = vector.broadcast %760 : f32 to vector<8x32xf32>
    %836 = arith.select %823, %835, %720 : vector<8x32xi1>, vector<8x32xf32>
    %837 = vector.broadcast %764 : f32 to vector<8x32xf32>
    %838 = arith.select %823, %837, %722 : vector<8x32xi1>, vector<8x32xf32>
    %839 = vector.broadcast %768 : f32 to vector<8x32xf32>
    %840 = arith.select %823, %839, %724 : vector<8x32xi1>, vector<8x32xf32>
    %841 = vector.broadcast %772 : f32 to vector<8x32xf32>
    %842 = arith.select %823, %841, %726 : vector<8x32xi1>, vector<8x32xf32>
    %843 = vector.broadcast %776 : f32 to vector<8x32xf32>
    %844 = arith.select %823, %843, %728 : vector<8x32xi1>, vector<8x32xf32>
    %845 = vector.broadcast %780 : f32 to vector<8x32xf32>
    %846 = arith.select %823, %845, %730 : vector<8x32xi1>, vector<8x32xf32>
    %847 = vector.broadcast %784 : f32 to vector<8x32xf32>
    %848 = arith.select %823, %847, %732 : vector<8x32xi1>, vector<8x32xf32>
    %849 = vector.broadcast %788 : f32 to vector<8x32xf32>
    %850 = arith.select %823, %849, %734 : vector<8x32xi1>, vector<8x32xf32>
    %851 = vector.broadcast %792 : f32 to vector<8x32xf32>
    %852 = arith.select %823, %851, %736 : vector<8x32xi1>, vector<8x32xf32>
    %c98_i32 = arith.constant 98 : i32
    %853 = arith.addi %0, %c98_i32 : i32
    %c0_i32_232 = arith.constant 0 : i32
    %854 = arith.addi %853, %c0_i32_232 : i32
    %855 = arith.index_cast %854 : i32 to index
    %856 = memref.load %arg2[%855] : memref<224xf32, #tpu.memory_space<smem>>
    %c98_i32_233 = arith.constant 98 : i32
    %857 = arith.addi %0, %c98_i32_233 : i32
    %c1_i32_234 = arith.constant 1 : i32
    %858 = arith.addi %857, %c1_i32_234 : i32
    %859 = arith.index_cast %858 : i32 to index
    %860 = memref.load %arg2[%859] : memref<224xf32, #tpu.memory_space<smem>>
    %c98_i32_235 = arith.constant 98 : i32
    %861 = arith.addi %0, %c98_i32_235 : i32
    %c2_i32_236 = arith.constant 2 : i32
    %862 = arith.addi %861, %c2_i32_236 : i32
    %863 = arith.index_cast %862 : i32 to index
    %864 = memref.load %arg2[%863] : memref<224xf32, #tpu.memory_space<smem>>
    %c98_i32_237 = arith.constant 98 : i32
    %865 = arith.addi %0, %c98_i32_237 : i32
    %c3_i32_238 = arith.constant 3 : i32
    %866 = arith.addi %865, %c3_i32_238 : i32
    %867 = arith.index_cast %866 : i32 to index
    %868 = memref.load %arg2[%867] : memref<224xf32, #tpu.memory_space<smem>>
    %c98_i32_239 = arith.constant 98 : i32
    %869 = arith.addi %0, %c98_i32_239 : i32
    %c4_i32_240 = arith.constant 4 : i32
    %870 = arith.addi %869, %c4_i32_240 : i32
    %871 = arith.index_cast %870 : i32 to index
    %872 = memref.load %arg2[%871] : memref<224xf32, #tpu.memory_space<smem>>
    %c98_i32_241 = arith.constant 98 : i32
    %873 = arith.addi %0, %c98_i32_241 : i32
    %c5_i32_242 = arith.constant 5 : i32
    %874 = arith.addi %873, %c5_i32_242 : i32
    %875 = arith.index_cast %874 : i32 to index
    %876 = memref.load %arg2[%875] : memref<224xf32, #tpu.memory_space<smem>>
    %c98_i32_243 = arith.constant 98 : i32
    %877 = arith.addi %0, %c98_i32_243 : i32
    %c6_i32_244 = arith.constant 6 : i32
    %878 = arith.addi %877, %c6_i32_244 : i32
    %879 = arith.index_cast %878 : i32 to index
    %880 = memref.load %arg2[%879] : memref<224xf32, #tpu.memory_space<smem>>
    %c98_i32_245 = arith.constant 98 : i32
    %881 = arith.addi %0, %c98_i32_245 : i32
    %c7_i32_246 = arith.constant 7 : i32
    %882 = arith.addi %881, %c7_i32_246 : i32
    %883 = arith.index_cast %882 : i32 to index
    %884 = memref.load %arg2[%883] : memref<224xf32, #tpu.memory_space<smem>>
    %c98_i32_247 = arith.constant 98 : i32
    %885 = arith.addi %0, %c98_i32_247 : i32
    %c8_i32_248 = arith.constant 8 : i32
    %886 = arith.addi %885, %c8_i32_248 : i32
    %887 = arith.index_cast %886 : i32 to index
    %888 = memref.load %arg2[%887] : memref<224xf32, #tpu.memory_space<smem>>
    %c98_i32_249 = arith.constant 98 : i32
    %889 = arith.addi %0, %c98_i32_249 : i32
    %c9_i32_250 = arith.constant 9 : i32
    %890 = arith.addi %889, %c9_i32_250 : i32
    %891 = arith.index_cast %890 : i32 to index
    %892 = memref.load %arg2[%891] : memref<224xf32, #tpu.memory_space<smem>>
    %c98_i32_251 = arith.constant 98 : i32
    %893 = arith.addi %0, %c98_i32_251 : i32
    %c10_i32_252 = arith.constant 10 : i32
    %894 = arith.addi %893, %c10_i32_252 : i32
    %895 = arith.index_cast %894 : i32 to index
    %896 = memref.load %arg2[%895] : memref<224xf32, #tpu.memory_space<smem>>
    %c98_i32_253 = arith.constant 98 : i32
    %897 = arith.addi %0, %c98_i32_253 : i32
    %c11_i32_254 = arith.constant 11 : i32
    %898 = arith.addi %897, %c11_i32_254 : i32
    %899 = arith.index_cast %898 : i32 to index
    %900 = memref.load %arg2[%899] : memref<224xf32, #tpu.memory_space<smem>>
    %c98_i32_255 = arith.constant 98 : i32
    %901 = arith.addi %0, %c98_i32_255 : i32
    %c12_i32_256 = arith.constant 12 : i32
    %902 = arith.addi %901, %c12_i32_256 : i32
    %903 = arith.index_cast %902 : i32 to index
    %904 = memref.load %arg2[%903] : memref<224xf32, #tpu.memory_space<smem>>
    %c98_i32_257 = arith.constant 98 : i32
    %905 = arith.addi %0, %c98_i32_257 : i32
    %c13_i32_258 = arith.constant 13 : i32
    %906 = arith.addi %905, %c13_i32_258 : i32
    %907 = arith.index_cast %906 : i32 to index
    %908 = memref.load %arg2[%907] : memref<224xf32, #tpu.memory_space<smem>>
    %cst_259 = arith.constant 0.000000e+00 : f32
    %909 = arith.cmpf ogt, %856, %cst_259 : f32
    %910 = arith.extui %909 : i1 to i32
    %911 = arith.sitofp %910 : i32 to f32
    %912 = arith.subf %864, %856 : f32
    %913 = arith.subf %868, %860 : f32
    %914 = arith.mulf %912, %913 : f32
    %915 = vector.broadcast %864 : f32 to vector<8x32xf32>
    %916 = arith.minimumf %6, %915 : vector<8x32xf32>
    %917 = vector.broadcast %856 : f32 to vector<8x32xf32>
    %918 = arith.maximumf %2, %917 : vector<8x32xf32>
    %919 = arith.subf %916, %918 : vector<8x32xf32>
    %cst_260 = arith.constant 0.000000e+00 : f32
    %920 = vector.broadcast %cst_260 : f32 to vector<8x32xf32>
    %921 = arith.maximumf %919, %920 : vector<8x32xf32>
    %922 = vector.broadcast %868 : f32 to vector<8x32xf32>
    %923 = arith.minimumf %8, %922 : vector<8x32xf32>
    %924 = vector.broadcast %860 : f32 to vector<8x32xf32>
    %925 = arith.maximumf %4, %924 : vector<8x32xf32>
    %926 = arith.subf %923, %925 : vector<8x32xf32>
    %cst_261 = arith.constant 0.000000e+00 : f32
    %927 = vector.broadcast %cst_261 : f32 to vector<8x32xf32>
    %928 = arith.maximumf %926, %927 : vector<8x32xf32>
    %929 = arith.mulf %921, %928 : vector<8x32xf32>
    %930 = vector.broadcast %914 : f32 to vector<8x32xf32>
    %931 = arith.addf %25, %930 : vector<8x32xf32>
    %932 = arith.subf %931, %929 : vector<8x32xf32>
    %933 = arith.divf %929, %932 : vector<8x32xf32>
    %934 = vector.broadcast %911 : f32 to vector<8x32xf32>
    %935 = arith.mulf %933, %934 : vector<8x32xf32>
    %cst_262 = arith.constant 1.000000e+00 : f32
    %936 = arith.subf %911, %cst_262 : f32
    %937 = vector.broadcast %936 : f32 to vector<8x32xf32>
    %938 = arith.addf %935, %937 : vector<8x32xf32>
    %939 = arith.cmpf ogt, %938, %824 : vector<8x32xf32>
    %940 = arith.select %939, %938, %824 : vector<8x32xi1>, vector<8x32xf32>
    %941 = vector.broadcast %856 : f32 to vector<8x32xf32>
    %942 = arith.select %939, %941, %826 : vector<8x32xi1>, vector<8x32xf32>
    %943 = vector.broadcast %860 : f32 to vector<8x32xf32>
    %944 = arith.select %939, %943, %828 : vector<8x32xi1>, vector<8x32xf32>
    %945 = vector.broadcast %864 : f32 to vector<8x32xf32>
    %946 = arith.select %939, %945, %830 : vector<8x32xi1>, vector<8x32xf32>
    %947 = vector.broadcast %868 : f32 to vector<8x32xf32>
    %948 = arith.select %939, %947, %832 : vector<8x32xi1>, vector<8x32xf32>
    %949 = vector.broadcast %872 : f32 to vector<8x32xf32>
    %950 = arith.select %939, %949, %834 : vector<8x32xi1>, vector<8x32xf32>
    %951 = vector.broadcast %876 : f32 to vector<8x32xf32>
    %952 = arith.select %939, %951, %836 : vector<8x32xi1>, vector<8x32xf32>
    %953 = vector.broadcast %880 : f32 to vector<8x32xf32>
    %954 = arith.select %939, %953, %838 : vector<8x32xi1>, vector<8x32xf32>
    %955 = vector.broadcast %884 : f32 to vector<8x32xf32>
    %956 = arith.select %939, %955, %840 : vector<8x32xi1>, vector<8x32xf32>
    %957 = vector.broadcast %888 : f32 to vector<8x32xf32>
    %958 = arith.select %939, %957, %842 : vector<8x32xi1>, vector<8x32xf32>
    %959 = vector.broadcast %892 : f32 to vector<8x32xf32>
    %960 = arith.select %939, %959, %844 : vector<8x32xi1>, vector<8x32xf32>
    %961 = vector.broadcast %896 : f32 to vector<8x32xf32>
    %962 = arith.select %939, %961, %846 : vector<8x32xi1>, vector<8x32xf32>
    %963 = vector.broadcast %900 : f32 to vector<8x32xf32>
    %964 = arith.select %939, %963, %848 : vector<8x32xi1>, vector<8x32xf32>
    %965 = vector.broadcast %904 : f32 to vector<8x32xf32>
    %966 = arith.select %939, %965, %850 : vector<8x32xi1>, vector<8x32xf32>
    %967 = vector.broadcast %908 : f32 to vector<8x32xf32>
    %968 = arith.select %939, %967, %852 : vector<8x32xi1>, vector<8x32xf32>
    %cst_263 = arith.constant 5.000000e-01 : f32
    %969 = vector.broadcast %cst_263 : f32 to vector<8x32xf32>
    %970 = arith.cmpf oge, %940, %969 : vector<8x32xf32>
    %cst_264 = arith.constant 3.000000e-01 : f32
    %971 = vector.broadcast %cst_264 : f32 to vector<8x32xf32>
    %972 = arith.cmpf olt, %940, %971 : vector<8x32xf32>
    %c0_265 = arith.constant 0 : index
    %c0_266 = arith.constant 0 : index
    %c0_267 = arith.constant 0 : index
    %c0_268 = arith.constant 0 : index
    %973 = vector.load %arg4[%c0_265, %c0_266, %c0_267, %c0_268] : memref<1x16x8x32xf32, #tpu.memory_space<vmem>>, vector<1x1x8x32xf32>
    %974 = vector.shape_cast %973 : vector<1x1x8x32xf32> to vector<8x32xf32>
    %c0_269 = arith.constant 0 : index
    %c1_270 = arith.constant 1 : index
    %c0_271 = arith.constant 0 : index
    %c0_272 = arith.constant 0 : index
    %975 = vector.load %arg4[%c0_269, %c1_270, %c0_271, %c0_272] : memref<1x16x8x32xf32, #tpu.memory_space<vmem>>, vector<1x1x8x32xf32>
    %976 = vector.shape_cast %975 : vector<1x1x8x32xf32> to vector<8x32xf32>
    %977 = arith.subf %976, %974 : vector<8x32xf32>
    %cst_273 = arith.constant 0.000000e+00 : f32
    %978 = vector.broadcast %cst_273 : f32 to vector<8x32xf32>
    %979 = arith.maximumf %977, %978 : vector<8x32xf32>
    %980 = math.absf %977 : vector<8x32xf32>
    %cst_274 = arith.constant 0.000000e+00 : f32
    %981 = vector.broadcast %cst_274 : f32 to vector<8x32xf32>
    %982 = arith.subf %981, %980 : vector<8x32xf32>
    %983 = math.exp %982 : vector<8x32xf32>
    %cst_275 = arith.constant 1.000000e+00 : f32
    %984 = vector.broadcast %cst_275 : f32 to vector<8x32xf32>
    %985 = arith.addf %984, %983 : vector<8x32xf32>
    %986 = math.log %985 : vector<8x32xf32>
    %987 = arith.addf %979, %986 : vector<8x32xf32>
    %988 = arith.subf %987, %977 : vector<8x32xf32>
    %cst_276 = arith.constant -1.000000e+30 : f32
    %989 = vector.broadcast %cst_276 : f32 to vector<8x32xf32>
    %990 = arith.select %972, %988, %989 : vector<8x32xi1>, vector<8x32xf32>
    %c0_277 = arith.constant 0 : index
    %c0_278 = arith.constant 0 : index
    %c0_279 = arith.constant 0 : index
    %991 = vector.load %arg5[%c0_277, %c0_278, %c0_279] : memref<1x8x32xf32, #tpu.memory_space<vmem>>, vector<1x8x32xf32>
    %992 = vector.shape_cast %991 : vector<1x8x32xf32> to vector<8x32xf32>
    %993 = vector.shape_cast %990 : vector<8x32xf32> to vector<1x8x32xf32>
    tpu.vector_store %arg5[%c0_277, %c0_278, %c0_279], %993 {strides = array<i32>} : memref<1x8x32xf32, #tpu.memory_space<vmem>>, vector<1x8x32xf32>,
    %994 = arith.subf %946, %942 : vector<8x32xf32>
    %995 = arith.subf %948, %944 : vector<8x32xf32>
    %cst_280 = arith.constant 5.000000e-01 : f32
    %996 = vector.broadcast %cst_280 : f32 to vector<8x32xf32>
    %997 = arith.mulf %996, %994 : vector<8x32xf32>
    %998 = arith.addf %942, %997 : vector<8x32xf32>
    %cst_281 = arith.constant 5.000000e-01 : f32
    %999 = vector.broadcast %cst_281 : f32 to vector<8x32xf32>
    %1000 = arith.mulf %999, %995 : vector<8x32xf32>
    %1001 = arith.addf %944, %1000 : vector<8x32xf32>
    %1002 = arith.subf %998, %13 : vector<8x32xf32>
    %1003 = arith.mulf %1002, %20 : vector<8x32xf32>
    %cst_282 = arith.constant 1.000000e+01 : f32
    %1004 = vector.broadcast %cst_282 : f32 to vector<8x32xf32>
    %1005 = arith.mulf %1003, %1004 : vector<8x32xf32>
    %1006 = arith.subf %1001, %16 : vector<8x32xf32>
    %1007 = arith.mulf %1006, %24 : vector<8x32xf32>
    %cst_283 = arith.constant 1.000000e+01 : f32
    %1008 = vector.broadcast %cst_283 : f32 to vector<8x32xf32>
    %1009 = arith.mulf %1007, %1008 : vector<8x32xf32>
    %1010 = arith.mulf %994, %20 : vector<8x32xf32>
    %cst_284 = arith.constant 1.000000e+00 : f32
    %1011 = vector.broadcast %cst_284 : f32 to vector<8x32xf32>
    %1012 = arith.select %970, %1010, %1011 : vector<8x32xi1>, vector<8x32xf32>
    %1013 = math.log %1012 : vector<8x32xf32>
    %cst_285 = arith.constant 5.000000e+00 : f32
    %1014 = vector.broadcast %cst_285 : f32 to vector<8x32xf32>
    %1015 = arith.mulf %1013, %1014 : vector<8x32xf32>
    %1016 = arith.mulf %995, %24 : vector<8x32xf32>
    %cst_286 = arith.constant 1.000000e+00 : f32
    %1017 = vector.broadcast %cst_286 : f32 to vector<8x32xf32>
    %1018 = arith.select %970, %1016, %1017 : vector<8x32xi1>, vector<8x32xf32>
    %1019 = math.log %1018 : vector<8x32xf32>
    %cst_287 = arith.constant 5.000000e+00 : f32
    %1020 = vector.broadcast %cst_287 : f32 to vector<8x32xf32>
    %1021 = arith.mulf %1019, %1020 : vector<8x32xf32>
    %c0_288 = arith.constant 0 : index
    %c2_289 = arith.constant 2 : index
    %c0_290 = arith.constant 0 : index
    %c0_291 = arith.constant 0 : index
    %1022 = vector.load %arg4[%c0_288, %c2_289, %c0_290, %c0_291] : memref<1x16x8x32xf32, #tpu.memory_space<vmem>>, vector<1x1x8x32xf32>
    %1023 = vector.shape_cast %1022 : vector<1x1x8x32xf32> to vector<8x32xf32>
    %1024 = arith.subf %1005, %1023 : vector<8x32xf32>
    %1025 = math.absf %1024 : vector<8x32xf32>
    %cst_292 = arith.constant 1.000000e+00 : f32
    %1026 = vector.broadcast %cst_292 : f32 to vector<8x32xf32>
    %1027 = arith.cmpf olt, %1025, %1026 : vector<8x32xf32>
    %cst_293 = arith.constant 5.000000e-01 : f32
    %1028 = vector.broadcast %cst_293 : f32 to vector<8x32xf32>
    %1029 = arith.mulf %1028, %1024 : vector<8x32xf32>
    %1030 = arith.mulf %1029, %1024 : vector<8x32xf32>
    %cst_294 = arith.constant 5.000000e-01 : f32
    %1031 = vector.broadcast %cst_294 : f32 to vector<8x32xf32>
    %1032 = arith.subf %1025, %1031 : vector<8x32xf32>
    %1033 = arith.select %1027, %1030, %1032 : vector<8x32xi1>, vector<8x32xf32>
    %c0_295 = arith.constant 0 : index
    %c3_296 = arith.constant 3 : index
    %c0_297 = arith.constant 0 : index
    %c0_298 = arith.constant 0 : index
    %1034 = vector.load %arg4[%c0_295, %c3_296, %c0_297, %c0_298] : memref<1x16x8x32xf32, #tpu.memory_space<vmem>>, vector<1x1x8x32xf32>
    %1035 = vector.shape_cast %1034 : vector<1x1x8x32xf32> to vector<8x32xf32>
    %1036 = arith.subf %1009, %1035 : vector<8x32xf32>
    %1037 = math.absf %1036 : vector<8x32xf32>
    %cst_299 = arith.constant 1.000000e+00 : f32
    %1038 = vector.broadcast %cst_299 : f32 to vector<8x32xf32>
    %1039 = arith.cmpf olt, %1037, %1038 : vector<8x32xf32>
    %cst_300 = arith.constant 5.000000e-01 : f32
    %1040 = vector.broadcast %cst_300 : f32 to vector<8x32xf32>
    %1041 = arith.mulf %1040, %1036 : vector<8x32xf32>
    %1042 = arith.mulf %1041, %1036 : vector<8x32xf32>
    %cst_301 = arith.constant 5.000000e-01 : f32
    %1043 = vector.broadcast %cst_301 : f32 to vector<8x32xf32>
    %1044 = arith.subf %1037, %1043 : vector<8x32xf32>
    %1045 = arith.select %1039, %1042, %1044 : vector<8x32xi1>, vector<8x32xf32>
    %1046 = arith.addf %1033, %1045 : vector<8x32xf32>
    %c0_302 = arith.constant 0 : index
    %c4 = arith.constant 4 : index
    %c0_303 = arith.constant 0 : index
    %c0_304 = arith.constant 0 : index
    %1047 = vector.load %arg4[%c0_302, %c4, %c0_303, %c0_304] : memref<1x16x8x32xf32, #tpu.memory_space<vmem>>, vector<1x1x8x32xf32>
    %1048 = vector.shape_cast %1047 : vector<1x1x8x32xf32> to vector<8x32xf32>
    %1049 = arith.subf %1015, %1048 : vector<8x32xf32>
    %1050 = math.absf %1049 : vector<8x32xf32>
    %cst_305 = arith.constant 1.000000e+00 : f32
    %1051 = vector.broadcast %cst_305 : f32 to vector<8x32xf32>
    %1052 = arith.cmpf olt, %1050, %1051 : vector<8x32xf32>
    %cst_306 = arith.constant 5.000000e-01 : f32
    %1053 = vector.broadcast %cst_306 : f32 to vector<8x32xf32>
    %1054 = arith.mulf %1053, %1049 : vector<8x32xf32>
    %1055 = arith.mulf %1054, %1049 : vector<8x32xf32>
    %cst_307 = arith.constant 5.000000e-01 : f32
    %1056 = vector.broadcast %cst_307 : f32 to vector<8x32xf32>
    %1057 = arith.subf %1050, %1056 : vector<8x32xf32>
    %1058 = arith.select %1052, %1055, %1057 : vector<8x32xi1>, vector<8x32xf32>
    %1059 = arith.addf %1046, %1058 : vector<8x32xf32>
    %c0_308 = arith.constant 0 : index
    %c5 = arith.constant 5 : index
    %c0_309 = arith.constant 0 : index
    %c0_310 = arith.constant 0 : index
    %1060 = vector.load %arg4[%c0_308, %c5, %c0_309, %c0_310] : memref<1x16x8x32xf32, #tpu.memory_space<vmem>>, vector<1x1x8x32xf32>
    %1061 = vector.shape_cast %1060 : vector<1x1x8x32xf32> to vector<8x32xf32>
    %1062 = arith.subf %1021, %1061 : vector<8x32xf32>
    %1063 = math.absf %1062 : vector<8x32xf32>
    %cst_311 = arith.constant 1.000000e+00 : f32
    %1064 = vector.broadcast %cst_311 : f32 to vector<8x32xf32>
    %1065 = arith.cmpf olt, %1063, %1064 : vector<8x32xf32>
    %cst_312 = arith.constant 5.000000e-01 : f32
    %1066 = vector.broadcast %cst_312 : f32 to vector<8x32xf32>
    %1067 = arith.mulf %1066, %1062 : vector<8x32xf32>
    %1068 = arith.mulf %1067, %1062 : vector<8x32xf32>
    %cst_313 = arith.constant 5.000000e-01 : f32
    %1069 = vector.broadcast %cst_313 : f32 to vector<8x32xf32>
    %1070 = arith.subf %1063, %1069 : vector<8x32xf32>
    %1071 = arith.select %1065, %1068, %1070 : vector<8x32xi1>, vector<8x32xf32>
    %1072 = arith.addf %1059, %1071 : vector<8x32xf32>
    %1073 = arith.addf %950, %952 : vector<8x32xf32>
    %1074 = arith.addf %1073, %954 : vector<8x32xf32>
    %1075 = arith.addf %1074, %956 : vector<8x32xf32>
    %1076 = arith.addf %1075, %958 : vector<8x32xf32>
    %1077 = arith.addf %1076, %960 : vector<8x32xf32>
    %1078 = arith.addf %1077, %962 : vector<8x32xf32>
    %1079 = arith.addf %1078, %964 : vector<8x32xf32>
    %1080 = arith.addf %1079, %966 : vector<8x32xf32>
    %1081 = arith.addf %1080, %968 : vector<8x32xf32>
    %cst_314 = arith.constant 0.000000e+00 : f32
    %1082 = vector.broadcast %cst_314 : f32 to vector<8x32xf32>
    %1083 = arith.cmpf ogt, %1081, %1082 : vector<8x32xf32>
    %1084 = arith.andi %1083, %970 : vector<8x32xi1>
    %cst_315 = arith.constant 0.000000e+00 : f32
    %1085 = vector.broadcast %cst_315 : f32 to vector<8x32xf32>
    %1086 = arith.subf %950, %13 : vector<8x32xf32>
    %1087 = arith.mulf %1086, %20 : vector<8x32xf32>
    %cst_316 = arith.constant 1.000000e+01 : f32
    %1088 = vector.broadcast %cst_316 : f32 to vector<8x32xf32>
    %1089 = arith.mulf %1087, %1088 : vector<8x32xf32>
    %1090 = arith.subf %952, %16 : vector<8x32xf32>
    %1091 = arith.mulf %1090, %24 : vector<8x32xf32>
    %cst_317 = arith.constant 1.000000e+01 : f32
    %1092 = vector.broadcast %cst_317 : f32 to vector<8x32xf32>
    %1093 = arith.mulf %1091, %1092 : vector<8x32xf32>
    %c0_318 = arith.constant 0 : index
    %c6 = arith.constant 6 : index
    %c0_319 = arith.constant 0 : index
    %c0_320 = arith.constant 0 : index
    %1094 = vector.load %arg4[%c0_318, %c6, %c0_319, %c0_320] : memref<1x16x8x32xf32, #tpu.memory_space<vmem>>, vector<1x1x8x32xf32>
    %1095 = vector.shape_cast %1094 : vector<1x1x8x32xf32> to vector<8x32xf32>
    %1096 = arith.subf %1089, %1095 : vector<8x32xf32>
    %1097 = math.absf %1096 : vector<8x32xf32>
    %cst_321 = arith.constant 1.000000e+00 : f32
    %1098 = vector.broadcast %cst_321 : f32 to vector<8x32xf32>
    %1099 = arith.cmpf olt, %1097, %1098 : vector<8x32xf32>
    %cst_322 = arith.constant 5.000000e-01 : f32
    %1100 = vector.broadcast %cst_322 : f32 to vector<8x32xf32>
    %1101 = arith.mulf %1100, %1096 : vector<8x32xf32>
    %1102 = arith.mulf %1101, %1096 : vector<8x32xf32>
    %cst_323 = arith.constant 5.000000e-01 : f32
    %1103 = vector.broadcast %cst_323 : f32 to vector<8x32xf32>
    %1104 = arith.subf %1097, %1103 : vector<8x32xf32>
    %1105 = arith.select %1099, %1102, %1104 : vector<8x32xi1>, vector<8x32xf32>
    %1106 = arith.addf %1085, %1105 : vector<8x32xf32>
    %c0_324 = arith.constant 0 : index
    %c7 = arith.constant 7 : index
    %c0_325 = arith.constant 0 : index
    %c0_326 = arith.constant 0 : index
    %1107 = vector.load %arg4[%c0_324, %c7, %c0_325, %c0_326] : memref<1x16x8x32xf32, #tpu.memory_space<vmem>>, vector<1x1x8x32xf32>
    %1108 = vector.shape_cast %1107 : vector<1x1x8x32xf32> to vector<8x32xf32>
    %1109 = arith.subf %1093, %1108 : vector<8x32xf32>
    %1110 = math.absf %1109 : vector<8x32xf32>
    %cst_327 = arith.constant 1.000000e+00 : f32
    %1111 = vector.broadcast %cst_327 : f32 to vector<8x32xf32>
    %1112 = arith.cmpf olt, %1110, %1111 : vector<8x32xf32>
    %cst_328 = arith.constant 5.000000e-01 : f32
    %1113 = vector.broadcast %cst_328 : f32 to vector<8x32xf32>
    %1114 = arith.mulf %1113, %1109 : vector<8x32xf32>
    %1115 = arith.mulf %1114, %1109 : vector<8x32xf32>
    %cst_329 = arith.constant 5.000000e-01 : f32
    %1116 = vector.broadcast %cst_329 : f32 to vector<8x32xf32>
    %1117 = arith.subf %1110, %1116 : vector<8x32xf32>
    %1118 = arith.select %1112, %1115, %1117 : vector<8x32xi1>, vector<8x32xf32>
    %1119 = arith.addf %1106, %1118 : vector<8x32xf32>
    %1120 = arith.subf %954, %13 : vector<8x32xf32>
    %1121 = arith.mulf %1120, %20 : vector<8x32xf32>
    %cst_330 = arith.constant 1.000000e+01 : f32
    %1122 = vector.broadcast %cst_330 : f32 to vector<8x32xf32>
    %1123 = arith.mulf %1121, %1122 : vector<8x32xf32>
    %1124 = arith.subf %956, %16 : vector<8x32xf32>
    %1125 = arith.mulf %1124, %24 : vector<8x32xf32>
    %cst_331 = arith.constant 1.000000e+01 : f32
    %1126 = vector.broadcast %cst_331 : f32 to vector<8x32xf32>
    %1127 = arith.mulf %1125, %1126 : vector<8x32xf32>
    %c0_332 = arith.constant 0 : index
    %c8 = arith.constant 8 : index
    %c0_333 = arith.constant 0 : index
    %c0_334 = arith.constant 0 : index
    %1128 = vector.load %arg4[%c0_332, %c8, %c0_333, %c0_334] : memref<1x16x8x32xf32, #tpu.memory_space<vmem>>, vector<1x1x8x32xf32>
    %1129 = vector.shape_cast %1128 : vector<1x1x8x32xf32> to vector<8x32xf32>
    %1130 = arith.subf %1123, %1129 : vector<8x32xf32>
    %1131 = math.absf %1130 : vector<8x32xf32>
    %cst_335 = arith.constant 1.000000e+00 : f32
    %1132 = vector.broadcast %cst_335 : f32 to vector<8x32xf32>
    %1133 = arith.cmpf olt, %1131, %1132 : vector<8x32xf32>
    %cst_336 = arith.constant 5.000000e-01 : f32
    %1134 = vector.broadcast %cst_336 : f32 to vector<8x32xf32>
    %1135 = arith.mulf %1134, %1130 : vector<8x32xf32>
    %1136 = arith.mulf %1135, %1130 : vector<8x32xf32>
    %cst_337 = arith.constant 5.000000e-01 : f32
    %1137 = vector.broadcast %cst_337 : f32 to vector<8x32xf32>
    %1138 = arith.subf %1131, %1137 : vector<8x32xf32>
    %1139 = arith.select %1133, %1136, %1138 : vector<8x32xi1>, vector<8x32xf32>
    %1140 = arith.addf %1119, %1139 : vector<8x32xf32>
    %c0_338 = arith.constant 0 : index
    %c9 = arith.constant 9 : index
    %c0_339 = arith.constant 0 : index
    %c0_340 = arith.constant 0 : index
    %1141 = vector.load %arg4[%c0_338, %c9, %c0_339, %c0_340] : memref<1x16x8x32xf32, #tpu.memory_space<vmem>>, vector<1x1x8x32xf32>
    %1142 = vector.shape_cast %1141 : vector<1x1x8x32xf32> to vector<8x32xf32>
    %1143 = arith.subf %1127, %1142 : vector<8x32xf32>
    %1144 = math.absf %1143 : vector<8x32xf32>
    %cst_341 = arith.constant 1.000000e+00 : f32
    %1145 = vector.broadcast %cst_341 : f32 to vector<8x32xf32>
    %1146 = arith.cmpf olt, %1144, %1145 : vector<8x32xf32>
    %cst_342 = arith.constant 5.000000e-01 : f32
    %1147 = vector.broadcast %cst_342 : f32 to vector<8x32xf32>
    %1148 = arith.mulf %1147, %1143 : vector<8x32xf32>
    %1149 = arith.mulf %1148, %1143 : vector<8x32xf32>
    %cst_343 = arith.constant 5.000000e-01 : f32
    %1150 = vector.broadcast %cst_343 : f32 to vector<8x32xf32>
    %1151 = arith.subf %1144, %1150 : vector<8x32xf32>
    %1152 = arith.select %1146, %1149, %1151 : vector<8x32xi1>, vector<8x32xf32>
    %1153 = arith.addf %1140, %1152 : vector<8x32xf32>
    %1154 = arith.subf %958, %13 : vector<8x32xf32>
    %1155 = arith.mulf %1154, %20 : vector<8x32xf32>
    %cst_344 = arith.constant 1.000000e+01 : f32
    %1156 = vector.broadcast %cst_344 : f32 to vector<8x32xf32>
    %1157 = arith.mulf %1155, %1156 : vector<8x32xf32>
    %1158 = arith.subf %960, %16 : vector<8x32xf32>
    %1159 = arith.mulf %1158, %24 : vector<8x32xf32>
    %cst_345 = arith.constant 1.000000e+01 : f32
    %1160 = vector.broadcast %cst_345 : f32 to vector<8x32xf32>
    %1161 = arith.mulf %1159, %1160 : vector<8x32xf32>
    %c0_346 = arith.constant 0 : index
    %c10 = arith.constant 10 : index
    %c0_347 = arith.constant 0 : index
    %c0_348 = arith.constant 0 : index
    %1162 = vector.load %arg4[%c0_346, %c10, %c0_347, %c0_348] : memref<1x16x8x32xf32, #tpu.memory_space<vmem>>, vector<1x1x8x32xf32>
    %1163 = vector.shape_cast %1162 : vector<1x1x8x32xf32> to vector<8x32xf32>
    %1164 = arith.subf %1157, %1163 : vector<8x32xf32>
    %1165 = math.absf %1164 : vector<8x32xf32>
    %cst_349 = arith.constant 1.000000e+00 : f32
    %1166 = vector.broadcast %cst_349 : f32 to vector<8x32xf32>
    %1167 = arith.cmpf olt, %1165, %1166 : vector<8x32xf32>
    %cst_350 = arith.constant 5.000000e-01 : f32
    %1168 = vector.broadcast %cst_350 : f32 to vector<8x32xf32>
    %1169 = arith.mulf %1168, %1164 : vector<8x32xf32>
    %1170 = arith.mulf %1169, %1164 : vector<8x32xf32>
    %cst_351 = arith.constant 5.000000e-01 : f32
    %1171 = vector.broadcast %cst_351 : f32 to vector<8x32xf32>
    %1172 = arith.subf %1165, %1171 : vector<8x32xf32>
    %1173 = arith.select %1167, %1170, %1172 : vector<8x32xi1>, vector<8x32xf32>
    %1174 = arith.addf %1153, %1173 : vector<8x32xf32>
    %c0_352 = arith.constant 0 : index
    %c11 = arith.constant 11 : index
    %c0_353 = arith.constant 0 : index
    %c0_354 = arith.constant 0 : index
    %1175 = vector.load %arg4[%c0_352, %c11, %c0_353, %c0_354] : memref<1x16x8x32xf32, #tpu.memory_space<vmem>>, vector<1x1x8x32xf32>
    %1176 = vector.shape_cast %1175 : vector<1x1x8x32xf32> to vector<8x32xf32>
    %1177 = arith.subf %1161, %1176 : vector<8x32xf32>
    %1178 = math.absf %1177 : vector<8x32xf32>
    %cst_355 = arith.constant 1.000000e+00 : f32
    %1179 = vector.broadcast %cst_355 : f32 to vector<8x32xf32>
    %1180 = arith.cmpf olt, %1178, %1179 : vector<8x32xf32>
    %cst_356 = arith.constant 5.000000e-01 : f32
    %1181 = vector.broadcast %cst_356 : f32 to vector<8x32xf32>
    %1182 = arith.mulf %1181, %1177 : vector<8x32xf32>
    %1183 = arith.mulf %1182, %1177 : vector<8x32xf32>
    %cst_357 = arith.constant 5.000000e-01 : f32
    %1184 = vector.broadcast %cst_357 : f32 to vector<8x32xf32>
    %1185 = arith.subf %1178, %1184 : vector<8x32xf32>
    %1186 = arith.select %1180, %1183, %1185 : vector<8x32xi1>, vector<8x32xf32>
    %1187 = arith.addf %1174, %1186 : vector<8x32xf32>
    %1188 = arith.subf %962, %13 : vector<8x32xf32>
    %1189 = arith.mulf %1188, %20 : vector<8x32xf32>
    %cst_358 = arith.constant 1.000000e+01 : f32
    %1190 = vector.broadcast %cst_358 : f32 to vector<8x32xf32>
    %1191 = arith.mulf %1189, %1190 : vector<8x32xf32>
    %1192 = arith.subf %964, %16 : vector<8x32xf32>
    %1193 = arith.mulf %1192, %24 : vector<8x32xf32>
    %cst_359 = arith.constant 1.000000e+01 : f32
    %1194 = vector.broadcast %cst_359 : f32 to vector<8x32xf32>
    %1195 = arith.mulf %1193, %1194 : vector<8x32xf32>
    %c0_360 = arith.constant 0 : index
    %c12 = arith.constant 12 : index
    %c0_361 = arith.constant 0 : index
    %c0_362 = arith.constant 0 : index
    %1196 = vector.load %arg4[%c0_360, %c12, %c0_361, %c0_362] : memref<1x16x8x32xf32, #tpu.memory_space<vmem>>, vector<1x1x8x32xf32>
    %1197 = vector.shape_cast %1196 : vector<1x1x8x32xf32> to vector<8x32xf32>
    %1198 = arith.subf %1191, %1197 : vector<8x32xf32>
    %1199 = math.absf %1198 : vector<8x32xf32>
    %cst_363 = arith.constant 1.000000e+00 : f32
    %1200 = vector.broadcast %cst_363 : f32 to vector<8x32xf32>
    %1201 = arith.cmpf olt, %1199, %1200 : vector<8x32xf32>
    %cst_364 = arith.constant 5.000000e-01 : f32
    %1202 = vector.broadcast %cst_364 : f32 to vector<8x32xf32>
    %1203 = arith.mulf %1202, %1198 : vector<8x32xf32>
    %1204 = arith.mulf %1203, %1198 : vector<8x32xf32>
    %cst_365 = arith.constant 5.000000e-01 : f32
    %1205 = vector.broadcast %cst_365 : f32 to vector<8x32xf32>
    %1206 = arith.subf %1199, %1205 : vector<8x32xf32>
    %1207 = arith.select %1201, %1204, %1206 : vector<8x32xi1>, vector<8x32xf32>
    %1208 = arith.addf %1187, %1207 : vector<8x32xf32>
    %c0_366 = arith.constant 0 : index
    %c13 = arith.constant 13 : index
    %c0_367 = arith.constant 0 : index
    %c0_368 = arith.constant 0 : index
    %1209 = vector.load %arg4[%c0_366, %c13, %c0_367, %c0_368] : memref<1x16x8x32xf32, #tpu.memory_space<vmem>>, vector<1x1x8x32xf32>
    %1210 = vector.shape_cast %1209 : vector<1x1x8x32xf32> to vector<8x32xf32>
    %1211 = arith.subf %1195, %1210 : vector<8x32xf32>
    %1212 = math.absf %1211 : vector<8x32xf32>
    %cst_369 = arith.constant 1.000000e+00 : f32
    %1213 = vector.broadcast %cst_369 : f32 to vector<8x32xf32>
    %1214 = arith.cmpf olt, %1212, %1213 : vector<8x32xf32>
    %cst_370 = arith.constant 5.000000e-01 : f32
    %1215 = vector.broadcast %cst_370 : f32 to vector<8x32xf32>
    %1216 = arith.mulf %1215, %1211 : vector<8x32xf32>
    %1217 = arith.mulf %1216, %1211 : vector<8x32xf32>
    %cst_371 = arith.constant 5.000000e-01 : f32
    %1218 = vector.broadcast %cst_371 : f32 to vector<8x32xf32>
    %1219 = arith.subf %1212, %1218 : vector<8x32xf32>
    %1220 = arith.select %1214, %1217, %1219 : vector<8x32xi1>, vector<8x32xf32>
    %1221 = arith.addf %1208, %1220 : vector<8x32xf32>
    %1222 = arith.subf %966, %13 : vector<8x32xf32>
    %1223 = arith.mulf %1222, %20 : vector<8x32xf32>
    %cst_372 = arith.constant 1.000000e+01 : f32
    %1224 = vector.broadcast %cst_372 : f32 to vector<8x32xf32>
    %1225 = arith.mulf %1223, %1224 : vector<8x32xf32>
    %1226 = arith.subf %968, %16 : vector<8x32xf32>
    %1227 = arith.mulf %1226, %24 : vector<8x32xf32>
    %cst_373 = arith.constant 1.000000e+01 : f32
    %1228 = vector.broadcast %cst_373 : f32 to vector<8x32xf32>
    %1229 = arith.mulf %1227, %1228 : vector<8x32xf32>
    %c0_374 = arith.constant 0 : index
    %c14 = arith.constant 14 : index
    %c0_375 = arith.constant 0 : index
    %c0_376 = arith.constant 0 : index
    %1230 = vector.load %arg4[%c0_374, %c14, %c0_375, %c0_376] : memref<1x16x8x32xf32, #tpu.memory_space<vmem>>, vector<1x1x8x32xf32>
    %1231 = vector.shape_cast %1230 : vector<1x1x8x32xf32> to vector<8x32xf32>
    %1232 = arith.subf %1225, %1231 : vector<8x32xf32>
    %1233 = math.absf %1232 : vector<8x32xf32>
    %cst_377 = arith.constant 1.000000e+00 : f32
    %1234 = vector.broadcast %cst_377 : f32 to vector<8x32xf32>
    %1235 = arith.cmpf olt, %1233, %1234 : vector<8x32xf32>
    %cst_378 = arith.constant 5.000000e-01 : f32
    %1236 = vector.broadcast %cst_378 : f32 to vector<8x32xf32>
    %1237 = arith.mulf %1236, %1232 : vector<8x32xf32>
    %1238 = arith.mulf %1237, %1232 : vector<8x32xf32>
    %cst_379 = arith.constant 5.000000e-01 : f32
    %1239 = vector.broadcast %cst_379 : f32 to vector<8x32xf32>
    %1240 = arith.subf %1233, %1239 : vector<8x32xf32>
    %1241 = arith.select %1235, %1238, %1240 : vector<8x32xi1>, vector<8x32xf32>
    %1242 = arith.addf %1221, %1241 : vector<8x32xf32>
    %c0_380 = arith.constant 0 : index
    %c15 = arith.constant 15 : index
    %c0_381 = arith.constant 0 : index
    %c0_382 = arith.constant 0 : index
    %1243 = vector.load %arg4[%c0_380, %c15, %c0_381, %c0_382] : memref<1x16x8x32xf32, #tpu.memory_space<vmem>>, vector<1x1x8x32xf32>
    %1244 = vector.shape_cast %1243 : vector<1x1x8x32xf32> to vector<8x32xf32>
    %1245 = arith.subf %1229, %1244 : vector<8x32xf32>
    %1246 = math.absf %1245 : vector<8x32xf32>
    %cst_383 = arith.constant 1.000000e+00 : f32
    %1247 = vector.broadcast %cst_383 : f32 to vector<8x32xf32>
    %1248 = arith.cmpf olt, %1246, %1247 : vector<8x32xf32>
    %cst_384 = arith.constant 5.000000e-01 : f32
    %1249 = vector.broadcast %cst_384 : f32 to vector<8x32xf32>
    %1250 = arith.mulf %1249, %1245 : vector<8x32xf32>
    %1251 = arith.mulf %1250, %1245 : vector<8x32xf32>
    %cst_385 = arith.constant 5.000000e-01 : f32
    %1252 = vector.broadcast %cst_385 : f32 to vector<8x32xf32>
    %1253 = arith.subf %1246, %1252 : vector<8x32xf32>
    %1254 = arith.select %1248, %1251, %1253 : vector<8x32xi1>, vector<8x32xf32>
    %1255 = arith.addf %1242, %1254 : vector<8x32xf32>
    %cst_386 = arith.constant 0.000000e+00 : f32
    %1256 = vector.broadcast %cst_386 : f32 to vector<1x32xf32>
    %1257 = arith.extui %970 : vector<8x32xi1> to vector<8x32xi32>
    %1258 = arith.sitofp %1257 : vector<8x32xi32> to vector<8x32xf32>
    %cst_387 = arith.constant dense<0.000000e+00> : vector<32xf32>
    %1259 = vector.multi_reduction <add>, %1258, %cst_387 [0] : vector<8x32xf32> to vector<32xf32>
    %1260 = vector.shape_cast %1259 : vector<32xf32> to vector<1x32xf32>
    %1261 = arith.extui %972 : vector<8x32xi1> to vector<8x32xi32>
    %1262 = arith.sitofp %1261 : vector<8x32xi32> to vector<8x32xf32>
    %cst_388 = arith.constant dense<0.000000e+00> : vector<32xf32>
    %1263 = vector.multi_reduction <add>, %1262, %cst_388 [0] : vector<8x32xf32> to vector<32xf32>
    %1264 = vector.shape_cast %1263 : vector<32xf32> to vector<1x32xf32>
    %cst_389 = arith.constant 0.000000e+00 : f32
    %1265 = vector.broadcast %cst_389 : f32 to vector<8x32xf32>
    %1266 = arith.select %970, %987, %1265 : vector<8x32xi1>, vector<8x32xf32>
    %cst_390 = arith.constant dense<0.000000e+00> : vector<32xf32>
    %1267 = vector.multi_reduction <add>, %1266, %cst_390 [0] : vector<8x32xf32> to vector<32xf32>
    %1268 = vector.shape_cast %1267 : vector<32xf32> to vector<1x32xf32>
    %cst_391 = arith.constant 0.000000e+00 : f32
    %1269 = vector.broadcast %cst_391 : f32 to vector<8x32xf32>
    %1270 = arith.select %970, %1072, %1269 : vector<8x32xi1>, vector<8x32xf32>
    %cst_392 = arith.constant dense<0.000000e+00> : vector<32xf32>
    %1271 = vector.multi_reduction <add>, %1270, %cst_392 [0] : vector<8x32xf32> to vector<32xf32>
    %1272 = vector.shape_cast %1271 : vector<32xf32> to vector<1x32xf32>
    %1273 = arith.extui %1084 : vector<8x32xi1> to vector<8x32xi32>
    %1274 = arith.sitofp %1273 : vector<8x32xi32> to vector<8x32xf32>
    %cst_393 = arith.constant dense<0.000000e+00> : vector<32xf32>
    %1275 = vector.multi_reduction <add>, %1274, %cst_393 [0] : vector<8x32xf32> to vector<32xf32>
    %1276 = vector.shape_cast %1275 : vector<32xf32> to vector<1x32xf32>
    %cst_394 = arith.constant 0.000000e+00 : f32
    %1277 = vector.broadcast %cst_394 : f32 to vector<8x32xf32>
    %1278 = arith.select %1084, %1255, %1277 : vector<8x32xi1>, vector<8x32xf32>
    %cst_395 = arith.constant dense<0.000000e+00> : vector<32xf32>
    %1279 = vector.multi_reduction <add>, %1278, %cst_395 [0] : vector<8x32xf32> to vector<32xf32>
    %1280 = vector.shape_cast %1279 : vector<32xf32> to vector<1x32xf32>
    %1281 = tpu.concatenate %1260, %1264, %1268, %1272, %1276, %1280, %1256, %1256 in 0 : vector<1x32xf32>, vector<1x32xf32>, vector<1x32xf32>, vector<1x32xf32>, vector<1x32xf32>, vector<1x32xf32>, vector<1x32xf32>, vector<1x32xf32> -> vector<8x32xf32>
    %cst_396 = arith.constant dense<0.000000e+00> : vector<8xf32>
    %1282 = vector.multi_reduction <add>, %1281, %cst_396 [1] : vector<8x32xf32> to vector<8xf32>
    %1283 = vector.shape_cast %1282 : vector<8xf32> to vector<8x1xf32>
    %c0_397 = arith.constant 0 : index
    %c0_398 = arith.constant 0 : index
    %c0_399 = arith.constant 0 : index
    %c0_400 = arith.constant 0 : index
    %1284 = vector.load %arg6[%c0_397, %c0_398, %c0_399, %c0_400] : memref<1x1x8x1xf32, #tpu.memory_space<vmem>>, vector<1x1x8x1xf32>
    %1285 = vector.shape_cast %1284 : vector<1x1x8x1xf32> to vector<8x1xf32>
    %1286 = vector.shape_cast %1283 : vector<8x1xf32> to vector<1x1x8x1xf32>
    tpu.vector_store %arg6[%c0_397, %c0_398, %c0_399, %c0_400], %1286 {strides = array<i32>} : memref<1x1x8x1xf32, #tpu.memory_space<vmem>>, vector<1x1x8x1xf32>,
    return
  }
  func.func @transform_0(%arg0: i32, %arg1: i32, %arg2: memref<224xf32, #tpu.memory_space<smem>>) -> (i32, i32, i32) {
    %c0_i32 = arith.constant 0 : i32
    %c0_i32_0 = arith.constant 0 : i32
    %c0_i32_1 = arith.constant 0 : i32
    return %c0_i32, %c0_i32_0, %arg1 : i32, i32, i32
  }
  func.func @transform_1(%arg0: i32, %arg1: i32, %arg2: memref<224xf32, #tpu.memory_space<smem>>) -> (i32, i32, i32, i32) {
    %c0_i32 = arith.constant 0 : i32
    %c0_i32_0 = arith.constant 0 : i32
    %c0_i32_1 = arith.constant 0 : i32
    return %arg0, %c0_i32, %c0_i32_0, %arg1 : i32, i32, i32, i32
  }
  func.func @transform_2(%arg0: i32, %arg1: i32, %arg2: memref<224xf32, #tpu.memory_space<smem>>) -> (i32, i32, i32) {
    %c0_i32 = arith.constant 0 : i32
    %c0_i32_0 = arith.constant 0 : i32
    return %arg0, %c0_i32, %arg1 : i32, i32, i32
  }
  func.func @transform_3(%arg0: i32, %arg1: i32, %arg2: memref<224xf32, #tpu.memory_space<smem>>) -> (i32, i32, i32, i32) {
    %c0_i32 = arith.constant 0 : i32
    %c0_i32_0 = arith.constant 0 : i32
    %c0_i32_1 = arith.constant 0 : i32
    return %arg0, %arg1, %c0_i32, %c0_i32_0 : i32, i32, i32, i32
  }
}

</mosaic_0001>

<llo_original>
// kernel: tpu_custom_call.1
$region0: #{tpu_custom_call.1}
  #allocation0 [shape = 'u32[]', space=smem, size = 0x4, offset = 0x4, fixed_abs, tag = 'smem constant byte address 0x4 - core index']
  #allocation1 [shape = 'u32[144,128]{1,0:T(1,128)}', space=vmem, size = 0x12000, scoped, tag = 'internal scratch']
  #allocation2 [shape = 's32[1]{0}', space=sflag, size = 0x4, scoped, tag = 'scoped memory for tpu_custom_call.1']
  #allocation3 [shape = 'u8[1024]{0}', space=smem, size = 0x400, scoped, tag = 'prefetched SMEM operand 0']
  %s0 = inlined_call_operand.hbm [shape: f32[224], index: 0, kind: input, shape index: {}]
  %s1 = inlined_call_operand.hbm [shape: f32[4,8,32], index: 1, kind: input, shape index: {}]
  %s2 = inlined_call_operand.hbm [shape: f32[2,16,8,32], index: 2, kind: input, shape index: {}]
  %s3 = inlined_call_operand.hbm [shape: f32[2,8,32], index: 3, kind: output, shape index: {0}]
  %s4 = inlined_call_operand.vmem [shape: f32[2,1,8,1], index: 4, kind: output, shape index: {1}]
  %5 = xla_tuple %s3, %s4
  %s6 = sld [smem:[#allocation0]]
  $region57: #{tpu_custom_call.1} parent=0
    _
  %s8 = ssub.s32 1, %s6
  %s9 = scalar_select 0, %s8, %s6
  %11 = dma.hbm_to_smem %s0, 32, [#allocation3], [#allocation2]
  %12 = dma.done [#allocation2], 32
  %13 = sfence
  $region1: #{tpu_custom_call.1} parent=0
    #allocation4 [shape = 'u8[16384]{0}', space=vmem, size = 0x4000, scoped, tag = 'input window, operand 1, single buffered']
    #allocation5 [shape = 's32[2]{0}', space=sflag, size = 0x8, scoped, tag = 'scoped memory for tpu_custom_call.1']
    #allocation6 [shape = 's32[2]{0}', space=sflag, size = 0x8, scoped, tag = 'scoped memory for tpu_custom_call.1']
    #allocation7 [shape = 'u8[131072]{0}', space=vmem, size = 0x20000, scoped, tag = 'input window, operand 2']
    #allocation8 [shape = 's32[2]{0}', space=sflag, size = 0x8, scoped, tag = 'scoped memory for tpu_custom_call.1']
    #allocation9 [shape = 'u8[8192]{0}', space=vmem, size = 0x2000, scoped, tag = 'output window, operand 0']
    %14 = vsyncpa [#allocation5], 0
    %15 = vsyncpa [#allocation8], 0
    %s16 = scalar_lea.sflag [#allocation8], 1
    %17 = vsyncpa %s16, 0
    %18 = vsyncpa [#allocation6], 0
    %s19 = scalar_lea.sflag [#allocation6], 1
    %20 = vsyncpa %s19, 0
    loop: start=0, step=1, limit=4
    $region2: #{tpu_custom_call.1} parent=1 // loop_pre_header
      _
    $region3: #{tpu_custom_call.1} parent=1 // loop_header
      %s22 = sphi 0, %s26
      %p23 = scmp.ge.s32.totalorder %s22, 4
      %s29 = sphi 0, %s41
      %s30 = sphi 0, %s37
      %s31 = sphi 0, %s29
      %s32 = sphi 0, %s30
      %s33 = sphi 0, %s31
      %s34 = sphi 0, %s32
      %s44 = sphi 0, %s46
      %s47 = sphi 0, %s44
      %s48 = sphi 0, %s47
      %s64 = sphi 0, %s48
      %s72 = sphi 0, %s74
      %s75 = sphi 0, %s72
      %s76 = sphi 0, %s75
      %s92 = sphi 0, %s76
      %s100 = sphi 0, %s102
      %s103 = sphi 0, %s100
      %s104 = sphi 0, %s103
      %s120 = sphi 0, %s104
      %s128 = sphi 0, %s130
      %s131 = sphi 0, %s128
      %s132 = sphi 0, %s131
      %s148 = sphi 0, %s132
    $region4: #{tpu_custom_call.1} parent=1 // loop_header_branch
      %25 = sbr.rel (%p23) target = $region8
    $region5: #{tpu_custom_call.1} parent=1 // loop_body
      %s27 = ssub.s32 %s22, 1
      %s28 = ssub.s32 %s22, 2
      %s35 = sadd.s32 1, %s30
      %p36 = scmp.ge.s32.totalorder %s35, 1
      %s37 = scalar_select %p36, 0, %s35
      %s38 = sadd.s32 1, %s29
      %s39 = scalar_select %p36, %s38, %s29
      %p40 = scmp.ge.s32.totalorder %s39, 2
      %s41 = scalar_select %p40, 0, %s39
      %s42 = ssub.s32 %s30, %s37
      %p43 = scmp.eq.s32.totalorder %s42, 0
      %s45 = sadd.s32 %s44, 1
      %s46 = scalar_select %p43, %s44, %s45
      %p49 = pneg %p43
      %p50 = scmp.eq.s32.totalorder %s22, 1
      %p51 = por %p49, %p50
      %p52 = scmp.ne.s32.totalorder %s44, %s47
      %p53 = scmp.eq.s32.totalorder %s22, 0
      %p54 = por %p52, %p53
      %p55 = scmp.ne.s32.totalorder %s44, %s47
      %p56 = scmp.eq.s32.totalorder %s27, 1
      %p57 = por %p55, %p56
      %p58 = scmp.ne.s32.totalorder %s47, %s48
      %p59 = scmp.eq.s32.totalorder %s27, 0
      %p60 = por %p58, %p59
      %p61 = scmp.ne.s32.totalorder %s47, %s48
      %p62 = scmp.eq.s32.totalorder %s28, 1
      %p63 = por %p61, %p62
      %p65 = scmp.ne.s32.totalorder %s48, %s64
      %p66 = scmp.eq.s32.totalorder %s28, 0
      %p67 = por %p65, %p66
      %s68 = ssub.s32 %s29, %s41
      %s69 = ssub.s32 %s30, %s37
      %s70 = sor.u32 %s68, %s69
      %p71 = scmp.eq.s32.totalorder %s70, 0
      %s73 = sadd.s32 %s72, 1
      %s74 = scalar_select %p71, %s72, %s73
      %p77 = pneg %p71
      %p78 = scmp.eq.s32.totalorder %s22, 1
      %p79 = por %p77, %p78
      %p80 = scmp.ne.s32.totalorder %s72, %s75
      %p81 = scmp.eq.s32.totalorder %s22, 0
      %p82 = por %p80, %p81
      %p83 = scmp.ne.s32.totalorder %s72, %s75
      %p84 = scmp.eq.s32.totalorder %s27, 1
      %p85 = por %p83, %p84
      %p86 = scmp.ne.s32.totalorder %s75, %s76
      %p87 = scmp.eq.s32.totalorder %s27, 0
      %p88 = por %p86, %p87
      %p89 = scmp.ne.s32.totalorder %s75, %s76
      %p90 = scmp.eq.s32.totalorder %s28, 1
      %p91 = por %p89, %p90
      %p93 = scmp.ne.s32.totalorder %s76, %s92
      %p94 = scmp.eq.s32.totalorder %s28, 0
      %p95 = por %p93, %p94
      %s96 = ssub.s32 %s29, %s41
      %s97 = ssub.s32 %s30, %s37
      %s98 = sor.u32 %s96, %s97
      %p99 = scmp.eq.s32.totalorder %s98, 0
      %s101 = sadd.s32 %s100, 1
      %s102 = scalar_select %p99, %s100, %s101
      %p105 = pneg %p99
      %p106 = scmp.eq.s32.totalorder %s22, 1
      %p107 = por %p105, %p106
      %p108 = scmp.ne.s32.totalorder %s100, %s103
      %p109 = scmp.eq.s32.totalorder %s22, 0
      %p110 = por %p108, %p109
      %p111 = scmp.ne.s32.totalorder %s100, %s103
      %p112 = scmp.eq.s32.totalorder %s27, 1
      %p113 = por %p111, %p112
      %p114 = scmp.ne.s32.totalorder %s103, %s104
      %p115 = scmp.eq.s32.totalorder %s27, 0
      %p116 = por %p114, %p115
      %p117 = scmp.ne.s32.totalorder %s103, %s104
      %p118 = scmp.eq.s32.totalorder %s28, 1
      %p119 = por %p117, %p118
      %p121 = scmp.ne.s32.totalorder %s104, %s120
      %p122 = scmp.eq.s32.totalorder %s28, 0
      %p123 = por %p121, %p122
      %s124 = ssub.s32 %s29, %s41
      %s125 = ssub.s32 %s30, %s37
      %s126 = sor.u32 %s124, %s125
      %p127 = scmp.eq.s32.totalorder %s126, 0
      %s129 = sadd.s32 %s128, 1
      %s130 = scalar_select %p127, %s128, %s129
      %p133 = pneg %p127
      %p134 = scmp.eq.s32.totalorder %s22, 1
      %p135 = por %p133, %p134
      %p136 = scmp.ne.s32.totalorder %s128, %s131
      %p137 = scmp.eq.s32.totalorder %s22, 0
      %p138 = por %p136, %p137
      %p139 = scmp.ne.s32.totalorder %s128, %s131
      %p140 = scmp.eq.s32.totalorder %s27, 1
      %p141 = por %p139, %p140
      %p142 = scmp.ne.s32.totalorder %s131, %s132
      %p143 = scmp.eq.s32.totalorder %s27, 0
      %p144 = por %p142, %p143
      %p145 = scmp.ne.s32.totalorder %s131, %s132
      %p146 = scmp.eq.s32.totalorder %s28, 1
      %p147 = por %p145, %p146
      %p149 = scmp.ne.s32.totalorder %s132, %s148
      %p150 = scmp.eq.s32.totalorder %s28, 0
      %p151 = por %p149, %p150
      %p152 = scmp.le.s32.totalorder 1, %s22
      %p153 = scmp.lt.s32.totalorder %s22, 3
      %p154 = pnand %p152, %p153
      %p155 = pneg %p154
      // Predicated region
      $region9: #{tpu_custom_call.1} parent=5 // pred_check
        _
      $region10: #{tpu_custom_call.1} parent=5 // pred_check_branch
        %157 = sbr.rel (%p154) target = $region12
      $region11: #{tpu_custom_call.1} parent=5 // pred_region
        %s158 = ssub.s32 %s22, 1
        // Predicated region
        $region13: #{tpu_custom_call.1} parent=11 // pred_check
          %p159 = pneg %p60
        $region14: #{tpu_custom_call.1} parent=11 // pred_check_branch
          %161 = sbr.rel (%p159) target = $region16
        $region15: #{tpu_custom_call.1} parent=11 // pred_region
          %s163 = ssub.s32 512, 512
          %164 = vsyncadd [#allocation5], %s163
          %s165 = smul.addr %s32, 128
          %s166 = scalar_lea.hbm %s1, %s165
          %s167 = sshll.u32 [#allocation4], 4
          %s168 = int_to_ptr.vmem [resolvable:$true] %s167
          %173 = dma.hbm_to_vmem [thread:$0]  %s166, 512, %s168, [#allocation5], 128, 128, 8
        $region16: #{tpu_custom_call.1} parent=11 // pred_fallthru
          _
      $region12: #{tpu_custom_call.1} parent=5 // pred_fallthru
        _
      %p174 = scmp.lt.s32.totalorder %s22, 2
      // Predicated region
      $region17: #{tpu_custom_call.1} parent=5 // pred_check
        %p175 = pneg %p174
      $region18: #{tpu_custom_call.1} parent=5 // pred_check_branch
        %177 = sbr.rel (%p175) target = $region20
      $region19: #{tpu_custom_call.1} parent=5 // pred_region
        // Predicated region
        $region21: #{tpu_custom_call.1} parent=19 // pred_check
          %p178 = pneg %p82
        $region22: #{tpu_custom_call.1} parent=19 // pred_check_branch
          %180 = sbr.rel (%p178) target = $region24
        $region23: #{tpu_custom_call.1} parent=19 // pred_region
          %s181 = sand.u32 %s72, 1
          %s182 = scalar_lea.sflag [#allocation8], %s181
          %s183 = sand.u32 %s72, 1
          %s184 = smul.addr %s183, 128
          %s185 = scalar_lea.vmem [#allocation7], %s184
          %s187 = ssub.s32 2048, 2048
          %188 = vsyncadd %s182, %s187
          %s189 = smul.addr %s29, 16
          %s190 = sadd.s32 %s30, %s189
          %s191 = smul.addr %s190, 128
          %s192 = scalar_lea.hbm %s2, %s191
          %s193 = sshll.u32 %s185, 4
          %s194 = int_to_ptr.vmem [resolvable:$true] %s193
          %199 = dma.hbm_to_vmem [thread:$0]  %s192, 2048, %s194, %s182, 128, 128, 8
        $region24: #{tpu_custom_call.1} parent=19 // pred_fallthru
          _
      $region20: #{tpu_custom_call.1} parent=5 // pred_fallthru
        _
      %p200 = scmp.le.s32.totalorder 1, %s22
      %p201 = scmp.lt.s32.totalorder %s22, 3
      %p202 = pnand %p200, %p201
      %p203 = pneg %p202
      // Predicated region
      $region25: #{tpu_custom_call.1} parent=5 // pred_check
        _
      $region26: #{tpu_custom_call.1} parent=5 // pred_check_branch
        %205 = sbr.rel (%p202) target = $region28
      $region27: #{tpu_custom_call.1} parent=5 // pred_region
        %s206 = ssub.s32 %s22, 1
        // Predicated region
        $region29: #{tpu_custom_call.1} parent=27 // pred_check
          %p207 = pneg %p60
        $region30: #{tpu_custom_call.1} parent=27 // pred_check_branch
          %209 = sbr.rel (%p207) target = $region32
        $region31: #{tpu_custom_call.1} parent=27 // pred_region
          %210 = dma.done [#allocation5], 512
        $region32: #{tpu_custom_call.1} parent=27 // pred_fallthru
          _
        %s211 = sand.u32 %s75, 1
        %s212 = scalar_lea.sflag [#allocation8], %s211
        %s213 = sand.u32 %s75, 1
        %s214 = smul.addr %s213, 128
        %s215 = scalar_lea.vmem [#allocation7], %s214
        // Predicated region
        $region33: #{tpu_custom_call.1} parent=27 // pred_check
          %p216 = pneg %p88
        $region34: #{tpu_custom_call.1} parent=27 // pred_check_branch
          %218 = sbr.rel (%p216) target = $region36
        $region35: #{tpu_custom_call.1} parent=27 // pred_region
          %219 = dma.done %s212, 2048
        $region36: #{tpu_custom_call.1} parent=27 // pred_fallthru
          _
        %p220 = pneg %p60
        %p221 = pneg %p57
        %s222 = sand.u32 %s75, 1
        %s223 = scalar_lea.sflag [#allocation8], %s222
        %s224 = sand.u32 %s75, 1
        %s225 = smul.addr %s224, 128
        %s226 = scalar_lea.vmem [#allocation7], %s225
        %p227 = pneg %p88
        %p228 = pneg %p85
        %p229 = pneg %p116
        %p230 = pneg %p113
        %s231 = sand.u32 %s103, 1
        %s232 = scalar_lea.sflag [#allocation6], %s231
        %s233 = sand.u32 %s103, 1
        %s234 = smul.addr %s233, 8
        %s235 = scalar_lea.vmem [#allocation9], %s234
        %p236 = pneg %p144
        %p237 = pneg %p141
        %p238 = scmp.lt.s32.totalorder %s31, 1
        %s239 = scalar_select %p238, %s31, 1
        %p240 = scmp.lt.s32.totalorder %s32, 0
        %s241 = scalar_select %p240, %s32, 0
        %s242 = sadd.s32 %s241, %s239
        %s243 = smul.addr %s242, 8
        %s244 = scalar_lea.vmem %s4, %s243
        %p245 = scmp.lt.s32.totalorder %s31, 1
        %s246 = scalar_select %p245, %s31, 1
        %p247 = scmp.lt.s32.totalorder %s32, 0
        %s248 = scalar_select %p247, %s32, 0
        %s249 = sadd.s32 %s248, %s246
        %s250 = smul.addr %s249, 8
        %s251 = scalar_lea.vmem %s4, %s250
        %s252 = smul.u32 %s31, 112
        %v253 = vld [vmem:[#allocation4] sm:$0xff]
        %s254 = scalar_lea.vmem [#allocation4], 8
        %v255 = vld [vmem:[%s254] sm:$0xff]
        %s256 = scalar_lea.vmem [#allocation4], 16
        %v257 = vld [vmem:[%s256] sm:$0xff]
        %s258 = scalar_lea.vmem [#allocation4], 24
        %v259 = vld [vmem:[%s258] sm:$0xff]
        %v260 = vsub.f32 %v257, %v253
        %v261 = vsub.f32 %v259, %v255
        %v262 = vmul.f32 %v260, 0.5
        %v263 = vadd.f32 %v253, %v262
        %v264 = vmul.f32 %v261, 0.5
        %v265 = vadd.f32 %v255, %v264
        %v266 = vadd.f32 %v260, 1e-14
        %v267 = vrcp.pop %v266
        %v268 = vmul.f32 1.0, %v267
        %v269 = vadd.f32 %v261, 1e-14
        %v270 = vrcp.pop %v269
        %v271 = vmul.f32 1.0, %v270
        %v272 = vmul.f32 %v260, %v261
        %s273 = sld [smem:[#allocation3 + %s252]]
        %s274 = sadd.s32 %s252, 1
        %s275 = sld [smem:[#allocation3 + %s274]]
        %s276 = sadd.s32 %s252, 2
        %s277 = sld [smem:[#allocation3 + %s276]]
        %s278 = sadd.s32 %s252, 3
        %s279 = sld [smem:[#allocation3 + %s278]]
        %s280 = sadd.s32 %s252, 4
        %s281 = sld [smem:[#allocation3 + %s280]]
        %s282 = sadd.s32 %s252, 5
        %s283 = sld [smem:[#allocation3 + %s282]]
        %s284 = sadd.s32 %s252, 6
        %s285 = sld [smem:[#allocation3 + %s284]]
        %s286 = sadd.s32 %s252, 7
        %s287 = sld [smem:[#allocation3 + %s286]]
        %s288 = sadd.s32 %s252, 8
        %s289 = sld [smem:[#allocation3 + %s288]]
        %s290 = sadd.s32 %s252, 9
        %s291 = sld [smem:[#allocation3 + %s290]]
        %s292 = sadd.s32 %s252, 10
        %s293 = sld [smem:[#allocation3 + %s292]]
        %s294 = sadd.s32 %s252, 11
        %s295 = sld [smem:[#allocation3 + %s294]]
        %s296 = sadd.s32 %s252, 12
        %s297 = sld [smem:[#allocation3 + %s296]]
        %s298 = sadd.s32 %s252, 13
        %s299 = sld [smem:[#allocation3 + %s298]]
        %p300 = scmp.gt.f32.partialorder %s273, 0.0
        %s301 = scalar_select %p300, 1, 0
        %s302 = scvt.s32.f32 %s301
        %s303 = ssub.f32 %s277, %s273
        %s304 = ssub.f32 %s279, %s275
        %s305 = smul.f32 %s303, %s304
        %v306 = vstv %s277
        %v307 = vmin.f32 %v257, %v306
        %v308 = vstv %s273
        %v309 = vmax.f32 %v253, %v308
        %v310 = vsub.f32 %v307, %v309
        %v311 = vmax.f32 %v310, 0.0
        %v312 = vstv %s279
        %v313 = vmin.f32 %v259, %v312
        %v314 = vstv %s275
        %v315 = vmax.f32 %v255, %v314
        %v316 = vsub.f32 %v313, %v315
        %v317 = vmax.f32 %v316, 0.0
        %v318 = vmul.f32 %v311, %v317
        %v319 = vstv %s305
        %v320 = vadd.f32 %v272, %v319
        %v321 = vsub.f32 %v320, %v318
        %v322 = vrcp.pop %v321
        %v323 = vmul.f32 %v318, %v322
        %v324 = vstv %s302
        %v325 = vmul.f32 %v323, %v324
        %s326 = ssub.f32 %s302, 1.0
        %v327 = vstv %s326
        %v328 = vadd.f32 %v325, %v327
        %vm329 = vcmp.gt.f32.partialorder %v328, -2.0
        %v330 = vsel %vm329, %v328, -2.0
        %v331 = vsel %vm329, %v308, 0.0
        %v332 = vsel %vm329, %v314, 0.0
        %v333 = vsel %vm329, %v306, 0.0
        %v334 = vsel %vm329, %v312, 0.0
        %v335 = vstv %s281
        %v336 = vsel %vm329, %v335, 0.0
        %v337 = vstv %s283
        %v338 = vsel %vm329, %v337, 0.0
        %v339 = vstv %s285
        %v340 = vsel %vm329, %v339, 0.0
        %v341 = vstv %s287
        %v342 = vsel %vm329, %v341, 0.0
        %v343 = vstv %s289
        %v344 = vsel %vm329, %v343, 0.0
        %v345 = vstv %s291
        %v346 = vsel %vm329, %v345, 0.0
        %v347 = vstv %s293
        %v348 = vsel %vm329, %v347, 0.0
        %v349 = vstv %s295
        %v350 = vsel %vm329, %v349, 0.0
        %v351 = vstv %s297
        %v352 = vsel %vm329, %v351, 0.0
        %v353 = vstv %s299
        %v354 = vsel %vm329, %v353, 0.0
        %s355 = sadd.s32 %s252, 14
        %s356 = sld [smem:[#allocation3 + %s355]]
        %s357 = sadd.s32 %s252, 15
        %s358 = sld [smem:[#allocation3 + %s357]]
        %s359 = sadd.s32 %s252, 16
        %s360 = sld [smem:[#allocation3 + %s359]]
        %s361 = sadd.s32 %s252, 17
        %s362 = sld [smem:[#allocation3 + %s361]]
        %s363 = sadd.s32 %s252, 18
        %s364 = sld [smem:[#allocation3 + %s363]]
        %s365 = sadd.s32 %s252, 19
        %s366 = sld [smem:[#allocation3 + %s365]]
        %s367 = sadd.s32 %s252, 20
        %s368 = sld [smem:[#allocation3 + %s367]]
        %s369 = sadd.s32 %s252, 21
        %s370 = sld [smem:[#allocation3 + %s369]]
        %s371 = sadd.s32 %s252, 22
        %s372 = sld [smem:[#allocation3 + %s371]]
        %s373 = sadd.s32 %s252, 23
        %s374 = sld [smem:[#allocation3 + %s373]]
        %s375 = sadd.s32 %s252, 24
        %s376 = sld [smem:[#allocation3 + %s375]]
        %s377 = sadd.s32 %s252, 25
        %s378 = sld [smem:[#allocation3 + %s377]]
        %s379 = sadd.s32 %s252, 26
        %s380 = sld [smem:[#allocation3 + %s379]]
        %s381 = sadd.s32 %s252, 27
        %s382 = sld [smem:[#allocation3 + %s381]]
        %p383 = scmp.gt.f32.partialorder %s356, 0.0
        %s384 = scalar_select %p383, 1, 0
        %s385 = scvt.s32.f32 %s384
        %s386 = ssub.f32 %s360, %s356
        %s387 = ssub.f32 %s362, %s358
        %s388 = smul.f32 %s386, %s387
        %v389 = vstv %s360
        %v390 = vmin.f32 %v257, %v389
        %v391 = vstv %s356
        %v392 = vmax.f32 %v253, %v391
        %v393 = vsub.f32 %v390, %v392
        %v394 = vmax.f32 %v393, 0.0
        %v395 = vstv %s362
        %v396 = vmin.f32 %v259, %v395
        %v397 = vstv %s358
        %v398 = vmax.f32 %v255, %v397
        %v399 = vsub.f32 %v396, %v398
        %v400 = vmax.f32 %v399, 0.0
        %v401 = vmul.f32 %v394, %v400
        %v402 = vstv %s388
        %v403 = vadd.f32 %v272, %v402
        %v404 = vsub.f32 %v403, %v401
        %v405 = vrcp.pop %v404
        %v406 = vmul.f32 %v401, %v405
        %v407 = vstv %s385
        %v408 = vmul.f32 %v406, %v407
        %s409 = ssub.f32 %s385, 1.0
        %v410 = vstv %s409
        %v411 = vadd.f32 %v408, %v410
        %vm412 = vcmp.gt.f32.partialorder %v411, %v330
        %v413 = vsel %vm412, %v411, %v330
        %v414 = vsel %vm412, %v391, %v331
        %v415 = vsel %vm412, %v397, %v332
        %v416 = vsel %vm412, %v389, %v333
        %v417 = vsel %vm412, %v395, %v334
        %v418 = vstv %s364
        %v419 = vsel %vm412, %v418, %v336
        %v420 = vstv %s366
        %v421 = vsel %vm412, %v420, %v338
        %v422 = vstv %s368
        %v423 = vsel %vm412, %v422, %v340
        %v424 = vstv %s370
        %v425 = vsel %vm412, %v424, %v342
        %v426 = vstv %s372
        %v427 = vsel %vm412, %v426, %v344
        %v428 = vstv %s374
        %v429 = vsel %vm412, %v428, %v346
        %v430 = vstv %s376
        %v431 = vsel %vm412, %v430, %v348
        %v432 = vstv %s378
        %v433 = vsel %vm412, %v432, %v350
        %v434 = vstv %s380
        %v435 = vsel %vm412, %v434, %v352
        %v436 = vstv %s382
        %v437 = vsel %vm412, %v436, %v354
        %s438 = sadd.s32 %s252, 28
        %s439 = sld [smem:[#allocation3 + %s438]]
        %s440 = sadd.s32 %s252, 29
        %s441 = sld [smem:[#allocation3 + %s440]]
        %s442 = sadd.s32 %s252, 30
        %s443 = sld [smem:[#allocation3 + %s442]]
        %s444 = sadd.s32 %s252, 31
        %s445 = sld [smem:[#allocation3 + %s444]]
        %s446 = sadd.s32 %s252, 32
        %s447 = sld [smem:[#allocation3 + %s446]]
        %s448 = sadd.s32 %s252, 33
        %s449 = sld [smem:[#allocation3 + %s448]]
        %s450 = sadd.s32 %s252, 34
        %s451 = sld [smem:[#allocation3 + %s450]]
        %s452 = sadd.s32 %s252, 35
        %s453 = sld [smem:[#allocation3 + %s452]]
        %s454 = sadd.s32 %s252, 36
        %s455 = sld [smem:[#allocation3 + %s454]]
        %s456 = sadd.s32 %s252, 37
        %s457 = sld [smem:[#allocation3 + %s456]]
        %s458 = sadd.s32 %s252, 38
        %s459 = sld [smem:[#allocation3 + %s458]]
        %s460 = sadd.s32 %s252, 39
        %s461 = sld [smem:[#allocation3 + %s460]]
        %s462 = sadd.s32 %s252, 40
        %s463 = sld [smem:[#allocation3 + %s462]]
        %s464 = sadd.s32 %s252, 41
        %s465 = sld [smem:[#allocation3 + %s464]]
        %p466 = scmp.gt.f32.partialorder %s439, 0.0
        %s467 = scalar_select %p466, 1, 0
        %s468 = scvt.s32.f32 %s467
        %s469 = ssub.f32 %s443, %s439
        %s470 = ssub.f32 %s445, %s441
        %s471 = smul.f32 %s469, %s470
        %v472 = vstv %s443
        %v473 = vmin.f32 %v257, %v472
        %v474 = vstv %s439
        %v475 = vmax.f32 %v253, %v474
        %v476 = vsub.f32 %v473, %v475
        %v477 = vmax.f32 %v476, 0.0
        %v478 = vstv %s445
        %v479 = vmin.f32 %v259, %v478
        %v480 = vstv %s441
        %v481 = vmax.f32 %v255, %v480
        %v482 = vsub.f32 %v479, %v481
        %v483 = vmax.f32 %v482, 0.0
        %v484 = vmul.f32 %v477, %v483
        %v485 = vstv %s471
        %v486 = vadd.f32 %v272, %v485
        %v487 = vsub.f32 %v486, %v484
        %v488 = vrcp.pop %v487
        %v489 = vmul.f32 %v484, %v488
        %v490 = vstv %s468
        %v491 = vmul.f32 %v489, %v490
        %s492 = ssub.f32 %s468, 1.0
        %v493 = vstv %s492
        %v494 = vadd.f32 %v491, %v493
        %vm495 = vcmp.gt.f32.partialorder %v494, %v413
        %v496 = vsel %vm495, %v494, %v413
        %v497 = vsel %vm495, %v474, %v414
        %v498 = vsel %vm495, %v480, %v415
        %v499 = vsel %vm495, %v472, %v416
        %v500 = vsel %vm495, %v478, %v417
        %v501 = vstv %s447
        %v502 = vsel %vm495, %v501, %v419
        %v503 = vstv %s449
        %v504 = vsel %vm495, %v503, %v421
        %v505 = vstv %s451
        %v506 = vsel %vm495, %v505, %v423
        %v507 = vstv %s453
        %v508 = vsel %vm495, %v507, %v425
        %v509 = vstv %s455
        %v510 = vsel %vm495, %v509, %v427
        %v511 = vstv %s457
        %v512 = vsel %vm495, %v511, %v429
        %v513 = vstv %s459
        %v514 = vsel %vm495, %v513, %v431
        %v515 = vstv %s461
        %v516 = vsel %vm495, %v515, %v433
        %v517 = vstv %s463
        %v518 = vsel %vm495, %v517, %v435
        %v519 = vstv %s465
        %v520 = vsel %vm495, %v519, %v437
        %s521 = sadd.s32 %s252, 42
        %s522 = sld [smem:[#allocation3 + %s521]]
        %s523 = sadd.s32 %s252, 43
        %s524 = sld [smem:[#allocation3 + %s523]]
        %s525 = sadd.s32 %s252, 44
        %s526 = sld [smem:[#allocation3 + %s525]]
        %s527 = sadd.s32 %s252, 45
        %s528 = sld [smem:[#allocation3 + %s527]]
        %s529 = sadd.s32 %s252, 46
        %s530 = sld [smem:[#allocation3 + %s529]]
        %s531 = sadd.s32 %s252, 47
        %s532 = sld [smem:[#allocation3 + %s531]]
        %s533 = sadd.s32 %s252, 48
        %s534 = sld [smem:[#allocation3 + %s533]]
        %s535 = sadd.s32 %s252, 49
        %s536 = sld [smem:[#allocation3 + %s535]]
        %s537 = sadd.s32 %s252, 50
        %s538 = sld [smem:[#allocation3 + %s537]]
        %s539 = sadd.s32 %s252, 51
        %s540 = sld [smem:[#allocation3 + %s539]]
        %s541 = sadd.s32 %s252, 52
        %s542 = sld [smem:[#allocation3 + %s541]]
        %s543 = sadd.s32 %s252, 53
        %s544 = sld [smem:[#allocation3 + %s543]]
        %s545 = sadd.s32 %s252, 54
        %s546 = sld [smem:[#allocation3 + %s545]]
        %s547 = sadd.s32 %s252, 55
        %s548 = sld [smem:[#allocation3 + %s547]]
        %p549 = scmp.gt.f32.partialorder %s522, 0.0
        %s550 = scalar_select %p549, 1, 0
        %s551 = scvt.s32.f32 %s550
        %s552 = ssub.f32 %s526, %s522
        %s553 = ssub.f32 %s528, %s524
        %s554 = smul.f32 %s552, %s553
        %v555 = vstv %s526
        %v556 = vmin.f32 %v257, %v555
        %v557 = vstv %s522
        %v558 = vmax.f32 %v253, %v557
        %v559 = vsub.f32 %v556, %v558
        %v560 = vmax.f32 %v559, 0.0
        %v561 = vstv %s528
        %v562 = vmin.f32 %v259, %v561
        %v563 = vstv %s524
        %v564 = vmax.f32 %v255, %v563
        %v565 = vsub.f32 %v562, %v564
        %v566 = vmax.f32 %v565, 0.0
        %v567 = vmul.f32 %v560, %v566
        %v568 = vstv %s554
        %v569 = vadd.f32 %v272, %v568
        %v570 = vsub.f32 %v569, %v567
        %v571 = vrcp.pop %v570
        %v572 = vmul.f32 %v567, %v571
        %v573 = vstv %s551
        %v574 = vmul.f32 %v572, %v573
        %s575 = ssub.f32 %s551, 1.0
        %v576 = vstv %s575
        %v577 = vadd.f32 %v574, %v576
        %vm578 = vcmp.gt.f32.partialorder %v577, %v496
        %v579 = vsel %vm578, %v577, %v496
        %v580 = vsel %vm578, %v557, %v497
        %v581 = vsel %vm578, %v563, %v498
        %v582 = vsel %vm578, %v555, %v499
        %v583 = vsel %vm578, %v561, %v500
        %v584 = vstv %s530
        %v585 = vsel %vm578, %v584, %v502
        %v586 = vstv %s532
        %v587 = vsel %vm578, %v586, %v504
        %v588 = vstv %s534
        %v589 = vsel %vm578, %v588, %v506
        %v590 = vstv %s536
        %v591 = vsel %vm578, %v590, %v508
        %v592 = vstv %s538
        %v593 = vsel %vm578, %v592, %v510
        %v594 = vstv %s540
        %v595 = vsel %vm578, %v594, %v512
        %v596 = vstv %s542
        %v597 = vsel %vm578, %v596, %v514
        %v598 = vstv %s544
        %v599 = vsel %vm578, %v598, %v516
        %v600 = vstv %s546
        %v601 = vsel %vm578, %v600, %v518
        %v602 = vstv %s548
        %v603 = vsel %vm578, %v602, %v520
        %s604 = sadd.s32 %s252, 56
        %s605 = sld [smem:[#allocation3 + %s604]]
        %s606 = sadd.s32 %s252, 57
        %s607 = sld [smem:[#allocation3 + %s606]]
        %s608 = sadd.s32 %s252, 58
        %s609 = sld [smem:[#allocation3 + %s608]]
        %s610 = sadd.s32 %s252, 59
        %s611 = sld [smem:[#allocation3 + %s610]]
        %s612 = sadd.s32 %s252, 60
        %s613 = sld [smem:[#allocation3 + %s612]]
        %s614 = sadd.s32 %s252, 61
        %s615 = sld [smem:[#allocation3 + %s614]]
        %s616 = sadd.s32 %s252, 62
        %s617 = sld [smem:[#allocation3 + %s616]]
        %s618 = sadd.s32 %s252, 63
        %s619 = sld [smem:[#allocation3 + %s618]]
        %s620 = sadd.s32 %s252, 64
        %s621 = sld [smem:[#allocation3 + %s620]]
        %s622 = sadd.s32 %s252, 65
        %s623 = sld [smem:[#allocation3 + %s622]]
        %s624 = sadd.s32 %s252, 66
        %s625 = sld [smem:[#allocation3 + %s624]]
        %s626 = sadd.s32 %s252, 67
        %s627 = sld [smem:[#allocation3 + %s626]]
        %s628 = sadd.s32 %s252, 68
        %s629 = sld [smem:[#allocation3 + %s628]]
        %s630 = sadd.s32 %s252, 69
        %s631 = sld [smem:[#allocation3 + %s630]]
        %p632 = scmp.gt.f32.partialorder %s605, 0.0
        %s633 = scalar_select %p632, 1, 0
        %s634 = scvt.s32.f32 %s633
        %s635 = ssub.f32 %s609, %s605
        %s636 = ssub.f32 %s611, %s607
        %s637 = smul.f32 %s635, %s636
        %v638 = vstv %s609
        %v639 = vmin.f32 %v257, %v638
        %v640 = vstv %s605
        %v641 = vmax.f32 %v253, %v640
        %v642 = vsub.f32 %v639, %v641
        %v643 = vmax.f32 %v642, 0.0
        %v644 = vstv %s611
        %v645 = vmin.f32 %v259, %v644
        %v646 = vstv %s607
        %v647 = vmax.f32 %v255, %v646
        %v648 = vsub.f32 %v645, %v647
        %v649 = vmax.f32 %v648, 0.0
        %v650 = vmul.f32 %v643, %v649
        %v651 = vstv %s637
        %v652 = vadd.f32 %v272, %v651
        %v653 = vsub.f32 %v652, %v650
        %v654 = vrcp.pop %v653
        %v655 = vmul.f32 %v650, %v654
        %v656 = vstv %s634
        %v657 = vmul.f32 %v655, %v656
        %s658 = ssub.f32 %s634, 1.0
        %v659 = vstv %s658
        %v660 = vadd.f32 %v657, %v659
        %vm661 = vcmp.gt.f32.partialorder %v660, %v579
        %v662 = vsel %vm661, %v660, %v579
        %v663 = vsel %vm661, %v640, %v580
        %v664 = vsel %vm661, %v646, %v581
        %v665 = vsel %vm661, %v638, %v582
        %v666 = vsel %vm661, %v644, %v583
        %v667 = vstv %s613
        %v668 = vsel %vm661, %v667, %v585
        %v669 = vstv %s615
        %v670 = vsel %vm661, %v669, %v587
        %v671 = vstv %s617
        %v672 = vsel %vm661, %v671, %v589
        %v673 = vstv %s619
        %v674 = vsel %vm661, %v673, %v591
        %v675 = vstv %s621
        %v676 = vsel %vm661, %v675, %v593
        %v677 = vstv %s623
        %v678 = vsel %vm661, %v677, %v595
        %v679 = vstv %s625
        %v680 = vsel %vm661, %v679, %v597
        %v681 = vstv %s627
        %v682 = vsel %vm661, %v681, %v599
        %v683 = vstv %s629
        %v684 = vsel %vm661, %v683, %v601
        %v685 = vstv %s631
        %v686 = vsel %vm661, %v685, %v603
        %s687 = sadd.s32 %s252, 70
        %s688 = sld [smem:[#allocation3 + %s687]]
        %s689 = sadd.s32 %s252, 71
        %s690 = sld [smem:[#allocation3 + %s689]]
        %s691 = sadd.s32 %s252, 72
        %s692 = sld [smem:[#allocation3 + %s691]]
        %s693 = sadd.s32 %s252, 73
        %s694 = sld [smem:[#allocation3 + %s693]]
        %s695 = sadd.s32 %s252, 74
        %s696 = sld [smem:[#allocation3 + %s695]]
        %s697 = sadd.s32 %s252, 75
        %s698 = sld [smem:[#allocation3 + %s697]]
        %s699 = sadd.s32 %s252, 76
        %s700 = sld [smem:[#allocation3 + %s699]]
        %s701 = sadd.s32 %s252, 77
        %s702 = sld [smem:[#allocation3 + %s701]]
        %s703 = sadd.s32 %s252, 78
        %s704 = sld [smem:[#allocation3 + %s703]]
        %s705 = sadd.s32 %s252, 79
        %s706 = sld [smem:[#allocation3 + %s705]]
        %s707 = sadd.s32 %s252, 80
        %s708 = sld [smem:[#allocation3 + %s707]]
        %s709 = sadd.s32 %s252, 81
        %s710 = sld [smem:[#allocation3 + %s709]]
        %s711 = sadd.s32 %s252, 82
        %s712 = sld [smem:[#allocation3 + %s711]]
        %s713 = sadd.s32 %s252, 83
        %s714 = sld [smem:[#allocation3 + %s713]]
        %p715 = scmp.gt.f32.partialorder %s688, 0.0
        %s716 = scalar_select %p715, 1, 0
        %s717 = scvt.s32.f32 %s716
        %s718 = ssub.f32 %s692, %s688
        %s719 = ssub.f32 %s694, %s690
        %s720 = smul.f32 %s718, %s719
        %v721 = vstv %s692
        %v722 = vmin.f32 %v257, %v721
        %v723 = vstv %s688
        %v724 = vmax.f32 %v253, %v723
        %v725 = vsub.f32 %v722, %v724
        %v726 = vmax.f32 %v725, 0.0
        %v727 = vstv %s694
        %v728 = vmin.f32 %v259, %v727
        %v729 = vstv %s690
        %v730 = vmax.f32 %v255, %v729
        %v731 = vsub.f32 %v728, %v730
        %v732 = vmax.f32 %v731, 0.0
        %v733 = vmul.f32 %v726, %v732
        %v734 = vstv %s720
        %v735 = vadd.f32 %v272, %v734
        %v736 = vsub.f32 %v735, %v733
        %v737 = vrcp.pop %v736
        %v738 = vmul.f32 %v733, %v737
        %v739 = vstv %s717
        %v740 = vmul.f32 %v738, %v739
        %s741 = ssub.f32 %s717, 1.0
        %v742 = vstv %s741
        %v743 = vadd.f32 %v740, %v742
        %vm744 = vcmp.gt.f32.partialorder %v743, %v662
        %v745 = vsel %vm744, %v743, %v662
        %v746 = vsel %vm744, %v723, %v663
        %v747 = vsel %vm744, %v729, %v664
        %v748 = vsel %vm744, %v721, %v665
        %v749 = vsel %vm744, %v727, %v666
        %v750 = vstv %s696
        %v751 = vsel %vm744, %v750, %v668
        %v752 = vstv %s698
        %v753 = vsel %vm744, %v752, %v670
        %v754 = vstv %s700
        %v755 = vsel %vm744, %v754, %v672
        %v756 = vstv %s702
        %v757 = vsel %vm744, %v756, %v674
        %v758 = vstv %s704
        %v759 = vsel %vm744, %v758, %v676
        %v760 = vstv %s706
        %v761 = vsel %vm744, %v760, %v678
        %v762 = vstv %s708
        %v763 = vsel %vm744, %v762, %v680
        %v764 = vstv %s710
        %v765 = vsel %vm744, %v764, %v682
        %v766 = vstv %s712
        %v767 = vsel %vm744, %v766, %v684
        %v768 = vstv %s714
        %v769 = vsel %vm744, %v768, %v686
        %s770 = sadd.s32 %s252, 84
        %s771 = sld [smem:[#allocation3 + %s770]]
        %s772 = sadd.s32 %s252, 85
        %s773 = sld [smem:[#allocation3 + %s772]]
        %s774 = sadd.s32 %s252, 86
        %s775 = sld [smem:[#allocation3 + %s774]]
        %s776 = sadd.s32 %s252, 87
        %s777 = sld [smem:[#allocation3 + %s776]]
        %s778 = sadd.s32 %s252, 88
        %s779 = sld [smem:[#allocation3 + %s778]]
        %s780 = sadd.s32 %s252, 89
        %s781 = sld [smem:[#allocation3 + %s780]]
        %s782 = sadd.s32 %s252, 90
        %s783 = sld [smem:[#allocation3 + %s782]]
        %s784 = sadd.s32 %s252, 91
        %s785 = sld [smem:[#allocation3 + %s784]]
        %s786 = sadd.s32 %s252, 92
        %s787 = sld [smem:[#allocation3 + %s786]]
        %s788 = sadd.s32 %s252, 93
        %s789 = sld [smem:[#allocation3 + %s788]]
        %s790 = sadd.s32 %s252, 94
        %s791 = sld [smem:[#allocation3 + %s790]]
        %s792 = sadd.s32 %s252, 95
        %s793 = sld [smem:[#allocation3 + %s792]]
        %s794 = sadd.s32 %s252, 96
        %s795 = sld [smem:[#allocation3 + %s794]]
        %s796 = sadd.s32 %s252, 97
        %s797 = sld [smem:[#allocation3 + %s796]]
        %p798 = scmp.gt.f32.partialorder %s771, 0.0
        %s799 = scalar_select %p798, 1, 0
        %s800 = scvt.s32.f32 %s799
        %s801 = ssub.f32 %s775, %s771
        %s802 = ssub.f32 %s777, %s773
        %s803 = smul.f32 %s801, %s802
        %v804 = vstv %s775
        %v805 = vmin.f32 %v257, %v804
        %v806 = vstv %s771
        %v807 = vmax.f32 %v253, %v806
        %v808 = vsub.f32 %v805, %v807
        %v809 = vmax.f32 %v808, 0.0
        %v810 = vstv %s777
        %v811 = vmin.f32 %v259, %v810
        %v812 = vstv %s773
        %v813 = vmax.f32 %v255, %v812
        %v814 = vsub.f32 %v811, %v813
        %v815 = vmax.f32 %v814, 0.0
        %v816 = vmul.f32 %v809, %v815
        %v817 = vstv %s803
        %v818 = vadd.f32 %v272, %v817
        %v819 = vsub.f32 %v818, %v816
        %v820 = vrcp.pop %v819
        %v821 = vmul.f32 %v816, %v820
        %v822 = vstv %s800
        %v823 = vmul.f32 %v821, %v822
        %s824 = ssub.f32 %s800, 1.0
        %v825 = vstv %s824
        %v826 = vadd.f32 %v823, %v825
        %vm827 = vcmp.gt.f32.partialorder %v826, %v745
        %v828 = vsel %vm827, %v826, %v745
        %v829 = vsel %vm827, %v806, %v746
        %v830 = vsel %vm827, %v812, %v747
        %v831 = vsel %vm827, %v804, %v748
        %v832 = vsel %vm827, %v810, %v749
        %v833 = vstv %s779
        %v834 = vsel %vm827, %v833, %v751
        %v835 = vstv %s781
        %v836 = vsel %vm827, %v835, %v753
        %v837 = vstv %s783
        %v838 = vsel %vm827, %v837, %v755
        %v839 = vstv %s785
        %v840 = vsel %vm827, %v839, %v757
        %v841 = vstv %s787
        %v842 = vsel %vm827, %v841, %v759
        %v843 = vstv %s789
        %v844 = vsel %vm827, %v843, %v761
        %v845 = vstv %s791
        %v846 = vsel %vm827, %v845, %v763
        %v847 = vstv %s793
        %v848 = vsel %vm827, %v847, %v765
        %v849 = vstv %s795
        %v850 = vsel %vm827, %v849, %v767
        %v851 = vstv %s797
        %v852 = vsel %vm827, %v851, %v769
        %s853 = sadd.s32 %s252, 98
        %s854 = sld [smem:[#allocation3 + %s853]]
        %s855 = sadd.s32 %s252, 99
        %s856 = sld [smem:[#allocation3 + %s855]]
        %s857 = sadd.s32 %s252, 100
        %s858 = sld [smem:[#allocation3 + %s857]]
        %s859 = sadd.s32 %s252, 101
        %s860 = sld [smem:[#allocation3 + %s859]]
        %s861 = sadd.s32 %s252, 102
        %s862 = sld [smem:[#allocation3 + %s861]]
        %s863 = sadd.s32 %s252, 103
        %s864 = sld [smem:[#allocation3 + %s863]]
        %s865 = sadd.s32 %s252, 104
        %s866 = sld [smem:[#allocation3 + %s865]]
        %s867 = sadd.s32 %s252, 105
        %s868 = sld [smem:[#allocation3 + %s867]]
        %s869 = sadd.s32 %s252, 106
        %s870 = sld [smem:[#allocation3 + %s869]]
        %s871 = sadd.s32 %s252, 107
        %s872 = sld [smem:[#allocation3 + %s871]]
        %s873 = sadd.s32 %s252, 108
        %s874 = sld [smem:[#allocation3 + %s873]]
        %s875 = sadd.s32 %s252, 109
        %s876 = sld [smem:[#allocation3 + %s875]]
        %s877 = sadd.s32 %s252, 110
        %s878 = sld [smem:[#allocation3 + %s877]]
        %s879 = sadd.s32 %s252, 111
        %s880 = sld [smem:[#allocation3 + %s879]]
        %p881 = scmp.gt.f32.partialorder %s854, 0.0
        %s882 = scalar_select %p881, 1, 0
        %s883 = scvt.s32.f32 %s882
        %s884 = ssub.f32 %s858, %s854
        %s885 = ssub.f32 %s860, %s856
        %s886 = smul.f32 %s884, %s885
        %v887 = vstv %s858
        %v888 = vmin.f32 %v257, %v887
        %v889 = vstv %s854
        %v890 = vmax.f32 %v253, %v889
        %v891 = vsub.f32 %v888, %v890
        %v892 = vmax.f32 %v891, 0.0
        %v893 = vstv %s860
        %v894 = vmin.f32 %v259, %v893
        %v895 = vstv %s856
        %v896 = vmax.f32 %v255, %v895
        %v897 = vsub.f32 %v894, %v896
        %v898 = vmax.f32 %v897, 0.0
        %v899 = vmul.f32 %v892, %v898
        %v900 = vstv %s886
        %v901 = vadd.f32 %v272, %v900
        %v902 = vsub.f32 %v901, %v899
        %v903 = vrcp.pop %v902
        %v904 = vmul.f32 %v899, %v903
        %v905 = vstv %s883
        %v906 = vmul.f32 %v904, %v905
        %s907 = ssub.f32 %s883, 1.0
        %v908 = vstv %s907
        %v909 = vadd.f32 %v906, %v908
        %vm910 = vcmp.gt.f32.partialorder %v909, %v828
        %v911 = vsel %vm910, %v909, %v828
        %v912 = vsel %vm910, %v889, %v829
        %v913 = vsel %vm910, %v895, %v830
        %v914 = vsel %vm910, %v887, %v831
        %v915 = vsel %vm910, %v893, %v832
        %v916 = vstv %s862
        %v917 = vsel %vm910, %v916, %v834
        %v918 = vstv %s864
        %v919 = vsel %vm910, %v918, %v836
        %v920 = vstv %s866
        %v921 = vsel %vm910, %v920, %v838
        %v922 = vstv %s868
        %v923 = vsel %vm910, %v922, %v840
        %v924 = vstv %s870
        %v925 = vsel %vm910, %v924, %v842
        %v926 = vstv %s872
        %v927 = vsel %vm910, %v926, %v844
        %v928 = vstv %s874
        %v929 = vsel %vm910, %v928, %v846
        %v930 = vstv %s876
        %v931 = vsel %vm910, %v930, %v848
        %v932 = vstv %s878
        %v933 = vsel %vm910, %v932, %v850
        %v934 = vstv %s880
        %v935 = vsel %vm910, %v934, %v852
        %vm936 = vcmp.ge.f32.partialorder %v911, 0.5
        %vm937 = vcmp.lt.f32.partialorder %v911, 0.3
        %v938 = vld [vmem:[%s215] sm:$0xff]
        %s939 = scalar_lea.vmem %s215, 8 [#allocation7]
        %v940 = vld [vmem:[%s939] sm:$0xff]
        %v941 = vsub.f32 %v940, %v938
        %v942 = vmax.f32 %v941, 0.0
        %v943 = vand.u32 2147483647, %v941
        %v944 = vsub.f32 0.0, %v943
        %v945 = vmul.f32 %v944, 1.442695
        %v946 = vpow.pop %v945
        %v947 = vadd.f32 %v946, 1.0
        %v948 = vlog2.pop %v947
        %v949 = vmul.f32 %v948, 0.6931472
        %v950 = vadd.f32 %v942, %v949
        %v951 = vsub.f32 %v950, %v941
        %v952 = vsel %vm937, %v951, -1e+30
        %vm953 = vcmask 261120
        %954 = vst.msk [vmem:[%s235] sm:$0xff] %vm953, %v952
        %v955 = vsub.f32 %v914, %v912
        %v956 = vsub.f32 %v915, %v913
        %v957 = vmul.f32 %v955, 0.5
        %v958 = vadd.f32 %v912, %v957
        %v959 = vmul.f32 %v956, 0.5
        %v960 = vadd.f32 %v913, %v959
        %v961 = vsub.f32 %v958, %v263
        %v962 = vmul.f32 %v961, %v268
        %v963 = vmul.f32 %v962, 10.0
        %v964 = vsub.f32 %v960, %v265
        %v965 = vmul.f32 %v964, %v271
        %v966 = vmul.f32 %v965, 10.0
        %v967 = vmul.f32 %v955, %v268
        %v968 = vsel %vm936, %v967, 1.0
        %v969 = vlog2.pop %v968
        %v970 = vmul.f32 %v969, 0.6931472
        %v971 = vmul.f32 %v970, 5.0
        %v972 = vmul.f32 %v956, %v271
        %v973 = vsel %vm936, %v972, 1.0
        %v974 = vlog2.pop %v973
        %v975 = vmul.f32 %v974, 0.6931472
        %v976 = vmul.f32 %v975, 5.0
        %s977 = scalar_lea.vmem %s215, 16 [#allocation7]
        %v978 = vld [vmem:[%s977] sm:$0xff]
        %v979 = vsub.f32 %v963, %v978
        %v980 = vand.u32 2147483647, %v979
        %vm981 = vcmp.lt.f32.partialorder %v980, 1.0
        %v982 = vmul.f32 %v979, 0.5
        %v983 = vmul.f32 %v982, %v979
        %v984 = vsub.f32 %v980, 0.5
        %v985 = vsel %vm981, %v983, %v984
        %s986 = scalar_lea.vmem %s215, 24 [#allocation7]
        %v987 = vld [vmem:[%s986] sm:$0xff]
        %v988 = vsub.f32 %v966, %v987
        %v989 = vand.u32 2147483647, %v988
        %vm990 = vcmp.lt.f32.partialorder %v989, 1.0
        %v991 = vmul.f32 %v988, 0.5
        %v992 = vmul.f32 %v991, %v988
        %v993 = vsub.f32 %v989, 0.5
        %v994 = vsel %vm990, %v992, %v993
        %v995 = vadd.f32 %v985, %v994
        %s996 = scalar_lea.vmem %s215, 32 [#allocation7]
        %v997 = vld [vmem:[%s996] sm:$0xff]
        %v998 = vsub.f32 %v971, %v997
        %v999 = vand.u32 2147483647, %v998
        %vm1000 = vcmp.lt.f32.partialorder %v999, 1.0
        %v1001 = vmul.f32 %v998, 0.5
        %v1002 = vmul.f32 %v1001, %v998
        %v1003 = vsub.f32 %v999, 0.5
        %v1004 = vsel %vm1000, %v1002, %v1003
        %v1005 = vadd.f32 %v995, %v1004
        %s1006 = scalar_lea.vmem %s215, 40 [#allocation7]
        %v1007 = vld [vmem:[%s1006] sm:$0xff]
        %v1008 = vsub.f32 %v976, %v1007
        %v1009 = vand.u32 2147483647, %v1008
        %vm1010 = vcmp.lt.f32.partialorder %v1009, 1.0
        %v1011 = vmul.f32 %v1008, 0.5
        %v1012 = vmul.f32 %v1011, %v1008
        %v1013 = vsub.f32 %v1009, 0.5
        %v1014 = vsel %vm1010, %v1012, %v1013
        %v1015 = vadd.f32 %v1005, %v1014
        %v1016 = vadd.f32 %v917, %v919
        %v1017 = vadd.f32 %v1016, %v921
        %v1018 = vadd.f32 %v1017, %v923
        %v1019 = vadd.f32 %v1018, %v925
        %v1020 = vadd.f32 %v1019, %v927
        %v1021 = vadd.f32 %v1020, %v929
        %v1022 = vadd.f32 %v1021, %v931
        %v1023 = vadd.f32 %v1022, %v933
        %v1024 = vadd.f32 %v1023, %v935
        %vm1025 = vcmp.gt.f32.partialorder %v1024, 0.0
        %vm1026 = vmand %vm1025, %vm936
        %v1027 = vsub.f32 %v917, %v263
        %v1028 = vmul.f32 %v1027, %v268
        %v1029 = vmul.f32 %v1028, 10.0
        %v1030 = vsub.f32 %v919, %v265
        %v1031 = vmul.f32 %v1030, %v271
        %v1032 = vmul.f32 %v1031, 10.0
        %s1033 = scalar_lea.vmem %s215, 48 [#allocation7]
        %v1034 = vld [vmem:[%s1033] sm:$0xff]
        %v1035 = vsub.f32 %v1029, %v1034
        %v1036 = vand.u32 2147483647, %v1035
        %vm1037 = vcmp.lt.f32.partialorder %v1036, 1.0
        %v1038 = vmul.f32 %v1035, 0.5
        %v1039 = vmul.f32 %v1038, %v1035
        %v1040 = vsub.f32 %v1036, 0.5
        %v1041 = vsel %vm1037, %v1039, %v1040
        %v1042 = vadd.f32 %v1041, 0.0
        %s1043 = scalar_lea.vmem %s215, 56 [#allocation7]
        %v1044 = vld [vmem:[%s1043] sm:$0xff]
        %v1045 = vsub.f32 %v1032, %v1044
        %v1046 = vand.u32 2147483647, %v1045
        %vm1047 = vcmp.lt.f32.partialorder %v1046, 1.0
        %v1048 = vmul.f32 %v1045, 0.5
        %v1049 = vmul.f32 %v1048, %v1045
        %v1050 = vsub.f32 %v1046, 0.5
        %v1051 = vsel %vm1047, %v1049, %v1050
        %v1052 = vadd.f32 %v1042, %v1051
        %v1053 = vsub.f32 %v921, %v263
        %v1054 = vmul.f32 %v1053, %v268
        %v1055 = vmul.f32 %v1054, 10.0
        %v1056 = vsub.f32 %v923, %v265
        %v1057 = vmul.f32 %v1056, %v271
        %v1058 = vmul.f32 %v1057, 10.0
        %s1059 = scalar_lea.vmem %s215, 64 [#allocation7]
        %v1060 = vld [vmem:[%s1059] sm:$0xff]
        %v1061 = vsub.f32 %v1055, %v1060
        %v1062 = vand.u32 2147483647, %v1061
        %vm1063 = vcmp.lt.f32.partialorder %v1062, 1.0
        %v1064 = vmul.f32 %v1061, 0.5
        %v1065 = vmul.f32 %v1064, %v1061
        %v1066 = vsub.f32 %v1062, 0.5
        %v1067 = vsel %vm1063, %v1065, %v1066
        %v1068 = vadd.f32 %v1052, %v1067
        %s1069 = scalar_lea.vmem %s215, 72 [#allocation7]
        %v1070 = vld [vmem:[%s1069] sm:$0xff]
        %v1071 = vsub.f32 %v1058, %v1070
        %v1072 = vand.u32 2147483647, %v1071
        %vm1073 = vcmp.lt.f32.partialorder %v1072, 1.0
        %v1074 = vmul.f32 %v1071, 0.5
        %v1075 = vmul.f32 %v1074, %v1071
        %v1076 = vsub.f32 %v1072, 0.5
        %v1077 = vsel %vm1073, %v1075, %v1076
        %v1078 = vadd.f32 %v1068, %v1077
        %v1079 = vsub.f32 %v925, %v263
        %v1080 = vmul.f32 %v1079, %v268
        %v1081 = vmul.f32 %v1080, 10.0
        %v1082 = vsub.f32 %v927, %v265
        %v1083 = vmul.f32 %v1082, %v271
        %v1084 = vmul.f32 %v1083, 10.0
        %s1085 = scalar_lea.vmem %s215, 80 [#allocation7]
        %v1086 = vld [vmem:[%s1085] sm:$0xff]
        %v1087 = vsub.f32 %v1081, %v1086
        %v1088 = vand.u32 2147483647, %v1087
        %vm1089 = vcmp.lt.f32.partialorder %v1088, 1.0
        %v1090 = vmul.f32 %v1087, 0.5
        %v1091 = vmul.f32 %v1090, %v1087
        %v1092 = vsub.f32 %v1088, 0.5
        %v1093 = vsel %vm1089, %v1091, %v1092
        %v1094 = vadd.f32 %v1078, %v1093
        %s1095 = scalar_lea.vmem %s215, 88 [#allocation7]
        %v1096 = vld [vmem:[%s1095] sm:$0xff]
        %v1097 = vsub.f32 %v1084, %v1096
        %v1098 = vand.u32 2147483647, %v1097
        %vm1099 = vcmp.lt.f32.partialorder %v1098, 1.0
        %v1100 = vmul.f32 %v1097, 0.5
        %v1101 = vmul.f32 %v1100, %v1097
        %v1102 = vsub.f32 %v1098, 0.5
        %v1103 = vsel %vm1099, %v1101, %v1102
        %v1104 = vadd.f32 %v1094, %v1103
        %v1105 = vsub.f32 %v929, %v263
        %v1106 = vmul.f32 %v1105, %v268
        %v1107 = vmul.f32 %v1106, 10.0
        %v1108 = vsub.f32 %v931, %v265
        %v1109 = vmul.f32 %v1108, %v271
        %v1110 = vmul.f32 %v1109, 10.0
        %s1111 = scalar_lea.vmem %s215, 96 [#allocation7]
        %v1112 = vld [vmem:[%s1111] sm:$0xff]
        %v1113 = vsub.f32 %v1107, %v1112
        %v1114 = vand.u32 2147483647, %v1113
        %vm1115 = vcmp.lt.f32.partialorder %v1114, 1.0
        %v1116 = vmul.f32 %v1113, 0.5
        %v1117 = vmul.f32 %v1116, %v1113
        %v1118 = vsub.f32 %v1114, 0.5
        %v1119 = vsel %vm1115, %v1117, %v1118
        %v1120 = vadd.f32 %v1104, %v1119
        %s1121 = scalar_lea.vmem %s215, 104 [#allocation7]
        %v1122 = vld [vmem:[%s1121] sm:$0xff]
        %v1123 = vsub.f32 %v1110, %v1122
        %v1124 = vand.u32 2147483647, %v1123
        %vm1125 = vcmp.lt.f32.partialorder %v1124, 1.0
        %v1126 = vmul.f32 %v1123, 0.5
        %v1127 = vmul.f32 %v1126, %v1123
        %v1128 = vsub.f32 %v1124, 0.5
        %v1129 = vsel %vm1125, %v1127, %v1128
        %v1130 = vadd.f32 %v1120, %v1129
        %v1131 = vsub.f32 %v933, %v263
        %v1132 = vmul.f32 %v1131, %v268
        %v1133 = vmul.f32 %v1132, 10.0
        %v1134 = vsub.f32 %v935, %v265
        %v1135 = vmul.f32 %v1134, %v271
        %v1136 = vmul.f32 %v1135, 10.0
        %s1137 = scalar_lea.vmem %s215, 112 [#allocation7]
        %v1138 = vld [vmem:[%s1137] sm:$0xff]
        %v1139 = vsub.f32 %v1133, %v1138
        %v1140 = vand.u32 2147483647, %v1139
        %vm1141 = vcmp.lt.f32.partialorder %v1140, 1.0
        %v1142 = vmul.f32 %v1139, 0.5
        %v1143 = vmul.f32 %v1142, %v1139
        %v1144 = vsub.f32 %v1140, 0.5
        %v1145 = vsel %vm1141, %v1143, %v1144
        %v1146 = vadd.f32 %v1130, %v1145
        %s1147 = scalar_lea.vmem %s215, 120 [#allocation7]
        %v1148 = vld [vmem:[%s1147] sm:$0xff]
        %v1149 = vsub.f32 %v1136, %v1148
        %v1150 = vand.u32 2147483647, %v1149
        %vm1151 = vcmp.lt.f32.partialorder %v1150, 1.0
        %v1152 = vmul.f32 %v1149, 0.5
        %v1153 = vmul.f32 %v1152, %v1149
        %v1154 = vsub.f32 %v1150, 0.5
        %v1155 = vsel %vm1151, %v1153, %v1154
        %v1156 = vadd.f32 %v1146, %v1155
        %v1157 = vsel %vm936, 1, 0
        %v1158 = vcvt.s32.f32 %v1157
        %v1159 = vsel %vm953, %v1158, 0.0
        %v1160 = vrot.slane %v1159, 4
        %v1161 = vadd.f32 %v1159, %v1160
        %v1162 = vrot.slane %v1161, 2
        %v1163 = vadd.f32 %v1161, %v1162
        %v1164 = vrot.slane %v1163, 1
        %v1165 = vadd.f32 %v1163, %v1164
        %v1166 = vsel %vm937, 1, 0
        %v1167 = vcvt.s32.f32 %v1166
        %v1168 = vsel %vm953, %v1167, 0.0
        %v1169 = vrot.slane %v1168, 4
        %v1170 = vadd.f32 %v1168, %v1169
        %v1171 = vrot.slane %v1170, 2
        %v1172 = vadd.f32 %v1170, %v1171
        %v1173 = vrot.slane %v1172, 1
        %v1174 = vadd.f32 %v1172, %v1173
        %v1175 = vsel %vm936, %v950, 0.0
        %v1176 = vsel %vm953, %v1175, 0.0
        %v1177 = vrot.slane %v1176, 4
        %v1178 = vadd.f32 %v1176, %v1177
        %v1179 = vrot.slane %v1178, 2
        %v1180 = vadd.f32 %v1178, %v1179
        %v1181 = vrot.slane %v1180, 1
        %v1182 = vadd.f32 %v1180, %v1181
        %v1183 = vsel %vm936, %v1015, 0.0
        %v1184 = vsel %vm953, %v1183, 0.0
        %v1185 = vrot.slane %v1184, 4
        %v1186 = vadd.f32 %v1184, %v1185
        %v1187 = vrot.slane %v1186, 2
        %v1188 = vadd.f32 %v1186, %v1187
        %v1189 = vrot.slane %v1188, 1
        %v1190 = vadd.f32 %v1188, %v1189
        %v1191 = vsel %vm1026, 1, 0
        %v1192 = vcvt.s32.f32 %v1191
        %v1193 = vsel %vm953, %v1192, 0.0
        %v1194 = vrot.slane %v1193, 4
        %v1195 = vadd.f32 %v1193, %v1194
        %v1196 = vrot.slane %v1195, 2
        %v1197 = vadd.f32 %v1195, %v1196
        %v1198 = vrot.slane %v1197, 1
        %v1199 = vadd.f32 %v1197, %v1198
        %v1200 = vsel %vm1026, %v1156, 0.0
        %v1201 = vsel %vm953, %v1200, 0.0
        %v1202 = vrot.slane %v1201, 4
        %v1203 = vadd.f32 %v1201, %v1202
        %v1204 = vrot.slane %v1203, 2
        %v1205 = vadd.f32 %v1203, %v1204
        %v1206 = vrot.slane %v1205, 1
        %v1207 = vadd.f32 %v1205, %v1206
        %vm1208 = vcmask 1040384
        %v1209 = vsel %vm1208, %v1165, %v1174
        %vm1210 = vcmask 1041408
        %v1211 = vsel %vm1210, %v1209, %v1182
        %vm1212 = vcmask 1042432
        %v1213 = vsel %vm1212, %v1211, %v1190
        %vm1214 = vcmask 1043456
        %v1215 = vsel %vm1214, %v1213, %v1199
        %vm1216 = vcmask 1044480
        %v1217 = vsel %vm1216, %v1215, %v1207
        %vm1218 = vcmask 1045504
        %v1219 = vsel %vm1218, %v1217, 0.0
        %vm1220 = vcmask 1046528
        %v1221 = vsel %vm1220, %v1219, 0.0
        %v1222 = vsel %vm953, %v1221, 0.0
        %1223 = vadd.xlane.f32.xlu0 %v1222
        %v1224 = vpop.xlane.xlu0 %1223
        %vm1225 = vcmask 7168
        %1226 = vst.msk [vmem:[%s251] sm:$0xff] %vm1225, %v1224
        %s1227 = sand.u32 %s103, 1
        %s1228 = scalar_lea.sflag [#allocation6], %s1227
        %s1229 = sand.u32 %s103, 1
        %s1230 = smul.addr %s1229, 8
        %s1231 = scalar_lea.vmem [#allocation9], %s1230
        %p1232 = scmp.lt.s32.totalorder %s31, 1
        %s1233 = scalar_select %p1232, %s31, 1
        %p1234 = scmp.lt.s32.totalorder %s32, 0
        %s1235 = scalar_select %p1234, %s32, 0
        %s1236 = sadd.s32 %s1235, %s1233
        %s1237 = smul.addr %s1236, 8
        %s1238 = scalar_lea.vmem %s4, %s1237
        // Predicated region
        $region37: #{tpu_custom_call.1} parent=27 // pred_check
          %p1239 = pneg %p113
        $region38: #{tpu_custom_call.1} parent=27 // pred_check_branch
          %1241 = sbr.rel (%p1239) target = $region40
        $region39: #{tpu_custom_call.1} parent=27 // pred_region
          %s1243 = ssub.s32 128, 128
          %1244 = vsyncadd %s1228, %s1243
          %s1245 = sadd.s32 %s32, %s31
          %s1246 = smul.addr %s1245, 128
          %s1247 = scalar_lea.hbm %s3, %s1246
          %s1249 = sshll.u32 %s1231, 4
          %s1250 = int_to_ptr.vmem [resolvable:$true] %s1249
          %1252 = dma.vmem_to_hbm [thread:$0]  %s1250, 128, %s1247, %s1228
        $region40: #{tpu_custom_call.1} parent=27 // pred_fallthru
          _
        // Predicated region
        $region41: #{tpu_custom_call.1} parent=27 // pred_check
          %p1253 = pneg %p141
        $region42: #{tpu_custom_call.1} parent=27 // pred_check_branch
          %1255 = sbr.rel (%p1253) target = $region44
        $region43: #{tpu_custom_call.1} parent=27 // pred_region
          _
        $region44: #{tpu_custom_call.1} parent=27 // pred_fallthru
          _
      $region28: #{tpu_custom_call.1} parent=5 // pred_fallthru
        _
      %p1256 = scmp.le.s32.totalorder 2, %s22
      // Predicated region
      $region45: #{tpu_custom_call.1} parent=5 // pred_check
        %p1257 = pneg %p1256
      $region46: #{tpu_custom_call.1} parent=5 // pred_check_branch
        %1259 = sbr.rel (%p1257) target = $region48
      $region47: #{tpu_custom_call.1} parent=5 // pred_region
        %s1260 = ssub.s32 %s22, 2
        // Predicated region
        $region49: #{tpu_custom_call.1} parent=47 // pred_check
          %p1261 = pneg %p119
        $region50: #{tpu_custom_call.1} parent=47 // pred_check_branch
          %1263 = sbr.rel (%p1261) target = $region52
        $region51: #{tpu_custom_call.1} parent=47 // pred_region
          %s1264 = sand.u32 %s104, 1
          %s1265 = scalar_lea.sflag [#allocation6], %s1264
          %s1266 = sand.u32 %s104, 1
          %s1267 = smul.addr %s1266, 8
          %s1268 = scalar_lea.vmem [#allocation9], %s1267
          %1269 = dma.done %s1265, 128
        $region52: #{tpu_custom_call.1} parent=47 // pred_fallthru
          _
        // Predicated region
        $region53: #{tpu_custom_call.1} parent=47 // pred_check
          %p1270 = pneg %p147
        $region54: #{tpu_custom_call.1} parent=47 // pred_check_branch
          %1272 = sbr.rel (%p1270) target = $region56
        $region55: #{tpu_custom_call.1} parent=47 // pred_region
          %p1273 = scmp.lt.s32.totalorder %s33, 1
          %s1274 = scalar_select %p1273, %s33, 1
          %p1275 = scmp.lt.s32.totalorder %s34, 0
          %s1276 = scalar_select %p1275, %s34, 0
          %s1277 = sadd.s32 %s1276, %s1274
          %s1278 = smul.addr %s1277, 8
          %s1279 = scalar_lea.vmem %s4, %s1278
        $region56: #{tpu_custom_call.1} parent=47 // pred_fallthru
          _
      $region48: #{tpu_custom_call.1} parent=5 // pred_fallthru
        _
    $region6: #{tpu_custom_call.1} parent=1 // loop_footer
      %s26 = sadd.s32 1, %s22
    $region7: #{tpu_custom_call.1} parent=1 // loop_footer_branch
      %21 = sbr.rel target = $region3
    $region8: #{tpu_custom_call.1} parent=1 // loop_exit
      _
    %1280 = vsyncpa [#allocation5], 1
    %s1281 = scalar_lea.sflag [#allocation5], 1
    %1282 = vsyncpa %s1281, 1
    %1283 = vsyncpa [#allocation8], 1
    %s1284 = scalar_lea.sflag [#allocation8], 1
    %1285 = vsyncpa %s1284, 1
    %1286 = vsyncpa [#allocation6], 1
    %s1287 = scalar_lea.sflag [#allocation6], 1
    %1288 = vsyncpa %s1287, 1

</llo_original>
